<compile_context>
chip_gen: v6e
topology: v6e:2x2x1
jax: 0.10.0
libtpu: 0.0.40
codegen_flags: <defaults>
</compile_context>

<pallas_src>
import math

import jax
import jax.numpy as jnp
from jax import lax
from jax.experimental import pallas as pl
from jax.experimental.pallas import tpu as pltpu


def _round_up(n, m):
    return ((n + m - 1) // m) * m


# ---------------------------------------------------------------------------
# Pallas kernels
# ---------------------------------------------------------------------------

def _make_mlp_max_kernel(tm, K, use_fma_first, has_mask):
    """Fused 3-layer MLP (Linear+ReLU, BN folded) + masked max over neighbors."""

    def kernel(*refs):
        if has_mask:
            feats_ref, mask_ref, w1, b1, w2, b2, w3, b3, s3, c3, out_ref = refs
        else:
            feats_ref, w1, b1, w2, b2, w3, b3, s3, c3, out_ref = refs

        x = feats_ref[...]                              # (tm*K, Cin_p)

        if use_fma_first:
            # Cin == 3 (relative positions): a 3-deep MXU contraction wastes
            # >97% of the systolic array -> do it as three VPU broadcast FMAs.
            W1 = w1[...].astype(jnp.float32)            # (3, C1) f32
            h = (x[:, 0:1] * W1[0:1, :]
                 + x[:, 1:2] * W1[1:2, :]
                 + x[:, 2:3] * W1[2:3, :]) + b1[...]
        else:
            h = jnp.dot(x.astype(jnp.bfloat16), w1[...],
                        preferred_element_type=jnp.float32) + b1[...]
        h = jnp.maximum(h, 0.0)

        # BN1 / BN2 are folded into W2/b2 and W3/b3 at parameter-prep time.
        h = jnp.maximum(
            jnp.dot(h.astype(jnp.bfloat16), w2[...],
                    preferred_element_type=jnp.float32) + b2[...], 0.0)
        h = jnp.maximum(
            jnp.dot(h.astype(jnp.bfloat16), w3[...],
                    preferred_element_type=jnp.float32) + b3[...], 0.0)
        h = h * s3[...] + c3[...]                       # final eval-BatchNorm

        Cout = h.shape[-1]
        h = h.reshape(tm, K, Cout)                      # layout-preserving (K % 8 == 0)

        if has_mask:
            m = mask_ref[...]                                    # (tm, K)
            h = h + ((m - 1.0) * 1e30)[:, :, None]               # additive -BIG bias
            mx = jnp.max(h, axis=1)                              # (tm, Cout)
            any_valid = jnp.max(m, axis=1, keepdims=True) > 0.0  # (tm, 1)
            out_ref[...] = jnp.where(any_valid, mx, 0.0).astype(out_ref.dtype)
        else:
            # no-mask fast path (global max pool): skip the select entirely
            out_ref[...] = jnp.max(h, axis=1).astype(out_ref.dtype)

    return kernel


def _head_kernel(x_ref, w1, b1, w2, b2, w3, b3, w4, b4, out_ref):
    """lin1+ReLU -> lin2+ReLU -> lin3 -> lin4 -> log_softmax (dropout = eval identity).
    bf16 weights (bandwidth-bound), f32 accumulation and elementwise math."""
    h = x_ref[...].astype(jnp.float32)

    def lin(h, w_ref, b_ref):
        return jnp.dot(h.astype(jnp.bfloat16), w_ref[...],
                       preferred_element_type=jnp.float32) + b_ref[...]

    h = jnp.maximum(lin(h, w1, b1), 0.0)
    h = jnp.maximum(lin(h, w2, b2), 0.0)
    h = lin(h, w3, b3)
    h = lin(h, w4, b4)
    m = jnp.max(h, axis=-1, keepdims=True)
    lse = jnp.log(jnp.sum(jnp.exp(h - m), axis=-1, keepdims=True)) + m
    out_ref[...] = (h - lse).astype(out_ref.dtype)


# ---------------------------------------------------------------------------
# Pallas wrappers
# ---------------------------------------------------------------------------

def _choose_tm(BM, K, max_rows=2048):
    """Rows-of-groups per grid step.  Must be a multiple of 8 (sublane granule
    of the (tm, K) / (tm, Cout) blocks) or equal the full row count; big enough
    that tm*K keeps the MXU fed; >=2 grid steps when BM allows (v7x: 2 TCs)."""
    if BM <= 8:
        return BM
    tm = max(8, (min(BM, max(1, max_rows // max(K, 1))) // 8) * 8)
    while tm > 8 and (BM + tm - 1) // tm < 2:
        tm = max(8, (tm // 2 // 8) * 8)
    return tm


def mlp_max(feats2d, mask, params, *, BM, K, tm, use_fma_first):
    """feats2d: (BM*K, Cin_p); mask: (BM, K) f32 or None -> (BM, Cout) f32."""
    Cin_p = feats2d.shape[-1]
    Cout = params[4].shape[1]                    # W3 columns
    has_mask = mask is not None

    # pad the group axis so no tail block is dropped (padded groups -> output 0
    # via the mask, or garbage rows that are sliced away in the no-mask case)
    BMp = _round_up(BM, tm)
    if BMp != BM:
        feats2d = jnp.pad(feats2d, ((0, (BMp - BM) * K), (0, 0)))
        if has_mask:
            mask = jnp.pad(mask, ((0, BMp - BM), (0, 0)))
    grid_len = BMp // tm

    kernel = _make_mlp_max_kernel(tm, K, use_fma_first, has_mask)

    feats_spec = pl.BlockSpec((tm * K, Cin_p), lambda i: (i, 0))
    if grid_len > 4:
        # deeper pipelining only pays off once the grid is long enough
        feats_spec = pl.BlockSpec((tm * K, Cin_p), lambda i: (i, 0),
                                  pipeline_mode=pl.Buffered(3))
    in_specs = [feats_spec]
    ins = [feats2d]
    if has_mask:
        in_specs.append(pl.BlockSpec((tm, K), lambda i: (i, 0)))
        ins.append(mask)
    w_specs = [pl.BlockSpec(w.shape, lambda i: (0, 0)) for w in params]

    out = pl.pallas_call(
        kernel,
        out_shape=jax.ShapeDtypeStruct((BMp, Cout), jnp.float32),
        grid=(grid_len,),
        in_specs=in_specs + w_specs,
        out_specs=pl.BlockSpec((tm, Cout), lambda i: (i, 0)),
        compiler_params=pltpu.CompilerParams(
            dimension_semantics=("parallel",),
            vmem_limit_bytes=48 << 20),          # <= v7x's 64 MiB physical VMEM
    )(*ins, *params)
    return out[:BM] if BMp != BM else out


def head(x, lin_params):
    """x: (B, 2048) f32 -> log-probs (B, 8). Weight-bandwidth bound: bf16 weights."""
    w_args = []
    for (W, b) in lin_params:
        w_args += [W.astype(jnp.bfloat16), b]
    B = x.shape[0]
    Cout = lin_params[-1][0].shape[1]
    return pl.pallas_call(
        _head_kernel,
        out_shape=jax.ShapeDtypeStruct((B, Cout), jnp.float32),
        compiler_params=pltpu.CompilerParams(vmem_limit_bytes=48 << 20),
    )(x, *w_args)


# ---------------------------------------------------------------------------
# JAX glue: FPS + radius neighbor search (data-dependent graph construction)
# ---------------------------------------------------------------------------

def fps_dense(pos, m):
    # TODO(synk): torch_geometric.fps uses a random start point; we start at
    # index 0 of each sample (deterministic farthest-point sampling).
    N = pos.shape[0]

    def body(i, state):
        idx, dists = state
        last = pos[idx[i - 1]]
        d = jnp.sum((pos - last) ** 2, axis=-1)
        dists = jnp.minimum(dists, d)
        nxt = jnp.argmax(dists).astype(jnp.int32)
        return idx.at[i].set(nxt), dists

    idx0 = jnp.zeros((m,), jnp.int32)
    dists0 = jnp.full((N,), jnp.inf, jnp.float32)
    idx, _ = lax.fori_loop(1, m, body, (idx0, dists0))
    return idx


def radius_dense(pos, centers, r, K):
    # TODO(synk): torch_cluster.radius keeps an arbitrary first-64 neighbor
    # ordering; we keep the K lowest-index in-radius points (padded + masked).
    N = pos.shape[0]
    d2 = jnp.sum((centers[:, None, :] - pos[None, :, :]) ** 2, axis=-1)  # (M, N)
    within = d2 <= r * r
    key = jnp.where(within, (N - jnp.arange(N)).astype(jnp.float32), -1.0)
    _, idx = lax.top_k(key, K)                       # (M, K) first in-radius indices
    mask = jnp.take_along_axis(within, idx, axis=1)  # (M, K)
    return idx, mask


# ---------------------------------------------------------------------------
# Model modules
# ---------------------------------------------------------------------------

def sa_module(x, pos, ratio, r, K, folded_params, *, use_fma_first):
    """SAModule: FPS -> radius graph -> PointConv(MLP) + max aggregation."""
    B, N, _ = pos.shape
    M = int(math.ceil(ratio * N))
    idx = jax.vmap(lambda p: fps_dense(p, M))(pos)                # (B, M)
    centers = jax.vmap(lambda p, i: p[i])(pos, idx)               # (B, M, 3)
    nbr_idx, nbr_mask = jax.vmap(
        lambda p, c: radius_dense(p, c, r, K))(pos, centers)      # (B, M, K)

    # round K up to the 8-sublane granule with masked-out padding
    K_p = _round_up(K, 8)
    if K_p != K:
        nbr_idx = jnp.pad(nbr_idx, ((0, 0), (0, 0), (0, K_p - K)))
        nbr_mask = jnp.pad(nbr_mask, ((0, 0), (0, 0), (0, K_p - K)))
        K = K_p

    nbr_pos = jax.vmap(lambda p, i: p[i])(pos, nbr_idx)           # (B, M, K, 3)
    rel = nbr_pos - centers[:, :, None, :]
    if x is None:
        feats = rel                                               # Cin = 3
    else:
        nbr_x = jax.vmap(lambda f, i: f[i])(x, nbr_idx)           # (B, M, K, C)
        feats = jnp.concatenate([nbr_x, rel], axis=-1)            # [x_j, pos_j - pos_i]

    BM = B * M
    Cin = feats.shape[-1]
    if use_fma_first:
        feats2d = feats.reshape(BM * K, Cin).astype(jnp.float32)  # VPU first layer
    else:
        Cin_p = folded_params[0].shape[0]                         # padded contraction dim
        feats2d = feats.reshape(BM * K, Cin)
        if Cin_p != Cin:
            feats2d = jnp.pad(feats2d, ((0, 0), (0, Cin_p - Cin)))
        feats2d = feats2d.astype(jnp.bfloat16)

    tm = _choose_tm(BM, K)
    out = mlp_max(feats2d, nbr_mask.astype(jnp.float32).reshape(BM, K),
                  folded_params, BM=BM, K=K, tm=tm, use_fma_first=use_fma_first)
    return out.reshape(B, M, -1), centers


def global_sa_module(x, pos, folded_params):
    """GlobalSAModule: nn(cat([x, pos])) then global max pool over each sample."""
    B, M, _ = x.shape
    feats = jnp.concatenate([x, pos], axis=-1)                    # (B, M, C+3)
    # pad the point axis to an 8-sublane multiple by repeating point 0 (max-invariant)
    M_p = _round_up(M, 8)
    if M_p != M:
        feats = jnp.concatenate(
            [feats, jnp.broadcast_to(feats[:, :1, :], (B, M_p - M, feats.shape[-1]))],
            axis=1)
    Cin = feats.shape[-1]
    Cin_p = folded_params[0].shape[0]
    feats2d = feats.reshape(B * M_p, Cin)
    if Cin_p != Cin:
        feats2d = jnp.pad(feats2d, ((0, 0), (0, Cin_p - Cin)))
    feats2d = feats2d.astype(jnp.bfloat16)
    tm = _choose_tm(B, M_p)
    # TODO(synk): at realistic batch sizes (B >= 16) split B across >=2 grid steps
    # so both v7x TensorCores are used; with B=2 the block equals the full array.
    return mlp_max(feats2d, None, folded_params, BM=B, K=M_p, tm=tm,
                   use_fma_first=False)                           # (B, Cout)


def block_pointnet_forward(pos1, pos2, params, K1, K2):
    def branch(pos):
        x1, p1 = sa_module(None, pos, 0.5, 0.2, K1, params["sa1"], use_fma_first=True)
        x2, p2 = sa_module(x1, p1, 0.25, 0.4, K2, params["sa2"], use_fma_first=False)
        return global_sa_module(x2, p2, params["sa3"])            # (B, 1024)

    xg1 = branch(pos1)
    xg2 = branch(pos2)
    # NOTE: 'x = x1 + x2' in the torch forward is dead code (overwritten by cat).
    x = jnp.concatenate([xg1, xg2], axis=1)                       # (B, 2048)
    return head(x, params["head"])                                # (B, 8) log-probs


# ---------------------------------------------------------------------------
# Parameter init (Linear + eval-mode BatchNorm) and folding
# ---------------------------------------------------------------------------

def init_mlp_params(key, channels):
    layers = []
    for i in range(1, len(channels)):
        key, kw, kb, kg, kbt, km = jax.random.split(key, 6)
        cin, cout = channels[i - 1], channels[i]
        W = jax.random.normal(kw, (cin, cout), jnp.float32) / jnp.sqrt(cin)
        b = 0.01 * jax.random.normal(kb, (1, cout), jnp.float32)
        gamma = 1.0 + 0.1 * jax.random.normal(kg, (1, cout), jnp.float32)
        beta = 0.1 * jax.random.normal(kbt, (1, cout), jnp.float32)
        mean = 0.01 * jax.random.normal(km, (1, cout), jnp.float32)
        var = jnp.ones((1, cout), jnp.float32)
        scale = gamma / jnp.sqrt(var + 1e-5)
        bias = beta - mean * scale
        layers.append((W, b, scale, bias))                        # BN folded to scale/bias
    return layers, key


def init_lin_params(key, dims):
    layers = []
    for i in range(1, len(dims)):
        key, kw, kb = jax.random.split(key, 3)
        cin, cout = dims[i - 1], dims[i]
        W = jax.random.normal(kw, (cin, cout), jnp.float32) / jnp.sqrt(cin)
        b = 0.01 * jax.random.normal(kb, (1, cout), jnp.float32)
        layers.append((W, b))
    return layers, key


def fold_mlp_params(mlp_params, *, cin_pad=None, first_layer_dtype=jnp.bfloat16):
    """Fold BN1/BN2 into the next layer's weights/bias, zero-pad W1's contraction
    rows to cin_pad, and cast matmul weights to bf16 (biases & final BN stay f32)."""
    (W1, b1, s1, c1), (W2, b2, s2, c2), (W3, b3, s3, c3) = mlp_params
    W2f = W2 * s1.reshape(-1, 1)          # diag(s1) @ W2
    b2f = b2 + c1 @ W2
    W3f = W3 * s2.reshape(-1, 1)          # diag(s2) @ W3
    b3f = b3 + c2 @ W3
    if cin_pad is not None and cin_pad > W1.shape[0]:
        W1 = jnp.pad(W1, ((0, cin_pad - W1.shape[0]), (0, 0)))
    return (W1.astype(first_layer_dtype), b1,
            W2f.astype(jnp.bfloat16), b2f,
            W3f.astype(jnp.bfloat16), b3f,
            s3, c3)


# ---------------------------------------------------------------------------

if __name__ == "__main__":
    key = jax.random.PRNGKey(0)
    B, N = 2, 32                    # 2 samples, 32 points each, data.x = None
    K1 = min(64, N)                 # max_num_neighbors capped by available points
    K2 = min(64, int(math.ceil(0.5 * N)))

    key, kp1, kp2 = jax.random.split(key, 3)
    pos1 = jax.random.uniform(kp1, (B, N, 3), jnp.float32)   # data.input1 (dense)
    pos2 = jax.random.uniform(kp2, (B, N, 3), jnp.float32)   # data.input2 (dense)

    raw_sa1, key = init_mlp_params(key, [3, 64, 64, 128])
    raw_sa2, key = init_mlp_params(key, [128 + 3, 128, 128, 256])
    raw_sa3, key = init_mlp_params(key, [256 + 3, 256, 512, 1024])
    raw_head, key = init_lin_params(key, [2048, 1024, 512, 256, 8])

    params = {
        # sa1: Cin=3 -> VPU-FMA first layer, keep W1 in f32 (elementwise path)
        "sa1": fold_mlp_params(raw_sa1, cin_pad=None, first_layer_dtype=jnp.float32),
        # sa2/sa3: pad the contraction dim to a 128-lane multiple (131->256, 259->384)
        "sa2": fold_mlp_params(raw_sa2, cin_pad=_round_up(128 + 3, 128)),
        "sa3": fold_mlp_params(raw_sa3, cin_pad=_round_up(256 + 3, 128)),
        "head": raw_head,
    }

    out = block_pointnet_forward(pos1, pos2, params, K1, K2)
    out = jax.block_until_ready(out)
    assert out.shape == (B, 8)
    assert bool(jnp.all(jnp.isfinite(out)))
    print("KERNEL_OK")
</pallas_src>

<mosaic_0001>
module attributes {stable_mosaic.version = 11 : i64} {
  func.func @kernel(%arg0: i32, %arg1: memref<512x3xf32, #tpu.memory_space<vmem>>, %arg2: memref<16x32xf32, #tpu.memory_space<vmem>>, %arg3: memref<3x64xf32, #tpu.memory_space<vmem>>, %arg4: memref<1x64xf32, #tpu.memory_space<vmem>>, %arg5: memref<64x64xbf16, #tpu.memory_space<vmem>>, %arg6: memref<1x64xf32, #tpu.memory_space<vmem>>, %arg7: memref<64x128xbf16, #tpu.memory_space<vmem>>, %arg8: memref<1x128xf32, #tpu.memory_space<vmem>>, %arg9: memref<1x128xf32, #tpu.memory_space<vmem>>, %arg10: memref<1x128xf32, #tpu.memory_space<vmem>>, %arg11: memref<16x128xf32, #tpu.memory_space<vmem>>) attributes {dimension_semantics = [#tpu.dimension_semantics<parallel>], iteration_bounds = array<i64: 2>, scalar_prefetch = 0 : i64, scratch_operands = 0 : i64, tpu.core_type = #tpu.core_type<tc>, window_params = [{transform_indices = @transform_0, window_bounds = array<i64: 512, 3>}, {transform_indices = @transform_1, window_bounds = array<i64: 16, 32>}, {pipeline_mode = #tpu.pipeline_mode<synchronous>, transform_indices = @transform_2, window_bounds = array<i64: 3, 64>}, {pipeline_mode = #tpu.pipeline_mode<synchronous>, transform_indices = @transform_3, window_bounds = array<i64: 1, 64>}, {pipeline_mode = #tpu.pipeline_mode<synchronous>, transform_indices = @transform_4, window_bounds = array<i64: 64, 64>}, {pipeline_mode = #tpu.pipeline_mode<synchronous>, transform_indices = @transform_5, window_bounds = array<i64: 1, 64>}, {pipeline_mode = #tpu.pipeline_mode<synchronous>, transform_indices = @transform_6, window_bounds = array<i64: 64, 128>}, {pipeline_mode = #tpu.pipeline_mode<synchronous>, transform_indices = @transform_7, window_bounds = array<i64: 1, 128>}, {pipeline_mode = #tpu.pipeline_mode<synchronous>, transform_indices = @transform_8, window_bounds = array<i64: 1, 128>}, {pipeline_mode = #tpu.pipeline_mode<synchronous>, transform_indices = @transform_9, window_bounds = array<i64: 1, 128>}, {transform_indices = @transform_10, window_bounds = array<i64: 16, 128>}]} {
    %c0 = arith.constant 0 : index
    %c0_0 = arith.constant 0 : index
    %0 = vector.load %arg1[%c0, %c0_0] : memref<512x3xf32, #tpu.memory_space<vmem>>, vector<512x3xf32>
    %c0_1 = arith.constant 0 : index
    %c0_2 = arith.constant 0 : index
    %1 = vector.load %arg3[%c0_1, %c0_2] : memref<3x64xf32, #tpu.memory_space<vmem>>, vector<3x64xf32>
    %2 = vector.extract_strided_slice %0 {offsets = [0, 0], sizes = [512, 1], strides = [1, 1]} : vector<512x3xf32> to vector<512x1xf32>
    %3 = vector.extract_strided_slice %1 {offsets = [0, 0], sizes = [1, 64], strides = [1, 1]} : vector<3x64xf32> to vector<1x64xf32>
    %4 = vector.broadcast %2 : vector<512x1xf32> to vector<512x64xf32>
    %5 = vector.broadcast %3 : vector<1x64xf32> to vector<512x64xf32>
    %6 = arith.mulf %4, %5 : vector<512x64xf32>
    %7 = vector.extract_strided_slice %0 {offsets = [0, 1], sizes = [512, 1], strides = [1, 1]} : vector<512x3xf32> to vector<512x1xf32>
    %8 = vector.extract_strided_slice %1 {offsets = [1, 0], sizes = [1, 64], strides = [1, 1]} : vector<3x64xf32> to vector<1x64xf32>
    %9 = vector.broadcast %7 : vector<512x1xf32> to vector<512x64xf32>
    %10 = vector.broadcast %8 : vector<1x64xf32> to vector<512x64xf32>
    %11 = arith.mulf %9, %10 : vector<512x64xf32>
    %12 = arith.addf %6, %11 : vector<512x64xf32>
    %13 = vector.extract_strided_slice %0 {offsets = [0, 2], sizes = [512, 1], strides = [1, 1]} : vector<512x3xf32> to vector<512x1xf32>
    %14 = vector.extract_strided_slice %1 {offsets = [2, 0], sizes = [1, 64], strides = [1, 1]} : vector<3x64xf32> to vector<1x64xf32>
    %15 = vector.broadcast %13 : vector<512x1xf32> to vector<512x64xf32>
    %16 = vector.broadcast %14 : vector<1x64xf32> to vector<512x64xf32>
    %17 = arith.mulf %15, %16 : vector<512x64xf32>
    %18 = arith.addf %12, %17 : vector<512x64xf32>
    %c0_3 = arith.constant 0 : index
    %c0_4 = arith.constant 0 : index
    %19 = vector.load %arg4[%c0_3, %c0_4] : memref<1x64xf32, #tpu.memory_space<vmem>>, vector<1x64xf32>
    %20 = vector.broadcast %19 : vector<1x64xf32> to vector<512x64xf32>
    %21 = arith.addf %18, %20 : vector<512x64xf32>
    %cst = arith.constant 0.000000e+00 : f32
    %22 = vector.broadcast %cst : f32 to vector<512x64xf32>
    %23 = arith.maximumf %21, %22 : vector<512x64xf32>
    %24 = arith.truncf %23 : vector<512x64xf32> to vector<512x64xbf16>
    %c0_5 = arith.constant 0 : index
    %c0_6 = arith.constant 0 : index
    %25 = vector.load %arg5[%c0_5, %c0_6] : memref<64x64xbf16, #tpu.memory_space<vmem>>, vector<64x64xbf16>
    %cst_7 = arith.constant dense<0.000000e+00> : vector<512x64xf32>
    %26 = tpu.matmul %24, %25, %cst_7 {dimension_numbers = #tpu.dot_dimension_numbers<[1], [0], [0], [1], [0, 0, 1, 1], [], []>} : vector<512x64xbf16>, vector<64x64xbf16>, vector<512x64xf32> -> vector<512x64xf32>
    %c0_8 = arith.constant 0 : index
    %c0_9 = arith.constant 0 : index
    %27 = vector.load %arg6[%c0_8, %c0_9] : memref<1x64xf32, #tpu.memory_space<vmem>>, vector<1x64xf32>
    %28 = vector.broadcast %27 : vector<1x64xf32> to vector<512x64xf32>
    %29 = arith.addf %26, %28 : vector<512x64xf32>
    %cst_10 = arith.constant 0.000000e+00 : f32
    %30 = vector.broadcast %cst_10 : f32 to vector<512x64xf32>
    %31 = arith.maximumf %29, %30 : vector<512x64xf32>
    %32 = arith.truncf %31 : vector<512x64xf32> to vector<512x64xbf16>
    %c0_11 = arith.constant 0 : index
    %c0_12 = arith.constant 0 : index
    %33 = vector.load %arg7[%c0_11, %c0_12] : memref<64x128xbf16, #tpu.memory_space<vmem>>, vector<64x128xbf16>
    %cst_13 = arith.constant dense<0.000000e+00> : vector<512x128xf32>
    %34 = tpu.matmul %32, %33, %cst_13 {dimension_numbers = #tpu.dot_dimension_numbers<[1], [0], [0], [1], [0, 0, 1, 1], [], []>} : vector<512x64xbf16>, vector<64x128xbf16>, vector<512x128xf32> -> vector<512x128xf32>
    %c0_14 = arith.constant 0 : index
    %c0_15 = arith.constant 0 : index
    %35 = vector.load %arg8[%c0_14, %c0_15] : memref<1x128xf32, #tpu.memory_space<vmem>>, vector<1x128xf32>
    %36 = vector.broadcast %35 : vector<1x128xf32> to vector<512x128xf32>
    %37 = arith.addf %34, %36 : vector<512x128xf32>
    %cst_16 = arith.constant 0.000000e+00 : f32
    %38 = vector.broadcast %cst_16 : f32 to vector<512x128xf32>
    %39 = arith.maximumf %37, %38 : vector<512x128xf32>
    %c0_17 = arith.constant 0 : index
    %c0_18 = arith.constant 0 : index
    %40 = vector.load %arg9[%c0_17, %c0_18] : memref<1x128xf32, #tpu.memory_space<vmem>>, vector<1x128xf32>
    %41 = vector.broadcast %40 : vector<1x128xf32> to vector<512x128xf32>
    %42 = arith.mulf %39, %41 : vector<512x128xf32>
    %c0_19 = arith.constant 0 : index
    %c0_20 = arith.constant 0 : index
    %43 = vector.load %arg10[%c0_19, %c0_20] : memref<1x128xf32, #tpu.memory_space<vmem>>, vector<1x128xf32>
    %44 = vector.broadcast %43 : vector<1x128xf32> to vector<512x128xf32>
    %45 = arith.addf %42, %44 : vector<512x128xf32>
    %46 = vector.shape_cast %45 : vector<512x128xf32> to vector<16x32x128xf32>
    %c0_21 = arith.constant 0 : index
    %c0_22 = arith.constant 0 : index
    %47 = vector.load %arg2[%c0_21, %c0_22] : memref<16x32xf32, #tpu.memory_space<vmem>>, vector<16x32xf32>
    %cst_23 = arith.constant 1.000000e+00 : f32
    %48 = vector.broadcast %cst_23 : f32 to vector<16x32xf32>
    %49 = arith.subf %47, %48 : vector<16x32xf32>
    %cst_24 = arith.constant 1.000000e+30 : f32
    %50 = vector.broadcast %cst_24 : f32 to vector<16x32xf32>
    %51 = arith.mulf %49, %50 : vector<16x32xf32>
    %52 = vector.shape_cast %51 : vector<16x32xf32> to vector<16x32x1xf32>
    %53 = vector.broadcast %52 : vector<16x32x1xf32> to vector<16x32x128xf32>
    %54 = arith.addf %46, %53 : vector<16x32x128xf32>
    %cst_25 = arith.constant dense<0xFF800000> : vector<16x128xf32>
    %55 = vector.multi_reduction <maximumf>, %54, %cst_25 [1] : vector<16x32x128xf32> to vector<16x128xf32>
    %cst_26 = arith.constant dense<0xFF800000> : vector<16xf32>
    %56 = vector.multi_reduction <maximumf>, %47, %cst_26 [1] : vector<16x32xf32> to vector<16xf32>
    %57 = vector.shape_cast %56 : vector<16xf32> to vector<16x1xf32>
    %cst_27 = arith.constant 0.000000e+00 : f32
    %58 = vector.broadcast %cst_27 : f32 to vector<16x1xf32>
    %59 = arith.cmpf ogt, %57, %58 : vector<16x1xf32>
    %cst_28 = arith.constant 0.000000e+00 : f32
    %60 = vector.shape_cast %59 : vector<16x1xi1> to vector<16x1xi1>
    %61 = vector.broadcast %60 : vector<16x1xi1> to vector<16x128xi1>
    %62 = vector.broadcast %cst_28 : f32 to vector<16x128xf32>
    %63 = arith.select %61, %55, %62 : vector<16x128xi1>, vector<16x128xf32>
    %c0_29 = arith.constant 0 : index
    %c0_30 = arith.constant 0 : index
    %64 = vector.load %arg11[%c0_29, %c0_30] : memref<16x128xf32, #tpu.memory_space<vmem>>, vector<16x128xf32>
    tpu.vector_store %arg11[%c0_29, %c0_30], %63 {strides = array<i32>} : memref<16x128xf32, #tpu.memory_space<vmem>>, vector<16x128xf32>,
    return
  }
  func.func @transform_0(%arg0: i32) -> (i32, i32) {
    %c0_i32 = arith.constant 0 : i32
    %c0_i32_0 = arith.constant 0 : i32
    return %arg0, %c0_i32 : i32, i32
  }
  func.func @transform_1(%arg0: i32) -> (i32, i32) {
    %c0_i32 = arith.constant 0 : i32
    %c0_i32_0 = arith.constant 0 : i32
    return %arg0, %c0_i32 : i32, i32
  }
  func.func @transform_2(%arg0: i32) -> (i32, i32) {
    %c0_i32 = arith.constant 0 : i32
    %c0_i32_0 = arith.constant 0 : i32
    %c0_i32_1 = arith.constant 0 : i32
    return %c0_i32, %c0_i32_0 : i32, i32
  }
  func.func @transform_3(%arg0: i32) -> (i32, i32) {
    %c0_i32 = arith.constant 0 : i32
    %c0_i32_0 = arith.constant 0 : i32
    %c0_i32_1 = arith.constant 0 : i32
    return %c0_i32, %c0_i32_0 : i32, i32
  }
  func.func @transform_4(%arg0: i32) -> (i32, i32) {
    %c0_i32 = arith.constant 0 : i32
    %c0_i32_0 = arith.constant 0 : i32
    %c0_i32_1 = arith.constant 0 : i32
    return %c0_i32, %c0_i32_0 : i32, i32
  }
  func.func @transform_5(%arg0: i32) -> (i32, i32) {
    %c0_i32 = arith.constant 0 : i32
    %c0_i32_0 = arith.constant 0 : i32
    %c0_i32_1 = arith.constant 0 : i32
    return %c0_i32, %c0_i32_0 : i32, i32
  }
  func.func @transform_6(%arg0: i32) -> (i32, i32) {
    %c0_i32 = arith.constant 0 : i32
    %c0_i32_0 = arith.constant 0 : i32
    %c0_i32_1 = arith.constant 0 : i32
    return %c0_i32, %c0_i32_0 : i32, i32
  }
  func.func @transform_7(%arg0: i32) -> (i32, i32) {
    %c0_i32 = arith.constant 0 : i32
    %c0_i32_0 = arith.constant 0 : i32
    %c0_i32_1 = arith.constant 0 : i32
    return %c0_i32, %c0_i32_0 : i32, i32
  }
  func.func @transform_8(%arg0: i32) -> (i32, i32) {
    %c0_i32 = arith.constant 0 : i32
    %c0_i32_0 = arith.constant 0 : i32
    %c0_i32_1 = arith.constant 0 : i32
    return %c0_i32, %c0_i32_0 : i32, i32
  }
  func.func @transform_9(%arg0: i32) -> (i32, i32) {
    %c0_i32 = arith.constant 0 : i32
    %c0_i32_0 = arith.constant 0 : i32
    %c0_i32_1 = arith.constant 0 : i32
    return %c0_i32, %c0_i32_0 : i32, i32
  }
  func.func @transform_10(%arg0: i32) -> (i32, i32) {
    %c0_i32 = arith.constant 0 : i32
    %c0_i32_0 = arith.constant 0 : i32
    return %arg0, %c0_i32 : i32, i32
  }
}

</mosaic_0001>

<llo_original>
// kernel: tpu_custom_call.1
$region0: #{tpu_custom_call.1}
  #allocation0 [shape = 'u32[]', space=smem, size = 0x4, offset = 0x4, fixed_abs, tag = 'smem constant byte address 0x4 - core index']
  #allocation1 [shape = 'u32[144,128]{1,0:T(1,128)}', space=vmem, size = 0x12000, scoped, tag = 'internal scratch']
  %s0 = inlined_call_operand.vmem [shape: f32[1024,3], index: 0, kind: input, shape index: {}]
  %s1 = inlined_call_operand.vmem [shape: f32[32,32], index: 1, kind: input, shape index: {}]
  %s2 = inlined_call_operand.vmem [shape: f32[3,64], index: 2, kind: input, shape index: {}]
  %s3 = inlined_call_operand.vmem [shape: f32[1,64], index: 3, kind: input, shape index: {}]
  %s4 = inlined_call_operand.vmem [shape: bf16[64,64], index: 4, kind: input, shape index: {}]
  %s5 = inlined_call_operand.vmem [shape: f32[1,64], index: 5, kind: input, shape index: {}]
  %s6 = inlined_call_operand.vmem [shape: bf16[64,128], index: 6, kind: input, shape index: {}]
  %s7 = inlined_call_operand.vmem [shape: f32[1,128], index: 7, kind: input, shape index: {}]
  %s8 = inlined_call_operand.vmem [shape: f32[1,128], index: 8, kind: input, shape index: {}]
  %s9 = inlined_call_operand.vmem [shape: f32[1,128], index: 9, kind: input, shape index: {}]
  %s10 = inlined_call_operand.hbm [shape: f32[32,128], index: 10, kind: output, shape index: {}]
  %s11 = sld [smem:[#allocation0]]
  $region73: #{tpu_custom_call.1} parent=0
    _
  %s13 = ssub.s32 1, %s11
  %s14 = scalar_select 0, %s13, %s11
  $region1: #{tpu_custom_call.1} parent=0
    #allocation2 [shape = 'u8[16384]{0}', space=vmem, size = 0x4000, scoped, tag = 'output window, operand 0']
    #allocation3 [shape = 's32[2]{0}', space=sflag, size = 0x8, scoped, tag = 'scoped memory for tpu_custom_call.1']
    %15 = vsyncpa [#allocation3], 0
    %s16 = scalar_lea.sflag [#allocation3], 1
    %17 = vsyncpa %s16, 0
    loop: start=0, step=1, limit=4
    $region2: #{tpu_custom_call.1} parent=1 // loop_pre_header
      _
    $region3: #{tpu_custom_call.1} parent=1 // loop_header
      %s19 = sphi 0, %s23
      %p20 = scmp.ge.s32.totalorder %s19, 4
      %s29 = sphi 0, %s31
      %s32 = sphi 0, %s29
      %s33 = sphi 0, %s32
      %s49 = sphi 0, %s33
      %s55 = sphi 0, %s57
      %s58 = sphi 0, %s55
      %s59 = sphi 0, %s58
      %s75 = sphi 0, %s59
      %s79 = sphi 0, %s79
      %s81 = sphi 0, %s79
      %s82 = sphi 0, %s81
      %s96 = sphi 0, %s82
      %s100 = sphi 0, %s100
      %s102 = sphi 0, %s100
      %s103 = sphi 0, %s102
      %s117 = sphi 0, %s103
      %s121 = sphi 0, %s121
      %s123 = sphi 0, %s121
      %s124 = sphi 0, %s123
      %s138 = sphi 0, %s124
      %s142 = sphi 0, %s142
      %s144 = sphi 0, %s142
      %s145 = sphi 0, %s144
      %s159 = sphi 0, %s145
      %s163 = sphi 0, %s163
      %s165 = sphi 0, %s163
      %s166 = sphi 0, %s165
      %s180 = sphi 0, %s166
      %s184 = sphi 0, %s184
      %s186 = sphi 0, %s184
      %s187 = sphi 0, %s186
      %s201 = sphi 0, %s187
      %s205 = sphi 0, %s205
      %s207 = sphi 0, %s205
      %s208 = sphi 0, %s207
      %s222 = sphi 0, %s208
      %s226 = sphi 0, %s226
      %s228 = sphi 0, %s226
      %s229 = sphi 0, %s228
      %s243 = sphi 0, %s229
      %s249 = sphi 0, %s251
      %s252 = sphi 0, %s249
      %s253 = sphi 0, %s252
      %s269 = sphi 0, %s253
    $region4: #{tpu_custom_call.1} parent=1 // loop_header_branch
      %22 = sbr.rel (%p20) target = $region8
    $region5: #{tpu_custom_call.1} parent=1 // loop_body
      %s24 = ssub.s32 %s19, 1
      %s25 = ssub.s32 %s19, 2
      %s26 = sadd.s32 %s19, 1
      %s27 = ssub.s32 %s19, %s26
      %p28 = scmp.eq.s32.totalorder %s27, 0
      %s30 = sadd.s32 %s29, 1
      %s31 = scalar_select %p28, %s29, %s30
      %p34 = pneg %p28
      %p35 = scmp.eq.s32.totalorder %s19, 1
      %p36 = por %p34, %p35
      %p37 = scmp.ne.s32.totalorder %s29, %s32
      %p38 = scmp.eq.s32.totalorder %s19, 0
      %p39 = por %p37, %p38
      %p40 = scmp.ne.s32.totalorder %s29, %s32
      %p41 = scmp.eq.s32.totalorder %s24, 1
      %p42 = por %p40, %p41
      %p43 = scmp.ne.s32.totalorder %s32, %s33
      %p44 = scmp.eq.s32.totalorder %s24, 0
      %p45 = por %p43, %p44
      %p46 = scmp.ne.s32.totalorder %s32, %s33
      %p47 = scmp.eq.s32.totalorder %s25, 1
      %p48 = por %p46, %p47
      %p50 = scmp.ne.s32.totalorder %s33, %s49
      %p51 = scmp.eq.s32.totalorder %s25, 0
      %p52 = por %p50, %p51
      %s53 = ssub.s32 %s19, %s26
      %p54 = scmp.eq.s32.totalorder %s53, 0
      %s56 = sadd.s32 %s55, 1
      %s57 = scalar_select %p54, %s55, %s56
      %p60 = pneg %p54
      %p61 = scmp.eq.s32.totalorder %s19, 1
      %p62 = por %p60, %p61
      %p63 = scmp.ne.s32.totalorder %s55, %s58
      %p64 = scmp.eq.s32.totalorder %s19, 0
      %p65 = por %p63, %p64
      %p66 = scmp.ne.s32.totalorder %s55, %s58
      %p67 = scmp.eq.s32.totalorder %s24, 1
      %p68 = por %p66, %p67
      %p69 = scmp.ne.s32.totalorder %s58, %s59
      %p70 = scmp.eq.s32.totalorder %s24, 0
      %p71 = por %p69, %p70
      %p72 = scmp.ne.s32.totalorder %s58, %s59
      %p73 = scmp.eq.s32.totalorder %s25, 1
      %p74 = por %p72, %p73
      %p76 = scmp.ne.s32.totalorder %s59, %s75
      %p77 = scmp.eq.s32.totalorder %s25, 0
      %p78 = por %p76, %p77
      %s80 = sadd.s32 %s79, 1
      %p83 = scmp.eq.s32.totalorder %s19, 1
      %p84 = scmp.ne.s32.totalorder %s79, %s81
      %p85 = scmp.eq.s32.totalorder %s19, 0
      %p86 = por %p84, %p85
      %p87 = scmp.ne.s32.totalorder %s79, %s81
      %p88 = scmp.eq.s32.totalorder %s24, 1
      %p89 = por %p87, %p88
      %p90 = scmp.ne.s32.totalorder %s81, %s82
      %p91 = scmp.eq.s32.totalorder %s24, 0
      %p92 = por %p90, %p91
      %p93 = scmp.ne.s32.totalorder %s81, %s82
      %p94 = scmp.eq.s32.totalorder %s25, 1
      %p95 = por %p93, %p94
      %p97 = scmp.ne.s32.totalorder %s82, %s96
      %p98 = scmp.eq.s32.totalorder %s25, 0
      %p99 = por %p97, %p98
      %s101 = sadd.s32 %s100, 1
      %p104 = scmp.eq.s32.totalorder %s19, 1
      %p105 = scmp.ne.s32.totalorder %s100, %s102
      %p106 = scmp.eq.s32.totalorder %s19, 0
      %p107 = por %p105, %p106
      %p108 = scmp.ne.s32.totalorder %s100, %s102
      %p109 = scmp.eq.s32.totalorder %s24, 1
      %p110 = por %p108, %p109
      %p111 = scmp.ne.s32.totalorder %s102, %s103
      %p112 = scmp.eq.s32.totalorder %s24, 0
      %p113 = por %p111, %p112
      %p114 = scmp.ne.s32.totalorder %s102, %s103
      %p115 = scmp.eq.s32.totalorder %s25, 1
      %p116 = por %p114, %p115
      %p118 = scmp.ne.s32.totalorder %s103, %s117
      %p119 = scmp.eq.s32.totalorder %s25, 0
      %p120 = por %p118, %p119
      %s122 = sadd.s32 %s121, 1
      %p125 = scmp.eq.s32.totalorder %s19, 1
      %p126 = scmp.ne.s32.totalorder %s121, %s123
      %p127 = scmp.eq.s32.totalorder %s19, 0
      %p128 = por %p126, %p127
      %p129 = scmp.ne.s32.totalorder %s121, %s123
      %p130 = scmp.eq.s32.totalorder %s24, 1
      %p131 = por %p129, %p130
      %p132 = scmp.ne.s32.totalorder %s123, %s124
      %p133 = scmp.eq.s32.totalorder %s24, 0
      %p134 = por %p132, %p133
      %p135 = scmp.ne.s32.totalorder %s123, %s124
      %p136 = scmp.eq.s32.totalorder %s25, 1
      %p137 = por %p135, %p136
      %p139 = scmp.ne.s32.totalorder %s124, %s138
      %p140 = scmp.eq.s32.totalorder %s25, 0
      %p141 = por %p139, %p140
      %s143 = sadd.s32 %s142, 1
      %p146 = scmp.eq.s32.totalorder %s19, 1
      %p147 = scmp.ne.s32.totalorder %s142, %s144
      %p148 = scmp.eq.s32.totalorder %s19, 0
      %p149 = por %p147, %p148
      %p150 = scmp.ne.s32.totalorder %s142, %s144
      %p151 = scmp.eq.s32.totalorder %s24, 1
      %p152 = por %p150, %p151
      %p153 = scmp.ne.s32.totalorder %s144, %s145
      %p154 = scmp.eq.s32.totalorder %s24, 0
      %p155 = por %p153, %p154
      %p156 = scmp.ne.s32.totalorder %s144, %s145
      %p157 = scmp.eq.s32.totalorder %s25, 1
      %p158 = por %p156, %p157
      %p160 = scmp.ne.s32.totalorder %s145, %s159
      %p161 = scmp.eq.s32.totalorder %s25, 0
      %p162 = por %p160, %p161
      %s164 = sadd.s32 %s163, 1
      %p167 = scmp.eq.s32.totalorder %s19, 1
      %p168 = scmp.ne.s32.totalorder %s163, %s165
      %p169 = scmp.eq.s32.totalorder %s19, 0
      %p170 = por %p168, %p169
      %p171 = scmp.ne.s32.totalorder %s163, %s165
      %p172 = scmp.eq.s32.totalorder %s24, 1
      %p173 = por %p171, %p172
      %p174 = scmp.ne.s32.totalorder %s165, %s166
      %p175 = scmp.eq.s32.totalorder %s24, 0
      %p176 = por %p174, %p175
      %p177 = scmp.ne.s32.totalorder %s165, %s166
      %p178 = scmp.eq.s32.totalorder %s25, 1
      %p179 = por %p177, %p178
      %p181 = scmp.ne.s32.totalorder %s166, %s180
      %p182 = scmp.eq.s32.totalorder %s25, 0
      %p183 = por %p181, %p182
      %s185 = sadd.s32 %s184, 1
      %p188 = scmp.eq.s32.totalorder %s19, 1
      %p189 = scmp.ne.s32.totalorder %s184, %s186
      %p190 = scmp.eq.s32.totalorder %s19, 0
      %p191 = por %p189, %p190
      %p192 = scmp.ne.s32.totalorder %s184, %s186
      %p193 = scmp.eq.s32.totalorder %s24, 1
      %p194 = por %p192, %p193
      %p195 = scmp.ne.s32.totalorder %s186, %s187
      %p196 = scmp.eq.s32.totalorder %s24, 0
      %p197 = por %p195, %p196
      %p198 = scmp.ne.s32.totalorder %s186, %s187
      %p199 = scmp.eq.s32.totalorder %s25, 1
      %p200 = por %p198, %p199
      %p202 = scmp.ne.s32.totalorder %s187, %s201
      %p203 = scmp.eq.s32.totalorder %s25, 0
      %p204 = por %p202, %p203
      %s206 = sadd.s32 %s205, 1
      %p209 = scmp.eq.s32.totalorder %s19, 1
      %p210 = scmp.ne.s32.totalorder %s205, %s207
      %p211 = scmp.eq.s32.totalorder %s19, 0
      %p212 = por %p210, %p211
      %p213 = scmp.ne.s32.totalorder %s205, %s207
      %p214 = scmp.eq.s32.totalorder %s24, 1
      %p215 = por %p213, %p214
      %p216 = scmp.ne.s32.totalorder %s207, %s208
      %p217 = scmp.eq.s32.totalorder %s24, 0
      %p218 = por %p216, %p217
      %p219 = scmp.ne.s32.totalorder %s207, %s208
      %p220 = scmp.eq.s32.totalorder %s25, 1
      %p221 = por %p219, %p220
      %p223 = scmp.ne.s32.totalorder %s208, %s222
      %p224 = scmp.eq.s32.totalorder %s25, 0
      %p225 = por %p223, %p224
      %s227 = sadd.s32 %s226, 1
      %p230 = scmp.eq.s32.totalorder %s19, 1
      %p231 = scmp.ne.s32.totalorder %s226, %s228
      %p232 = scmp.eq.s32.totalorder %s19, 0
      %p233 = por %p231, %p232
      %p234 = scmp.ne.s32.totalorder %s226, %s228
      %p235 = scmp.eq.s32.totalorder %s24, 1
      %p236 = por %p234, %p235
      %p237 = scmp.ne.s32.totalorder %s228, %s229
      %p238 = scmp.eq.s32.totalorder %s24, 0
      %p239 = por %p237, %p238
      %p240 = scmp.ne.s32.totalorder %s228, %s229
      %p241 = scmp.eq.s32.totalorder %s25, 1
      %p242 = por %p240, %p241
      %p244 = scmp.ne.s32.totalorder %s229, %s243
      %p245 = scmp.eq.s32.totalorder %s25, 0
      %p246 = por %p244, %p245
      %s247 = ssub.s32 %s19, %s26
      %p248 = scmp.eq.s32.totalorder %s247, 0
      %s250 = sadd.s32 %s249, 1
      %s251 = scalar_select %p248, %s249, %s250
      %p254 = pneg %p248
      %p255 = scmp.eq.s32.totalorder %s19, 1
      %p256 = por %p254, %p255
      %p257 = scmp.ne.s32.totalorder %s249, %s252
      %p258 = scmp.eq.s32.totalorder %s19, 0
      %p259 = por %p257, %p258
      %p260 = scmp.ne.s32.totalorder %s249, %s252
      %p261 = scmp.eq.s32.totalorder %s24, 1
      %p262 = por %p260, %p261
      %p263 = scmp.ne.s32.totalorder %s252, %s253
      %p264 = scmp.eq.s32.totalorder %s24, 0
      %p265 = por %p263, %p264
      %p266 = scmp.ne.s32.totalorder %s252, %s253
      %p267 = scmp.eq.s32.totalorder %s25, 1
      %p268 = por %p266, %p267
      %p270 = scmp.ne.s32.totalorder %s253, %s269
      %p271 = scmp.eq.s32.totalorder %s25, 0
      %p272 = por %p270, %p271
      %p273 = scmp.le.s32.totalorder 1, %s19
      %p274 = scmp.lt.s32.totalorder %s19, 3
      %p275 = pnand %p273, %p274
      %p276 = pneg %p275
      // Predicated region
      $region9: #{tpu_custom_call.1} parent=5 // pred_check
        _
      $region10: #{tpu_custom_call.1} parent=5 // pred_check_branch
        %278 = sbr.rel (%p275) target = $region12
      $region11: #{tpu_custom_call.1} parent=5 // pred_region
        %s279 = ssub.s32 %s19, 1
        // Predicated region
        $region13: #{tpu_custom_call.1} parent=11 // pred_check
          %p280 = pneg %p92
        $region14: #{tpu_custom_call.1} parent=11 // pred_check_branch
          %282 = sbr.rel (%p280) target = $region16
        $region15: #{tpu_custom_call.1} parent=11 // pred_region
          _
        $region16: #{tpu_custom_call.1} parent=11 // pred_fallthru
          _
        // Predicated region
        $region17: #{tpu_custom_call.1} parent=11 // pred_check
          %p283 = pneg %p113
        $region18: #{tpu_custom_call.1} parent=11 // pred_check_branch
          %285 = sbr.rel (%p283) target = $region20
        $region19: #{tpu_custom_call.1} parent=11 // pred_region
          _
        $region20: #{tpu_custom_call.1} parent=11 // pred_fallthru
          _
        // Predicated region
        $region21: #{tpu_custom_call.1} parent=11 // pred_check
          %p286 = pneg %p134
        $region22: #{tpu_custom_call.1} parent=11 // pred_check_branch
          %288 = sbr.rel (%p286) target = $region24
        $region23: #{tpu_custom_call.1} parent=11 // pred_region
          _
        $region24: #{tpu_custom_call.1} parent=11 // pred_fallthru
          _
        // Predicated region
        $region25: #{tpu_custom_call.1} parent=11 // pred_check
          %p289 = pneg %p155
        $region26: #{tpu_custom_call.1} parent=11 // pred_check_branch
          %291 = sbr.rel (%p289) target = $region28
        $region27: #{tpu_custom_call.1} parent=11 // pred_region
          _
        $region28: #{tpu_custom_call.1} parent=11 // pred_fallthru
          _
        // Predicated region
        $region29: #{tpu_custom_call.1} parent=11 // pred_check
          %p292 = pneg %p176
        $region30: #{tpu_custom_call.1} parent=11 // pred_check_branch
          %294 = sbr.rel (%p292) target = $region32
        $region31: #{tpu_custom_call.1} parent=11 // pred_region
          _
        $region32: #{tpu_custom_call.1} parent=11 // pred_fallthru
          _
        // Predicated region
        $region33: #{tpu_custom_call.1} parent=11 // pred_check
          %p295 = pneg %p197
        $region34: #{tpu_custom_call.1} parent=11 // pred_check_branch
          %297 = sbr.rel (%p295) target = $region36
        $region35: #{tpu_custom_call.1} parent=11 // pred_region
          _
        $region36: #{tpu_custom_call.1} parent=11 // pred_fallthru
          _
        // Predicated region
        $region37: #{tpu_custom_call.1} parent=11 // pred_check
          %p298 = pneg %p218
        $region38: #{tpu_custom_call.1} parent=11 // pred_check_branch
          %300 = sbr.rel (%p298) target = $region40
        $region39: #{tpu_custom_call.1} parent=11 // pred_region
          _
        $region40: #{tpu_custom_call.1} parent=11 // pred_fallthru
          _
        // Predicated region
        $region41: #{tpu_custom_call.1} parent=11 // pred_check
          %p301 = pneg %p239
        $region42: #{tpu_custom_call.1} parent=11 // pred_check_branch
          %303 = sbr.rel (%p301) target = $region44
        $region43: #{tpu_custom_call.1} parent=11 // pred_region
          _
        $region44: #{tpu_custom_call.1} parent=11 // pred_fallthru
          _
      $region12: #{tpu_custom_call.1} parent=5 // pred_fallthru
        _
      %p304 = scmp.lt.s32.totalorder %s19, 2
      // Predicated region
      $region45: #{tpu_custom_call.1} parent=5 // pred_check
        %p305 = pneg %p304
      $region46: #{tpu_custom_call.1} parent=5 // pred_check_branch
        %307 = sbr.rel (%p305) target = $region48
      $region47: #{tpu_custom_call.1} parent=5 // pred_region
        // Predicated region
        $region49: #{tpu_custom_call.1} parent=47 // pred_check
          %p308 = pneg %p39
        $region50: #{tpu_custom_call.1} parent=47 // pred_check_branch
          %310 = sbr.rel (%p308) target = $region52
        $region51: #{tpu_custom_call.1} parent=47 // pred_region
          %s311 = smul.u32 64, %s19
          %p312 = scmp.lt.s32.totalorder %s311, 127
          %s313 = scalar_select %p312, %s311, 127
          %s314 = smul.addr %s313, 8
          %s315 = scalar_lea.vmem %s0, %s314
          %s316 = smul.u32 64, %s19
        $region52: #{tpu_custom_call.1} parent=47 // pred_fallthru
          _
        // Predicated region
        $region53: #{tpu_custom_call.1} parent=47 // pred_check
          %p317 = pneg %p65
        $region54: #{tpu_custom_call.1} parent=47 // pred_check_branch
          %319 = sbr.rel (%p317) target = $region56
        $region55: #{tpu_custom_call.1} parent=47 // pred_region
          %s320 = smul.u32 2, %s19
          %p321 = scmp.lt.s32.totalorder %s320, 3
          %s322 = scalar_select %p321, %s320, 3
          %s323 = smul.addr %s322, 8
          %s324 = scalar_lea.vmem %s1, %s323
          %s325 = smul.u32 2, %s19
        $region56: #{tpu_custom_call.1} parent=47 // pred_fallthru
          _
      $region48: #{tpu_custom_call.1} parent=5 // pred_fallthru
        _
      %p326 = scmp.le.s32.totalorder 1, %s19
      %p327 = scmp.lt.s32.totalorder %s19, 3
      %p328 = pnand %p326, %p327
      %p329 = pneg %p328
      // Predicated region
      $region57: #{tpu_custom_call.1} parent=5 // pred_check
        _
      $region58: #{tpu_custom_call.1} parent=5 // pred_check_branch
        %331 = sbr.rel (%p328) target = $region60
      $region59: #{tpu_custom_call.1} parent=5 // pred_region
        %s332 = ssub.s32 %s19, 1
        %s333 = smul.u32 64, %s24
        %p334 = scmp.lt.s32.totalorder %s333, 127
        %s335 = scalar_select %p334, %s333, 127
        %s336 = smul.addr %s335, 8
        %s337 = scalar_lea.vmem %s0, %s336
        %p338 = pneg %p45
        %p339 = pneg %p42
        %s340 = smul.u32 2, %s24
        %p341 = scmp.lt.s32.totalorder %s340, 3
        %s342 = scalar_select %p341, %s340, 3
        %s343 = smul.addr %s342, 8
        %s344 = scalar_lea.vmem %s1, %s343
        %p345 = pneg %p71
        %p346 = pneg %p68
        %p347 = pneg %p92
        %p348 = pneg %p89
        %p349 = pneg %p113
        %p350 = pneg %p110
        %p351 = pneg %p134
        %p352 = pneg %p131
        %p353 = pneg %p155
        %p354 = pneg %p152
        %p355 = pneg %p176
        %p356 = pneg %p173
        %p357 = pneg %p197
        %p358 = pneg %p194
        %p359 = pneg %p218
        %p360 = pneg %p215
        %p361 = pneg %p239
        %p362 = pneg %p236
        %p363 = pneg %p265
        %p364 = pneg %p262
        %s365 = sand.u32 %s252, 1
        %s366 = scalar_lea.sflag [#allocation3], %s365
        %s367 = sand.u32 %s252, 1
        %s368 = smul.addr %s367, 16
        %s369 = scalar_lea.vmem [#allocation2], %s368
        %s370 = smul.u32 64, %s24
        %p371 = scmp.lt.s32.totalorder %s370, 127
        %s372 = scalar_select %p371, %s370, 127
        %s373 = smul.addr %s372, 8
        %s374 = scalar_lea.vmem %s0, %s373
        %s375 = smul.u32 64, %s24
        %s376 = smul.u32 2, %s24
        %p377 = scmp.lt.s32.totalorder %s376, 3
        %s378 = scalar_select %p377, %s376, 3
        %s379 = smul.addr %s378, 8
        %s380 = scalar_lea.vmem %s1, %s379
        %s381 = smul.u32 2, %s24
        %s382 = smul.u32 2, %s24
        %v384 = vld [vmem:[%s374] sm:$0xff]
        %v385 = vld [vmem:[%s374 + $0x8] sm:$0xff]
        %v386 = vld [vmem:[%s374 + $0x10] sm:$0xff]
        %v387 = vld [vmem:[%s374 + $0x18] sm:$0xff]
        %v388 = vld [vmem:[%s374 + $0x20] sm:$0xff]
        %v389 = vld [vmem:[%s374 + $0x28] sm:$0xff]
        %v390 = vld [vmem:[%s374 + $0x30] sm:$0xff]
        %v391 = vld [vmem:[%s374 + $0x38] sm:$0xff]
        %v392 = vld [vmem:[%s374 + $0x40] sm:$0xff]
        %v393 = vld [vmem:[%s374 + $0x48] sm:$0xff]
        %v394 = vld [vmem:[%s374 + $0x50] sm:$0xff]
        %v395 = vld [vmem:[%s374 + $0x58] sm:$0xff]
        %v396 = vld [vmem:[%s374 + $0x60] sm:$0xff]
        %v397 = vld [vmem:[%s374 + $0x68] sm:$0xff]
        %v398 = vld [vmem:[%s374 + $0x70] sm:$0xff]
        %v399 = vld [vmem:[%s374 + $0x78] sm:$0xff]
        %v400 = vld [vmem:[%s374 + $0x80] sm:$0xff]
        %v401 = vld [vmem:[%s374 + $0x88] sm:$0xff]
        %v402 = vld [vmem:[%s374 + $0x90] sm:$0xff]
        %v403 = vld [vmem:[%s374 + $0x98] sm:$0xff]
        %v404 = vld [vmem:[%s374 + $0xa0] sm:$0xff]
        %v405 = vld [vmem:[%s374 + $0xa8] sm:$0xff]
        %v406 = vld [vmem:[%s374 + $0xb0] sm:$0xff]
        %v407 = vld [vmem:[%s374 + $0xb8] sm:$0xff]
        %v408 = vld [vmem:[%s374 + $0xc0] sm:$0xff]
        %v409 = vld [vmem:[%s374 + $0xc8] sm:$0xff]
        %v410 = vld [vmem:[%s374 + $0xd0] sm:$0xff]
        %v411 = vld [vmem:[%s374 + $0xd8] sm:$0xff]
        %v412 = vld [vmem:[%s374 + $0xe0] sm:$0xff]
        %v413 = vld [vmem:[%s374 + $0xe8] sm:$0xff]
        %v414 = vld [vmem:[%s374 + $0xf0] sm:$0xff]
        %v415 = vld [vmem:[%s374 + $0xf8] sm:$0xff]
        %v416 = vld [vmem:[%s374 + $0x100] sm:$0xff]
        %v417 = vld [vmem:[%s374 + $0x108] sm:$0xff]
        %v418 = vld [vmem:[%s374 + $0x110] sm:$0xff]
        %v419 = vld [vmem:[%s374 + $0x118] sm:$0xff]
        %v420 = vld [vmem:[%s374 + $0x120] sm:$0xff]
        %v421 = vld [vmem:[%s374 + $0x128] sm:$0xff]
        %v422 = vld [vmem:[%s374 + $0x130] sm:$0xff]
        %v423 = vld [vmem:[%s374 + $0x138] sm:$0xff]
        %v424 = vld [vmem:[%s374 + $0x140] sm:$0xff]
        %v425 = vld [vmem:[%s374 + $0x148] sm:$0xff]
        %v426 = vld [vmem:[%s374 + $0x150] sm:$0xff]
        %v427 = vld [vmem:[%s374 + $0x158] sm:$0xff]
        %v428 = vld [vmem:[%s374 + $0x160] sm:$0xff]
        %v429 = vld [vmem:[%s374 + $0x168] sm:$0xff]
        %v430 = vld [vmem:[%s374 + $0x170] sm:$0xff]
        %v431 = vld [vmem:[%s374 + $0x178] sm:$0xff]
        %v432 = vld [vmem:[%s374 + $0x180] sm:$0xff]
        %v433 = vld [vmem:[%s374 + $0x188] sm:$0xff]
        %v434 = vld [vmem:[%s374 + $0x190] sm:$0xff]
        %v435 = vld [vmem:[%s374 + $0x198] sm:$0xff]
        %v436 = vld [vmem:[%s374 + $0x1a0] sm:$0xff]
        %v437 = vld [vmem:[%s374 + $0x1a8] sm:$0xff]
        %v438 = vld [vmem:[%s374 + $0x1b0] sm:$0xff]
        %v439 = vld [vmem:[%s374 + $0x1b8] sm:$0xff]
        %v440 = vld [vmem:[%s374 + $0x1c0] sm:$0xff]
        %v441 = vld [vmem:[%s374 + $0x1c8] sm:$0xff]
        %v442 = vld [vmem:[%s374 + $0x1d0] sm:$0xff]
        %v443 = vld [vmem:[%s374 + $0x1d8] sm:$0xff]
        %v444 = vld [vmem:[%s374 + $0x1e0] sm:$0xff]
        %v445 = vld [vmem:[%s374 + $0x1e8] sm:$0xff]
        %v446 = vld [vmem:[%s374 + $0x1f0] sm:$0xff]
        %v447 = vld [vmem:[%s374 + $0x1f8] sm:$0xff]
        %v448 = vld [vmem:[%s2] sm:$0x7]
        %450 = vset.pattern.permute.xlu0 0
        %451 = vperm.xlu0 %450, %v384
        %v452 = vpop.permute.xlu0 %451
        %455 = vset.pattern.permute.xlu0 0
        %456 = vperm.xlu0 %455, %v385
        %v457 = vpop.permute.xlu0 %456
        %460 = vset.pattern.permute.xlu0 0
        %461 = vperm.xlu0 %460, %v386
        %v462 = vpop.permute.xlu0 %461
        %465 = vset.pattern.permute.xlu0 0
        %466 = vperm.xlu0 %465, %v387
        %v467 = vpop.permute.xlu0 %466
        %470 = vset.pattern.permute.xlu0 0
        %471 = vperm.xlu0 %470, %v388
        %v472 = vpop.permute.xlu0 %471
        %475 = vset.pattern.permute.xlu0 0
        %476 = vperm.xlu0 %475, %v389
        %v477 = vpop.permute.xlu0 %476
        %480 = vset.pattern.permute.xlu0 0
        %481 = vperm.xlu0 %480, %v390
        %v482 = vpop.permute.xlu0 %481
        %485 = vset.pattern.permute.xlu0 0
        %486 = vperm.xlu0 %485, %v391
        %v487 = vpop.permute.xlu0 %486
        %490 = vset.pattern.permute.xlu0 0
        %491 = vperm.xlu0 %490, %v392
        %v492 = vpop.permute.xlu0 %491
        %495 = vset.pattern.permute.xlu0 0
        %496 = vperm.xlu0 %495, %v393
        %v497 = vpop.permute.xlu0 %496
        %500 = vset.pattern.permute.xlu0 0
        %501 = vperm.xlu0 %500, %v394
        %v502 = vpop.permute.xlu0 %501
        %505 = vset.pattern.permute.xlu0 0
        %506 = vperm.xlu0 %505, %v395
        %v507 = vpop.permute.xlu0 %506
        %510 = vset.pattern.permute.xlu0 0
        %511 = vperm.xlu0 %510, %v396
        %v512 = vpop.permute.xlu0 %511
        %515 = vset.pattern.permute.xlu0 0
        %516 = vperm.xlu0 %515, %v397
        %v517 = vpop.permute.xlu0 %516
        %520 = vset.pattern.permute.xlu0 0
        %521 = vperm.xlu0 %520, %v398
        %v522 = vpop.permute.xlu0 %521
        %525 = vset.pattern.permute.xlu0 0
        %526 = vperm.xlu0 %525, %v399
        %v527 = vpop.permute.xlu0 %526
        %530 = vset.pattern.permute.xlu0 0
        %531 = vperm.xlu0 %530, %v400
        %v532 = vpop.permute.xlu0 %531
        %535 = vset.pattern.permute.xlu0 0
        %536 = vperm.xlu0 %535, %v401
        %v537 = vpop.permute.xlu0 %536
        %540 = vset.pattern.permute.xlu0 0
        %541 = vperm.xlu0 %540, %v402
        %v542 = vpop.permute.xlu0 %541
        %545 = vset.pattern.permute.xlu0 0
        %546 = vperm.xlu0 %545, %v403
        %v547 = vpop.permute.xlu0 %546
        %550 = vset.pattern.permute.xlu0 0
        %551 = vperm.xlu0 %550, %v404
        %v552 = vpop.permute.xlu0 %551
        %555 = vset.pattern.permute.xlu0 0
        %556 = vperm.xlu0 %555, %v405
        %v557 = vpop.permute.xlu0 %556
        %560 = vset.pattern.permute.xlu0 0
        %561 = vperm.xlu0 %560, %v406
        %v562 = vpop.permute.xlu0 %561
        %565 = vset.pattern.permute.xlu0 0
        %566 = vperm.xlu0 %565, %v407
        %v567 = vpop.permute.xlu0 %566
        %570 = vset.pattern.permute.xlu0 0
        %571 = vperm.xlu0 %570, %v408
        %v572 = vpop.permute.xlu0 %571
        %575 = vset.pattern.permute.xlu0 0
        %576 = vperm.xlu0 %575, %v409
        %v577 = vpop.permute.xlu0 %576
        %580 = vset.pattern.permute.xlu0 0
        %581 = vperm.xlu0 %580, %v410
        %v582 = vpop.permute.xlu0 %581
        %585 = vset.pattern.permute.xlu0 0
        %586 = vperm.xlu0 %585, %v411
        %v587 = vpop.permute.xlu0 %586
        %590 = vset.pattern.permute.xlu0 0
        %591 = vperm.xlu0 %590, %v412
        %v592 = vpop.permute.xlu0 %591
        %595 = vset.pattern.permute.xlu0 0
        %596 = vperm.xlu0 %595, %v413
        %v597 = vpop.permute.xlu0 %596
        %600 = vset.pattern.permute.xlu0 0
        %601 = vperm.xlu0 %600, %v414
        %v602 = vpop.permute.xlu0 %601
        %605 = vset.pattern.permute.xlu0 0
        %606 = vperm.xlu0 %605, %v415
        %v607 = vpop.permute.xlu0 %606
        %610 = vset.pattern.permute.xlu0 0
        %611 = vperm.xlu0 %610, %v416
        %v612 = vpop.permute.xlu0 %611
        %615 = vset.pattern.permute.xlu0 0
        %616 = vperm.xlu0 %615, %v417
        %v617 = vpop.permute.xlu0 %616
        %620 = vset.pattern.permute.xlu0 0
        %621 = vperm.xlu0 %620, %v418
        %v622 = vpop.permute.xlu0 %621
        %625 = vset.pattern.permute.xlu0 0
        %626 = vperm.xlu0 %625, %v419
        %v627 = vpop.permute.xlu0 %626
        %630 = vset.pattern.permute.xlu0 0
        %631 = vperm.xlu0 %630, %v420
        %v632 = vpop.permute.xlu0 %631
        %635 = vset.pattern.permute.xlu0 0
        %636 = vperm.xlu0 %635, %v421
        %v637 = vpop.permute.xlu0 %636
        %640 = vset.pattern.permute.xlu0 0
        %641 = vperm.xlu0 %640, %v422
        %v642 = vpop.permute.xlu0 %641
        %645 = vset.pattern.permute.xlu0 0
        %646 = vperm.xlu0 %645, %v423
        %v647 = vpop.permute.xlu0 %646
        %650 = vset.pattern.permute.xlu0 0
        %651 = vperm.xlu0 %650, %v424
        %v652 = vpop.permute.xlu0 %651
        %655 = vset.pattern.permute.xlu0 0
        %656 = vperm.xlu0 %655, %v425
        %v657 = vpop.permute.xlu0 %656
        %660 = vset.pattern.permute.xlu0 0
        %661 = vperm.xlu0 %660, %v426
        %v662 = vpop.permute.xlu0 %661
        %665 = vset.pattern.permute.xlu0 0
        %666 = vperm.xlu0 %665, %v427
        %v667 = vpop.permute.xlu0 %666
        %670 = vset.pattern.permute.xlu0 0
        %671 = vperm.xlu0 %670, %v428
        %v672 = vpop.permute.xlu0 %671
        %675 = vset.pattern.permute.xlu0 0
        %676 = vperm.xlu0 %675, %v429
        %v677 = vpop.permute.xlu0 %676
        %680 = vset.pattern.permute.xlu0 0
        %681 = vperm.xlu0 %680, %v430
        %v682 = vpop.permute.xlu0 %681
        %685 = vset.pattern.permute.xlu0 0
        %686 = vperm.xlu0 %685, %v431
        %v687 = vpop.permute.xlu0 %686
        %690 = vset.pattern.permute.xlu0 0
        %691 = vperm.xlu0 %690, %v432
        %v692 = vpop.permute.xlu0 %691
        %695 = vset.pattern.permute.xlu0 0
        %696 = vperm.xlu0 %695, %v433
        %v697 = vpop.permute.xlu0 %696
        %700 = vset.pattern.permute.xlu0 0
        %701 = vperm.xlu0 %700, %v434
        %v702 = vpop.permute.xlu0 %701
        %705 = vset.pattern.permute.xlu0 0
        %706 = vperm.xlu0 %705, %v435
        %v707 = vpop.permute.xlu0 %706
        %710 = vset.pattern.permute.xlu0 0
        %711 = vperm.xlu0 %710, %v436
        %v712 = vpop.permute.xlu0 %711
        %715 = vset.pattern.permute.xlu0 0
        %716 = vperm.xlu0 %715, %v437
        %v717 = vpop.permute.xlu0 %716
        %720 = vset.pattern.permute.xlu0 0
        %721 = vperm.xlu0 %720, %v438
        %v722 = vpop.permute.xlu0 %721
        %725 = vset.pattern.permute.xlu0 0
        %726 = vperm.xlu0 %725, %v439
        %v727 = vpop.permute.xlu0 %726
        %730 = vset.pattern.permute.xlu0 0
        %731 = vperm.xlu0 %730, %v440
        %v732 = vpop.permute.xlu0 %731
        %735 = vset.pattern.permute.xlu0 0
        %736 = vperm.xlu0 %735, %v441
        %v737 = vpop.permute.xlu0 %736
        %740 = vset.pattern.permute.xlu0 0
        %741 = vperm.xlu0 %740, %v442
        %v742 = vpop.permute.xlu0 %741
        %745 = vset.pattern.permute.xlu0 0
        %746 = vperm.xlu0 %745, %v443
        %v747 = vpop.permute.xlu0 %746
        %750 = vset.pattern.permute.xlu0 0
        %751 = vperm.xlu0 %750, %v444
        %v752 = vpop.permute.xlu0 %751
        %755 = vset.pattern.permute.xlu0 0
        %756 = vperm.xlu0 %755, %v445
        %v757 = vpop.permute.xlu0 %756
        %760 = vset.pattern.permute.xlu0 0
        %761 = vperm.xlu0 %760, %v446
        %v762 = vpop.permute.xlu0 %761
        %765 = vset.pattern.permute.xlu0 0
        %766 = vperm.xlu0 %765, %v447
        %v767 = vpop.permute.xlu0 %766
        %v769 = vlaneseq
        %v770 = vshrl.u32 %v769, 7
        %v771 = vsub.s32 0, %v770
        %v772 = vrot.slane %v448, %v771
        %v773 = vmul.f32 %v452, %v772
        %v774 = vmul.f32 %v457, %v772
        %v775 = vmul.f32 %v462, %v772
        %v776 = vmul.f32 %v467, %v772
        %v777 = vmul.f32 %v472, %v772
        %v778 = vmul.f32 %v477, %v772
        %v779 = vmul.f32 %v482, %v772
        %v780 = vmul.f32 %v487, %v772
        %v781 = vmul.f32 %v492, %v772
        %v782 = vmul.f32 %v497, %v772
        %v783 = vmul.f32 %v502, %v772
        %v784 = vmul.f32 %v507, %v772
        %v785 = vmul.f32 %v512, %v772
        %v786 = vmul.f32 %v517, %v772
        %v787 = vmul.f32 %v522, %v772
        %v788 = vmul.f32 %v527, %v772
        %v789 = vmul.f32 %v532, %v772
        %v790 = vmul.f32 %v537, %v772
        %v791 = vmul.f32 %v542, %v772
        %v792 = vmul.f32 %v547, %v772
        %v793 = vmul.f32 %v552, %v772
        %v794 = vmul.f32 %v557, %v772
        %v795 = vmul.f32 %v562, %v772
        %v796 = vmul.f32 %v567, %v772
        %v797 = vmul.f32 %v572, %v772
        %v798 = vmul.f32 %v577, %v772
        %v799 = vmul.f32 %v582, %v772
        %v800 = vmul.f32 %v587, %v772
        %v801 = vmul.f32 %v592, %v772
        %v802 = vmul.f32 %v597, %v772
        %v803 = vmul.f32 %v602, %v772
        %v804 = vmul.f32 %v607, %v772
        %v805 = vmul.f32 %v612, %v772
        %v806 = vmul.f32 %v617, %v772
        %v807 = vmul.f32 %v622, %v772
        %v808 = vmul.f32 %v627, %v772
        %v809 = vmul.f32 %v632, %v772
        %v810 = vmul.f32 %v637, %v772
        %v811 = vmul.f32 %v642, %v772
        %v812 = vmul.f32 %v647, %v772
        %v813 = vmul.f32 %v652, %v772
        %v814 = vmul.f32 %v657, %v772
        %v815 = vmul.f32 %v662, %v772
        %v816 = vmul.f32 %v667, %v772
        %v817 = vmul.f32 %v672, %v772
        %v818 = vmul.f32 %v677, %v772
        %v819 = vmul.f32 %v682, %v772
        %v820 = vmul.f32 %v687, %v772
        %v821 = vmul.f32 %v692, %v772
        %v822 = vmul.f32 %v697, %v772
        %v823 = vmul.f32 %v702, %v772
        %v824 = vmul.f32 %v707, %v772
        %v825 = vmul.f32 %v712, %v772
        %v826 = vmul.f32 %v717, %v772
        %v827 = vmul.f32 %v722, %v772
        %v828 = vmul.f32 %v727, %v772
        %v829 = vmul.f32 %v732, %v772
        %v830 = vmul.f32 %v737, %v772
        %v831 = vmul.f32 %v742, %v772
        %v832 = vmul.f32 %v747, %v772
        %v833 = vmul.f32 %v752, %v772
        %v834 = vmul.f32 %v757, %v772
        %v835 = vmul.f32 %v762, %v772
        %v836 = vmul.f32 %v767, %v772
        %837 = vset.pattern.permute.xlu0 1
        %838 = vperm.xlu0 %837, %v384
        %v839 = vpop.permute.xlu0 %838
        %841 = vset.pattern.permute.xlu0 1
        %842 = vperm.xlu0 %841, %v385
        %v843 = vpop.permute.xlu0 %842
        %845 = vset.pattern.permute.xlu0 1
        %846 = vperm.xlu0 %845, %v386
        %v847 = vpop.permute.xlu0 %846
        %849 = vset.pattern.permute.xlu0 1
        %850 = vperm.xlu0 %849, %v387
        %v851 = vpop.permute.xlu0 %850
        %853 = vset.pattern.permute.xlu0 1
        %854 = vperm.xlu0 %853, %v388
        %v855 = vpop.permute.xlu0 %854
        %857 = vset.pattern.permute.xlu0 1
        %858 = vperm.xlu0 %857, %v389
        %v859 = vpop.permute.xlu0 %858
        %861 = vset.pattern.permute.xlu0 1
        %862 = vperm.xlu0 %861, %v390
        %v863 = vpop.permute.xlu0 %862
        %865 = vset.pattern.permute.xlu0 1
        %866 = vperm.xlu0 %865, %v391
        %v867 = vpop.permute.xlu0 %866
        %869 = vset.pattern.permute.xlu0 1
        %870 = vperm.xlu0 %869, %v392
        %v871 = vpop.permute.xlu0 %870
        %873 = vset.pattern.permute.xlu0 1
        %874 = vperm.xlu0 %873, %v393
        %v875 = vpop.permute.xlu0 %874
        %877 = vset.pattern.permute.xlu0 1
        %878 = vperm.xlu0 %877, %v394
        %v879 = vpop.permute.xlu0 %878
        %881 = vset.pattern.permute.xlu0 1
        %882 = vperm.xlu0 %881, %v395
        %v883 = vpop.permute.xlu0 %882
        %885 = vset.pattern.permute.xlu0 1
        %886 = vperm.xlu0 %885, %v396
        %v887 = vpop.permute.xlu0 %886
        %889 = vset.pattern.permute.xlu0 1
        %890 = vperm.xlu0 %889, %v397
        %v891 = vpop.permute.xlu0 %890
        %893 = vset.pattern.permute.xlu0 1
        %894 = vperm.xlu0 %893, %v398
        %v895 = vpop.permute.xlu0 %894
        %897 = vset.pattern.permute.xlu0 1
        %898 = vperm.xlu0 %897, %v399
        %v899 = vpop.permute.xlu0 %898
        %901 = vset.pattern.permute.xlu0 1
        %902 = vperm.xlu0 %901, %v400
        %v903 = vpop.permute.xlu0 %902
        %905 = vset.pattern.permute.xlu0 1
        %906 = vperm.xlu0 %905, %v401
        %v907 = vpop.permute.xlu0 %906
        %909 = vset.pattern.permute.xlu0 1
        %910 = vperm.xlu0 %909, %v402
        %v911 = vpop.permute.xlu0 %910
        %913 = vset.pattern.permute.xlu0 1
        %914 = vperm.xlu0 %913, %v403
        %v915 = vpop.permute.xlu0 %914
        %917 = vset.pattern.permute.xlu0 1
        %918 = vperm.xlu0 %917, %v404
        %v919 = vpop.permute.xlu0 %918
        %921 = vset.pattern.permute.xlu0 1
        %922 = vperm.xlu0 %921, %v405
        %v923 = vpop.permute.xlu0 %922
        %925 = vset.pattern.permute.xlu0 1
        %926 = vperm.xlu0 %925, %v406
        %v927 = vpop.permute.xlu0 %926
        %929 = vset.pattern.permute.xlu0 1
        %930 = vperm.xlu0 %929, %v407
        %v931 = vpop.permute.xlu0 %930
        %933 = vset.pattern.permute.xlu0 1
        %934 = vperm.xlu0 %933, %v408
        %v935 = vpop.permute.xlu0 %934
        %937 = vset.pattern.permute.xlu0 1
        %938 = vperm.xlu0 %937, %v409
        %v939 = vpop.permute.xlu0 %938
        %941 = vset.pattern.permute.xlu0 1
        %942 = vperm.xlu0 %941, %v410
        %v943 = vpop.permute.xlu0 %942
        %945 = vset.pattern.permute.xlu0 1
        %946 = vperm.xlu0 %945, %v411
        %v947 = vpop.permute.xlu0 %946
        %949 = vset.pattern.permute.xlu0 1
        %950 = vperm.xlu0 %949, %v412
        %v951 = vpop.permute.xlu0 %950
        %953 = vset.pattern.permute.xlu0 1
        %954 = vperm.xlu0 %953, %v413
        %v955 = vpop.permute.xlu0 %954
        %957 = vset.pattern.permute.xlu0 1
        %958 = vperm.xlu0 %957, %v414
        %v959 = vpop.permute.xlu0 %958
        %961 = vset.pattern.permute.xlu0 1
        %962 = vperm.xlu0 %961, %v415
        %v963 = vpop.permute.xlu0 %962
        %965 = vset.pattern.permute.xlu0 1
        %966 = vperm.xlu0 %965, %v416
        %v967 = vpop.permute.xlu0 %966
        %969 = vset.pattern.permute.xlu0 1
        %970 = vperm.xlu0 %969, %v417
        %v971 = vpop.permute.xlu0 %970
        %973 = vset.pattern.permute.xlu0 1
        %974 = vperm.xlu0 %973, %v418
        %v975 = vpop.permute.xlu0 %974
        %977 = vset.pattern.permute.xlu0 1
        %978 = vperm.xlu0 %977, %v419
        %v979 = vpop.permute.xlu0 %978
        %981 = vset.pattern.permute.xlu0 1
        %982 = vperm.xlu0 %981, %v420
        %v983 = vpop.permute.xlu0 %982
        %985 = vset.pattern.permute.xlu0 1
        %986 = vperm.xlu0 %985, %v421
        %v987 = vpop.permute.xlu0 %986
        %989 = vset.pattern.permute.xlu0 1
        %990 = vperm.xlu0 %989, %v422
        %v991 = vpop.permute.xlu0 %990
        %993 = vset.pattern.permute.xlu0 1
        %994 = vperm.xlu0 %993, %v423
        %v995 = vpop.permute.xlu0 %994
        %997 = vset.pattern.permute.xlu0 1
        %998 = vperm.xlu0 %997, %v424
        %v999 = vpop.permute.xlu0 %998
        %1001 = vset.pattern.permute.xlu0 1
        %1002 = vperm.xlu0 %1001, %v425
        %v1003 = vpop.permute.xlu0 %1002
        %1005 = vset.pattern.permute.xlu0 1
        %1006 = vperm.xlu0 %1005, %v426
        %v1007 = vpop.permute.xlu0 %1006
        %1009 = vset.pattern.permute.xlu0 1
        %1010 = vperm.xlu0 %1009, %v427
        %v1011 = vpop.permute.xlu0 %1010
        %1013 = vset.pattern.permute.xlu0 1
        %1014 = vperm.xlu0 %1013, %v428
        %v1015 = vpop.permute.xlu0 %1014
        %1017 = vset.pattern.permute.xlu0 1
        %1018 = vperm.xlu0 %1017, %v429
        %v1019 = vpop.permute.xlu0 %1018
        %1021 = vset.pattern.permute.xlu0 1
        %1022 = vperm.xlu0 %1021, %v430
        %v1023 = vpop.permute.xlu0 %1022
        %1025 = vset.pattern.permute.xlu0 1
        %1026 = vperm.xlu0 %1025, %v431
        %v1027 = vpop.permute.xlu0 %1026
        %1029 = vset.pattern.permute.xlu0 1
        %1030 = vperm.xlu0 %1029, %v432
        %v1031 = vpop.permute.xlu0 %1030
        %1033 = vset.pattern.permute.xlu0 1
        %1034 = vperm.xlu0 %1033, %v433
        %v1035 = vpop.permute.xlu0 %1034
        %1037 = vset.pattern.permute.xlu0 1
        %1038 = vperm.xlu0 %1037, %v434
        %v1039 = vpop.permute.xlu0 %1038
        %1041 = vset.pattern.permute.xlu0 1
        %1042 = vperm.xlu0 %1041, %v435
        %v1043 = vpop.permute.xlu0 %1042
        %1045 = vset.pattern.permute.xlu0 1
        %1046 = vperm.xlu0 %1045, %v436
        %v1047 = vpop.permute.xlu0 %1046
        %1049 = vset.pattern.permute.xlu0 1
        %1050 = vperm.xlu0 %1049, %v437
        %v1051 = vpop.permute.xlu0 %1050
        %1053 = vset.pattern.permute.xlu0 1
        %1054 = vperm.xlu0 %1053, %v438
        %v1055 = vpop.permute.xlu0 %1054
        %1057 = vset.pattern.permute.xlu0 1
        %1058 = vperm.xlu0 %1057, %v439
        %v1059 = vpop.permute.xlu0 %1058
        %1061 = vset.pattern.permute.xlu0 1
        %1062 = vperm.xlu0 %1061, %v440
        %v1063 = vpop.permute.xlu0 %1062
        %1065 = vset.pattern.permute.xlu0 1
        %1066 = vperm.xlu0 %1065, %v441
        %v1067 = vpop.permute.xlu0 %1066
        %1069 = vset.pattern.permute.xlu0 1
        %1070 = vperm.xlu0 %1069, %v442
        %v1071 = vpop.permute.xlu0 %1070
        %1073 = vset.pattern.permute.xlu0 1
        %1074 = vperm.xlu0 %1073, %v443
        %v1075 = vpop.permute.xlu0 %1074
        %1077 = vset.pattern.permute.xlu0 1
        %1078 = vperm.xlu0 %1077, %v444
        %v1079 = vpop.permute.xlu0 %1078
        %1081 = vset.pattern.permute.xlu0 1
        %1082 = vperm.xlu0 %1081, %v445
        %v1083 = vpop.permute.xlu0 %1082
        %1085 = vset.pattern.permute.xlu0 1
        %1086 = vperm.xlu0 %1085, %v446
        %v1087 = vpop.permute.xlu0 %1086
        %1089 = vset.pattern.permute.xlu0 1
        %1090 = vperm.xlu0 %1089, %v447
        %v1091 = vpop.permute.xlu0 %1090
        %v1093 = vlaneseq
        %v1094 = vshrl.u32 %v1093, 7
        %v1095 = vsub.s32 1, %v1094
        %v1096 = vrot.slane %v448, %v1095
        %v1097 = vmul.f32 %v839, %v1096
        %v1098 = vmul.f32 %v843, %v1096
        %v1099 = vmul.f32 %v847, %v1096
        %v1100 = vmul.f32 %v851, %v1096
        %v1101 = vmul.f32 %v855, %v1096
        %v1102 = vmul.f32 %v859, %v1096
        %v1103 = vmul.f32 %v863, %v1096
        %v1104 = vmul.f32 %v867, %v1096
        %v1105 = vmul.f32 %v871, %v1096
        %v1106 = vmul.f32 %v875, %v1096
        %v1107 = vmul.f32 %v879, %v1096
        %v1108 = vmul.f32 %v883, %v1096
        %v1109 = vmul.f32 %v887, %v1096
        %v1110 = vmul.f32 %v891, %v1096
        %v1111 = vmul.f32 %v895, %v1096
        %v1112 = vmul.f32 %v899, %v1096
        %v1113 = vmul.f32 %v903, %v1096
        %v1114 = vmul.f32 %v907, %v1096
        %v1115 = vmul.f32 %v911, %v1096
        %v1116 = vmul.f32 %v915, %v1096
        %v1117 = vmul.f32 %v919, %v1096
        %v1118 = vmul.f32 %v923, %v1096
        %v1119 = vmul.f32 %v927, %v1096
        %v1120 = vmul.f32 %v931, %v1096
        %v1121 = vmul.f32 %v935, %v1096
        %v1122 = vmul.f32 %v939, %v1096
        %v1123 = vmul.f32 %v943, %v1096
        %v1124 = vmul.f32 %v947, %v1096
        %v1125 = vmul.f32 %v951, %v1096
        %v1126 = vmul.f32 %v955, %v1096
        %v1127 = vmul.f32 %v959, %v1096
        %v1128 = vmul.f32 %v963, %v1096
        %v1129 = vmul.f32 %v967, %v1096
        %v1130 = vmul.f32 %v971, %v1096
        %v1131 = vmul.f32 %v975, %v1096
        %v1132 = vmul.f32 %v979, %v1096
        %v1133 = vmul.f32 %v983, %v1096
        %v1134 = vmul.f32 %v987, %v1096
        %v1135 = vmul.f32 %v991, %v1096
        %v1136 = vmul.f32 %v995, %v1096
        %v1137 = vmul.f32 %v999, %v1096
        %v1138 = vmul.f32 %v1003, %v1096
        %v1139 = vmul.f32 %v1007, %v1096
        %v1140 = vmul.f32 %v1011, %v1096
        %v1141 = vmul.f32 %v1015, %v1096
        %v1142 = vmul.f32 %v1019, %v1096
        %v1143 = vmul.f32 %v1023, %v1096
        %v1144 = vmul.f32 %v1027, %v1096
        %v1145 = vmul.f32 %v1031, %v1096
        %v1146 = vmul.f32 %v1035, %v1096
        %v1147 = vmul.f32 %v1039, %v1096
        %v1148 = vmul.f32 %v1043, %v1096
        %v1149 = vmul.f32 %v1047, %v1096
        %v1150 = vmul.f32 %v1051, %v1096
        %v1151 = vmul.f32 %v1055, %v1096
        %v1152 = vmul.f32 %v1059, %v1096
        %v1153 = vmul.f32 %v1063, %v1096
        %v1154 = vmul.f32 %v1067, %v1096
        %v1155 = vmul.f32 %v1071, %v1096
        %v1156 = vmul.f32 %v1075, %v1096
        %v1157 = vmul.f32 %v1079, %v1096
        %v1158 = vmul.f32 %v1083, %v1096
        %v1159 = vmul.f32 %v1087, %v1096
        %v1160 = vmul.f32 %v1091, %v1096
        %v1161 = vadd.f32 %v773, %v1097
        %v1162 = vadd.f32 %v774, %v1098
        %v1163 = vadd.f32 %v775, %v1099
        %v1164 = vadd.f32 %v776, %v1100
        %v1165 = vadd.f32 %v777, %v1101
        %v1166 = vadd.f32 %v778, %v1102
        %v1167 = vadd.f32 %v779, %v1103
        %v1168 = vadd.f32 %v780, %v1104
        %v1169 = vadd.f32 %v781, %v1105
        %v1170 = vadd.f32 %v782, %v1106
        %v1171 = vadd.f32 %v783, %v1107
        %v1172 = vadd.f32 %v784, %v1108
        %v1173 = vadd.f32 %v785, %v1109
        %v1174 = vadd.f32 %v786, %v1110
        %v1175 = vadd.f32 %v787, %v1111
        %v1176 = vadd.f32 %v788, %v1112
        %v1177 = vadd.f32 %v789, %v1113
        %v1178 = vadd.f32 %v790, %v1114
        %v1179 = vadd.f32 %v791, %v1115
        %v1180 = vadd.f32 %v792, %v1116
        %v1181 = vadd.f32 %v793, %v1117
        %v1182 = vadd.f32 %v794, %v1118
        %v1183 = vadd.f32 %v795, %v1119
        %v1184 = vadd.f32 %v796, %v1120
        %v1185 = vadd.f32 %v797, %v1121
        %v1186 = vadd.f32 %v798, %v1122
        %v1187 = vadd.f32 %v799, %v1123
        %v1188 = vadd.f32 %v800, %v1124
        %v1189 = vadd.f32 %v801, %v1125
        %v1190 = vadd.f32 %v802, %v1126
        %v1191 = vadd.f32 %v803, %v1127
        %v1192 = vadd.f32 %v804, %v1128
        %v1193 = vadd.f32 %v805, %v1129
        %v1194 = vadd.f32 %v806, %v1130
        %v1195 = vadd.f32 %v807, %v1131
        %v1196 = vadd.f32 %v808, %v1132
        %v1197 = vadd.f32 %v809, %v1133
        %v1198 = vadd.f32 %v810, %v1134
        %v1199 = vadd.f32 %v811, %v1135
        %v1200 = vadd.f32 %v812, %v1136
        %v1201 = vadd.f32 %v813, %v1137
        %v1202 = vadd.f32 %v814, %v1138
        %v1203 = vadd.f32 %v815, %v1139
        %v1204 = vadd.f32 %v816, %v1140
        %v1205 = vadd.f32 %v817, %v1141
        %v1206 = vadd.f32 %v818, %v1142
        %v1207 = vadd.f32 %v819, %v1143
        %v1208 = vadd.f32 %v820, %v1144
        %v1209 = vadd.f32 %v821, %v1145
        %v1210 = vadd.f32 %v822, %v1146
        %v1211 = vadd.f32 %v823, %v1147
        %v1212 = vadd.f32 %v824, %v1148
        %v1213 = vadd.f32 %v825, %v1149
        %v1214 = vadd.f32 %v826, %v1150
        %v1215 = vadd.f32 %v827, %v1151
        %v1216 = vadd.f32 %v828, %v1152
        %v1217 = vadd.f32 %v829, %v1153
        %v1218 = vadd.f32 %v830, %v1154
        %v1219 = vadd.f32 %v831, %v1155
        %v1220 = vadd.f32 %v832, %v1156
        %v1221 = vadd.f32 %v833, %v1157
        %v1222 = vadd.f32 %v834, %v1158
        %v1223 = vadd.f32 %v835, %v1159
        %v1224 = vadd.f32 %v836, %v1160
        %1225 = vset.pattern.permute.xlu0 2
        %1226 = vperm.xlu0 %1225, %v384
        %v1227 = vpop.permute.xlu0 %1226
        %1229 = vset.pattern.permute.xlu0 2
        %1230 = vperm.xlu0 %1229, %v385
        %v1231 = vpop.permute.xlu0 %1230
        %1233 = vset.pattern.permute.xlu0 2
        %1234 = vperm.xlu0 %1233, %v386
        %v1235 = vpop.permute.xlu0 %1234
        %1237 = vset.pattern.permute.xlu0 2
        %1238 = vperm.xlu0 %1237, %v387
        %v1239 = vpop.permute.xlu0 %1238
        %1241 = vset.pattern.permute.xlu0 2
        %1242 = vperm.xlu0 %1241, %v388
        %v1243 = vpop.permute.xlu0 %1242
        %1245 = vset.pattern.permute.xlu0 2
        %1246 = vperm.xlu0 %1245, %v389
        %v1247 = vpop.permute.xlu0 %1246
        %1249 = vset.pattern.permute.xlu0 2
        %1250 = vperm.xlu0 %1249, %v390
        %v1251 = vpop.permute.xlu0 %1250
        %1253 = vset.pattern.permute.xlu0 2
        %1254 = vperm.xlu0 %1253, %v391
        %v1255 = vpop.permute.xlu0 %1254
        %1257 = vset.pattern.permute.xlu0 2
        %1258 = vperm.xlu0 %1257, %v392
        %v1259 = vpop.permute.xlu0 %1258
        %1261 = vset.pattern.permute.xlu0 2
        %1262 = vperm.xlu0 %1261, %v393
        %v1263 = vpop.permute.xlu0 %1262
        %1265 = vset.pattern.permute.xlu0 2
        %1266 = vperm.xlu0 %1265, %v394
        %v1267 = vpop.permute.xlu0 %1266
        %1269 = vset.pattern.permute.xlu0 2
        %1270 = vperm.xlu0 %1269, %v395
        %v1271 = vpop.permute.xlu0 %1270
        %1273 = vset.pattern.permute.xlu0 2
        %1274 = vperm.xlu0 %1273, %v396
        %v1275 = vpop.permute.xlu0 %1274
        %1277 = vset.pattern.permute.xlu0 2
        %1278 = vperm.xlu0 %1277, %v397
        %v1279 = vpop.permute.xlu0 %1278
        %1281 = vset.pattern.permute.xlu0 2
        %1282 = vperm.xlu0 %1281, %v398
        %v1283 = vpop.permute.xlu0 %1282
        %1285 = vset.pattern.permute.xlu0 2
        %1286 = vperm.xlu0 %1285, %v399
        %v1287 = vpop.permute.xlu0 %1286
        %1289 = vset.pattern.permute.xlu0 2
        %1290 = vperm.xlu0 %1289, %v400
        %v1291 = vpop.permute.xlu0 %1290
        %1293 = vset.pattern.permute.xlu0 2
        %1294 = vperm.xlu0 %1293, %v401
        %v1295 = vpop.permute.xlu0 %1294
        %1297 = vset.pattern.permute.xlu0 2
        %1298 = vperm.xlu0 %1297, %v402
        %v1299 = vpop.permute.xlu0 %1298
        %1301 = vset.pattern.permute.xlu0 2
        %1302 = vperm.xlu0 %1301, %v403
        %v1303 = vpop.permute.xlu0 %1302
        %1305 = vset.pattern.permute.xlu0 2
        %1306 = vperm.xlu0 %1305, %v404
        %v1307 = vpop.permute.xlu0 %1306
        %1309 = vset.pattern.permute.xlu0 2
        %1310 = vperm.xlu0 %1309, %v405
        %v1311 = vpop.permute.xlu0 %1310
        %1313 = vset.pattern.permute.xlu0 2
        %1314 = vperm.xlu0 %1313, %v406
        %v1315 = vpop.permute.xlu0 %1314
        %1317 = vset.pattern.permute.xlu0 2
        %1318 = vperm.xlu0 %1317, %v407
        %v1319 = vpop.permute.xlu0 %1318
        %1321 = vset.pattern.permute.xlu0 2
        %1322 = vperm.xlu0 %1321, %v408
        %v1323 = vpop.permute.xlu0 %1322
        %1325 = vset.pattern.permute.xlu0 2
        %1326 = vperm.xlu0 %1325, %v409
        %v1327 = vpop.permute.xlu0 %1326
        %1329 = vset.pattern.permute.xlu0 2
        %1330 = vperm.xlu0 %1329, %v410
        %v1331 = vpop.permute.xlu0 %1330
        %1333 = vset.pattern.permute.xlu0 2
        %1334 = vperm.xlu0 %1333, %v411
        %v1335 = vpop.permute.xlu0 %1334
        %1337 = vset.pattern.permute.xlu0 2
        %1338 = vperm.xlu0 %1337, %v412
        %v1339 = vpop.permute.xlu0 %1338
        %1341 = vset.pattern.permute.xlu0 2
        %1342 = vperm.xlu0 %1341, %v413
        %v1343 = vpop.permute.xlu0 %1342
        %1345 = vset.pattern.permute.xlu0 2
        %1346 = vperm.xlu0 %1345, %v414
        %v1347 = vpop.permute.xlu0 %1346
        %1349 = vset.pattern.permute.xlu0 2
        %1350 = vperm.xlu0 %1349, %v415
        %v1351 = vpop.permute.xlu0 %1350
        %1353 = vset.pattern.permute.xlu0 2
        %1354 = vperm.xlu0 %1353, %v416
        %v1355 = vpop.permute.xlu0 %1354
        %1357 = vset.pattern.permute.xlu0 2
        %1358 = vperm.xlu0 %1357, %v417
        %v1359 = vpop.permute.xlu0 %1358
        %1361 = vset.pattern.permute.xlu0 2
        %1362 = vperm.xlu0 %1361, %v418
        %v1363 = vpop.permute.xlu0 %1362
        %1365 = vset.pattern.permute.xlu0 2
        %1366 = vperm.xlu0 %1365, %v419
        %v1367 = vpop.permute.xlu0 %1366
        %1369 = vset.pattern.permute.xlu0 2
        %1370 = vperm.xlu0 %1369, %v420
        %v1371 = vpop.permute.xlu0 %1370
        %1373 = vset.pattern.permute.xlu0 2
        %1374 = vperm.xlu0 %1373, %v421
        %v1375 = vpop.permute.xlu0 %1374
        %1377 = vset.pattern.permute.xlu0 2
        %1378 = vperm.xlu0 %1377, %v422
        %v1379 = vpop.permute.xlu0 %1378
        %1381 = vset.pattern.permute.xlu0 2
        %1382 = vperm.xlu0 %1381, %v423
        %v1383 = vpop.permute.xlu0 %1382
        %1385 = vset.pattern.permute.xlu0 2
        %1386 = vperm.xlu0 %1385, %v424
        %v1387 = vpop.permute.xlu0 %1386
        %1389 = vset.pattern.permute.xlu0 2
        %1390 = vperm.xlu0 %1389, %v425
        %v1391 = vpop.permute.xlu0 %1390
        %1393 = vset.pattern.permute.xlu0 2
        %1394 = vperm.xlu0 %1393, %v426
        %v1395 = vpop.permute.xlu0 %1394
        %1397 = vset.pattern.permute.xlu0 2
        %1398 = vperm.xlu0 %1397, %v427
        %v1399 = vpop.permute.xlu0 %1398
        %1401 = vset.pattern.permute.xlu0 2
        %1402 = vperm.xlu0 %1401, %v428
        %v1403 = vpop.permute.xlu0 %1402
        %1405 = vset.pattern.permute.xlu0 2
        %1406 = vperm.xlu0 %1405, %v429
        %v1407 = vpop.permute.xlu0 %1406
        %1409 = vset.pattern.permute.xlu0 2
        %1410 = vperm.xlu0 %1409, %v430
        %v1411 = vpop.permute.xlu0 %1410
        %1413 = vset.pattern.permute.xlu0 2
        %1414 = vperm.xlu0 %1413, %v431
        %v1415 = vpop.permute.xlu0 %1414
        %1417 = vset.pattern.permute.xlu0 2
        %1418 = vperm.xlu0 %1417, %v432
        %v1419 = vpop.permute.xlu0 %1418
        %1421 = vset.pattern.permute.xlu0 2
        %1422 = vperm.xlu0 %1421, %v433
        %v1423 = vpop.permute.xlu0 %1422
        %1425 = vset.pattern.permute.xlu0 2
        %1426 = vperm.xlu0 %1425, %v434
        %v1427 = vpop.permute.xlu0 %1426
        %1429 = vset.pattern.permute.xlu0 2
        %1430 = vperm.xlu0 %1429, %v435
        %v1431 = vpop.permute.xlu0 %1430
        %1433 = vset.pattern.permute.xlu0 2
        %1434 = vperm.xlu0 %1433, %v436
        %v1435 = vpop.permute.xlu0 %1434
        %1437 = vset.pattern.permute.xlu0 2
        %1438 = vperm.xlu0 %1437, %v437
        %v1439 = vpop.permute.xlu0 %1438
        %1441 = vset.pattern.permute.xlu0 2
        %1442 = vperm.xlu0 %1441, %v438
        %v1443 = vpop.permute.xlu0 %1442
        %1445 = vset.pattern.permute.xlu0 2
        %1446 = vperm.xlu0 %1445, %v439
        %v1447 = vpop.permute.xlu0 %1446
        %1449 = vset.pattern.permute.xlu0 2
        %1450 = vperm.xlu0 %1449, %v440
        %v1451 = vpop.permute.xlu0 %1450
        %1453 = vset.pattern.permute.xlu0 2
        %1454 = vperm.xlu0 %1453, %v441
        %v1455 = vpop.permute.xlu0 %1454
        %1457 = vset.pattern.permute.xlu0 2
        %1458 = vperm.xlu0 %1457, %v442
        %v1459 = vpop.permute.xlu0 %1458
        %1461 = vset.pattern.permute.xlu0 2
        %1462 = vperm.xlu0 %1461, %v443
        %v1463 = vpop.permute.xlu0 %1462
        %1465 = vset.pattern.permute.xlu0 2
        %1466 = vperm.xlu0 %1465, %v444
        %v1467 = vpop.permute.xlu0 %1466
        %1469 = vset.pattern.permute.xlu0 2
        %1470 = vperm.xlu0 %1469, %v445
        %v1471 = vpop.permute.xlu0 %1470
        %1473 = vset.pattern.permute.xlu0 2
        %1474 = vperm.xlu0 %1473, %v446
        %v1475 = vpop.permute.xlu0 %1474
        %1477 = vset.pattern.permute.xlu0 2
        %1478 = vperm.xlu0 %1477, %v447
        %v1479 = vpop.permute.xlu0 %1478
        %v1481 = vlaneseq
        %v1482 = vshrl.u32 %v1481, 7
        %v1483 = vsub.s32 2, %v1482
        %v1484 = vrot.slane %v448, %v1483
        %v1485 = vmul.f32 %v1227, %v1484
        %v1486 = vmul.f32 %v1231, %v1484
        %v1487 = vmul.f32 %v1235, %v1484
        %v1488 = vmul.f32 %v1239, %v1484
        %v1489 = vmul.f32 %v1243, %v1484
        %v1490 = vmul.f32 %v1247, %v1484
        %v1491 = vmul.f32 %v1251, %v1484
        %v1492 = vmul.f32 %v1255, %v1484
        %v1493 = vmul.f32 %v1259, %v1484
        %v1494 = vmul.f32 %v1263, %v1484
        %v1495 = vmul.f32 %v1267, %v1484
        %v1496 = vmul.f32 %v1271, %v1484
        %v1497 = vmul.f32 %v1275, %v1484
        %v1498 = vmul.f32 %v1279, %v1484
        %v1499 = vmul.f32 %v1283, %v1484
        %v1500 = vmul.f32 %v1287, %v1484
        %v1501 = vmul.f32 %v1291, %v1484
        %v1502 = vmul.f32 %v1295, %v1484
        %v1503 = vmul.f32 %v1299, %v1484
        %v1504 = vmul.f32 %v1303, %v1484
        %v1505 = vmul.f32 %v1307, %v1484
        %v1506 = vmul.f32 %v1311, %v1484
        %v1507 = vmul.f32 %v1315, %v1484
        %v1508 = vmul.f32 %v1319, %v1484
        %v1509 = vmul.f32 %v1323, %v1484
        %v1510 = vmul.f32 %v1327, %v1484
        %v1511 = vmul.f32 %v1331, %v1484
        %v1512 = vmul.f32 %v1335, %v1484
        %v1513 = vmul.f32 %v1339, %v1484
        %v1514 = vmul.f32 %v1343, %v1484
        %v1515 = vmul.f32 %v1347, %v1484
        %v1516 = vmul.f32 %v1351, %v1484
        %v1517 = vmul.f32 %v1355, %v1484
        %v1518 = vmul.f32 %v1359, %v1484
        %v1519 = vmul.f32 %v1363, %v1484
        %v1520 = vmul.f32 %v1367, %v1484
        %v1521 = vmul.f32 %v1371, %v1484
        %v1522 = vmul.f32 %v1375, %v1484
        %v1523 = vmul.f32 %v1379, %v1484
        %v1524 = vmul.f32 %v1383, %v1484
        %v1525 = vmul.f32 %v1387, %v1484
        %v1526 = vmul.f32 %v1391, %v1484
        %v1527 = vmul.f32 %v1395, %v1484
        %v1528 = vmul.f32 %v1399, %v1484
        %v1529 = vmul.f32 %v1403, %v1484
        %v1530 = vmul.f32 %v1407, %v1484
        %v1531 = vmul.f32 %v1411, %v1484
        %v1532 = vmul.f32 %v1415, %v1484
        %v1533 = vmul.f32 %v1419, %v1484
        %v1534 = vmul.f32 %v1423, %v1484
        %v1535 = vmul.f32 %v1427, %v1484
        %v1536 = vmul.f32 %v1431, %v1484
        %v1537 = vmul.f32 %v1435, %v1484
        %v1538 = vmul.f32 %v1439, %v1484
        %v1539 = vmul.f32 %v1443, %v1484
        %v1540 = vmul.f32 %v1447, %v1484
        %v1541 = vmul.f32 %v1451, %v1484
        %v1542 = vmul.f32 %v1455, %v1484
        %v1543 = vmul.f32 %v1459, %v1484
        %v1544 = vmul.f32 %v1463, %v1484
        %v1545 = vmul.f32 %v1467, %v1484
        %v1546 = vmul.f32 %v1471, %v1484
        %v1547 = vmul.f32 %v1475, %v1484
        %v1548 = vmul.f32 %v1479, %v1484
        %v1549 = vadd.f32 %v1161, %v1485
        %v1550 = vadd.f32 %v1162, %v1486
        %v1551 = vadd.f32 %v1163, %v1487
        %v1552 = vadd.f32 %v1164, %v1488
        %v1553 = vadd.f32 %v1165, %v1489
        %v1554 = vadd.f32 %v1166, %v1490
        %v1555 = vadd.f32 %v1167, %v1491
        %v1556 = vadd.f32 %v1168, %v1492
        %v1557 = vadd.f32 %v1169, %v1493
        %v1558 = vadd.f32 %v1170, %v1494
        %v1559 = vadd.f32 %v1171, %v1495
        %v1560 = vadd.f32 %v1172, %v1496
        %v1561 = vadd.f32 %v1173, %v1497
        %v1562 = vadd.f32 %v1174, %v1498
        %v1563 = vadd.f32 %v1175, %v1499
        %v1564 = vadd.f32 %v1176, %v1500
        %v1565 = vadd.f32 %v1177, %v1501
        %v1566 = vadd.f32 %v1178, %v1502
        %v1567 = vadd.f32 %v1179, %v1503
        %v1568 = vadd.f32 %v1180, %v1504
        %v1569 = vadd.f32 %v1181, %v1505
        %v1570 = vadd.f32 %v1182, %v1506
        %v1571 = vadd.f32 %v1183, %v1507
        %v1572 = vadd.f32 %v1184, %v1508
        %v1573 = vadd.f32 %v1185, %v1509
        %v1574 = vadd.f32 %v1186, %v1510
        %v1575 = vadd.f32 %v1187, %v1511
        %v1576 = vadd.f32 %v1188, %v1512
        %v1577 = vadd.f32 %v1189, %v1513
        %v1578 = vadd.f32 %v1190, %v1514
        %v1579 = vadd.f32 %v1191, %v1515
        %v1580 = vadd.f32 %v1192, %v1516
        %v1581 = vadd.f32 %v1193, %v1517
        %v1582 = vadd.f32 %v1194, %v1518
        %v1583 = vadd.f32 %v1195, %v1519
        %v1584 = vadd.f32 %v1196, %v1520
        %v1585 = vadd.f32 %v1197, %v1521
        %v1586 = vadd.f32 %v1198, %v1522
        %v1587 = vadd.f32 %v1199, %v1523
        %v1588 = vadd.f32 %v1200, %v1524
        %v1589 = vadd.f32 %v1201, %v1525
        %v1590 = vadd.f32 %v1202, %v1526
        %v1591 = vadd.f32 %v1203, %v1527
        %v1592 = vadd.f32 %v1204, %v1528
        %v1593 = vadd.f32 %v1205, %v1529
        %v1594 = vadd.f32 %v1206, %v1530
        %v1595 = vadd.f32 %v1207, %v1531
        %v1596 = vadd.f32 %v1208, %v1532
        %v1597 = vadd.f32 %v1209, %v1533
        %v1598 = vadd.f32 %v1210, %v1534
        %v1599 = vadd.f32 %v1211, %v1535
        %v1600 = vadd.f32 %v1212, %v1536
        %v1601 = vadd.f32 %v1213, %v1537
        %v1602 = vadd.f32 %v1214, %v1538
        %v1603 = vadd.f32 %v1215, %v1539
        %v1604 = vadd.f32 %v1216, %v1540
        %v1605 = vadd.f32 %v1217, %v1541
        %v1606 = vadd.f32 %v1218, %v1542
        %v1607 = vadd.f32 %v1219, %v1543
        %v1608 = vadd.f32 %v1220, %v1544
        %v1609 = vadd.f32 %v1221, %v1545
        %v1610 = vadd.f32 %v1222, %v1546
        %v1611 = vadd.f32 %v1223, %v1547
        %v1612 = vadd.f32 %v1224, %v1548
        %v1613 = vld [vmem:[%s3] sm:$0x1]
        %v1615 = vlaneseq
        %v1616 = vshrl.u32 %v1615, 7
        %v1617 = vsub.s32 0, %v1616
        %v1618 = vrot.slane %v1613, %v1617
        %v1620 = vadd.f32 %v1549, %v1618
        %v1621 = vadd.f32 %v1550, %v1618
        %v1622 = vadd.f32 %v1551, %v1618
        %v1623 = vadd.f32 %v1552, %v1618
        %v1624 = vadd.f32 %v1553, %v1618
        %v1625 = vadd.f32 %v1554, %v1618
        %v1626 = vadd.f32 %v1555, %v1618
        %v1627 = vadd.f32 %v1556, %v1618
        %v1628 = vadd.f32 %v1557, %v1618
        %v1629 = vadd.f32 %v1558, %v1618
        %v1630 = vadd.f32 %v1559, %v1618
        %v1631 = vadd.f32 %v1560, %v1618
        %v1632 = vadd.f32 %v1561, %v1618
        %v1633 = vadd.f32 %v1562, %v1618
        %v1634 = vadd.f32 %v1563, %v1618
        %v1635 = vadd.f32 %v1564, %v1618
        %v1636 = vadd.f32 %v1565, %v1618
        %v1637 = vadd.f32 %v1566, %v1618
        %v1638 = vadd.f32 %v1567, %v1618
        %v1639 = vadd.f32 %v1568, %v1618
        %v1640 = vadd.f32 %v1569, %v1618
        %v1641 = vadd.f32 %v1570, %v1618
        %v1642 = vadd.f32 %v1571, %v1618
        %v1643 = vadd.f32 %v1572, %v1618
        %v1644 = vadd.f32 %v1573, %v1618
        %v1645 = vadd.f32 %v1574, %v1618
        %v1646 = vadd.f32 %v1575, %v1618
        %v1647 = vadd.f32 %v1576, %v1618
        %v1648 = vadd.f32 %v1577, %v1618
        %v1649 = vadd.f32 %v1578, %v1618
        %v1650 = vadd.f32 %v1579, %v1618
        %v1651 = vadd.f32 %v1580, %v1618
        %v1652 = vadd.f32 %v1581, %v1618
        %v1653 = vadd.f32 %v1582, %v1618
        %v1654 = vadd.f32 %v1583, %v1618
        %v1655 = vadd.f32 %v1584, %v1618
        %v1656 = vadd.f32 %v1585, %v1618
        %v1657 = vadd.f32 %v1586, %v1618
        %v1658 = vadd.f32 %v1587, %v1618
        %v1659 = vadd.f32 %v1588, %v1618
        %v1660 = vadd.f32 %v1589, %v1618
        %v1661 = vadd.f32 %v1590, %v1618
        %v1662 = vadd.f32 %v1591, %v1618
        %v1663 = vadd.f32 %v1592, %v1618
        %v1664 = vadd.f32 %v1593, %v1618
        %v1665 = vadd.f32 %v1594, %v1618
        %v1666 = vadd.f32 %v1595, %v1618
        %v1667 = vadd.f32 %v1596, %v1618
        %v1668 = vadd.f32 %v1597, %v1618
        %v1669 = vadd.f32 %v1598, %v1618
        %v1670 = vadd.f32 %v1599, %v1618
        %v1671 = vadd.f32 %v1600, %v1618
        %v1672 = vadd.f32 %v1601, %v1618
        %v1673 = vadd.f32 %v1602, %v1618
        %v1674 = vadd.f32 %v1603, %v1618
        %v1675 = vadd.f32 %v1604, %v1618
        %v1676 = vadd.f32 %v1605, %v1618
        %v1677 = vadd.f32 %v1606, %v1618
        %v1678 = vadd.f32 %v1607, %v1618
        %v1679 = vadd.f32 %v1608, %v1618
        %v1680 = vadd.f32 %v1609, %v1618
        %v1681 = vadd.f32 %v1610, %v1618
        %v1682 = vadd.f32 %v1611, %v1618
        %v1683 = vadd.f32 %v1612, %v1618
        %v1684 = vmax.f32 %v1620, 0.0
        %v1685 = vmax.f32 %v1621, 0.0
        %v1686 = vmax.f32 %v1622, 0.0
        %v1687 = vmax.f32 %v1623, 0.0
        %v1688 = vmax.f32 %v1624, 0.0
        %v1689 = vmax.f32 %v1625, 0.0
        %v1690 = vmax.f32 %v1626, 0.0
        %v1691 = vmax.f32 %v1627, 0.0
        %v1692 = vmax.f32 %v1628, 0.0
        %v1693 = vmax.f32 %v1629, 0.0
        %v1694 = vmax.f32 %v1630, 0.0
        %v1695 = vmax.f32 %v1631, 0.0
        %v1696 = vmax.f32 %v1632, 0.0
        %v1697 = vmax.f32 %v1633, 0.0
        %v1698 = vmax.f32 %v1634, 0.0
        %v1699 = vmax.f32 %v1635, 0.0
        %v1700 = vmax.f32 %v1636, 0.0
        %v1701 = vmax.f32 %v1637, 0.0
        %v1702 = vmax.f32 %v1638, 0.0
        %v1703 = vmax.f32 %v1639, 0.0
        %v1704 = vmax.f32 %v1640, 0.0
        %v1705 = vmax.f32 %v1641, 0.0
        %v1706 = vmax.f32 %v1642, 0.0
        %v1707 = vmax.f32 %v1643, 0.0
        %v1708 = vmax.f32 %v1644, 0.0
        %v1709 = vmax.f32 %v1645, 0.0
        %v1710 = vmax.f32 %v1646, 0.0
        %v1711 = vmax.f32 %v1647, 0.0
        %v1712 = vmax.f32 %v1648, 0.0
        %v1713 = vmax.f32 %v1649, 0.0
        %v1714 = vmax.f32 %v1650, 0.0
        %v1715 = vmax.f32 %v1651, 0.0
        %v1716 = vmax.f32 %v1652, 0.0
        %v1717 = vmax.f32 %v1653, 0.0
        %v1718 = vmax.f32 %v1654, 0.0
        %v1719 = vmax.f32 %v1655, 0.0
        %v1720 = vmax.f32 %v1656, 0.0
        %v1721 = vmax.f32 %v1657, 0.0
        %v1722 = vmax.f32 %v1658, 0.0
        %v1723 = vmax.f32 %v1659, 0.0
        %v1724 = vmax.f32 %v1660, 0.0
        %v1725 = vmax.f32 %v1661, 0.0
        %v1726 = vmax.f32 %v1662, 0.0
        %v1727 = vmax.f32 %v1663, 0.0
        %v1728 = vmax.f32 %v1664, 0.0
        %v1729 = vmax.f32 %v1665, 0.0
        %v1730 = vmax.f32 %v1666, 0.0
        %v1731 = vmax.f32 %v1667, 0.0
        %v1732 = vmax.f32 %v1668, 0.0
        %v1733 = vmax.f32 %v1669, 0.0
        %v1734 = vmax.f32 %v1670, 0.0
        %v1735 = vmax.f32 %v1671, 0.0
        %v1736 = vmax.f32 %v1672, 0.0
        %v1737 = vmax.f32 %v1673, 0.0
        %v1738 = vmax.f32 %v1674, 0.0
        %v1739 = vmax.f32 %v1675, 0.0
        %v1740 = vmax.f32 %v1676, 0.0
        %v1741 = vmax.f32 %v1677, 0.0
        %v1742 = vmax.f32 %v1678, 0.0
        %v1743 = vmax.f32 %v1679, 0.0
        %v1744 = vmax.f32 %v1680, 0.0
        %v1745 = vmax.f32 %v1681, 0.0
        %v1746 = vmax.f32 %v1682, 0.0
        %v1747 = vmax.f32 %v1683, 0.0
        %v1748 = vpack.c.bf16 %v1685, %v1684
        %v1749 = vpack.c.bf16 %v1687, %v1686
        %v1750 = vpack.c.bf16 %v1689, %v1688
        %v1751 = vpack.c.bf16 %v1691, %v1690
        %v1752 = vpack.c.bf16 %v1693, %v1692
        %v1753 = vpack.c.bf16 %v1695, %v1694
        %v1754 = vpack.c.bf16 %v1697, %v1696
        %v1755 = vpack.c.bf16 %v1699, %v1698
        %v1756 = vpack.c.bf16 %v1701, %v1700
        %v1757 = vpack.c.bf16 %v1703, %v1702
        %v1758 = vpack.c.bf16 %v1705, %v1704
        %v1759 = vpack.c.bf16 %v1707, %v1706
        %v1760 = vpack.c.bf16 %v1709, %v1708
        %v1761 = vpack.c.bf16 %v1711, %v1710
        %v1762 = vpack.c.bf16 %v1713, %v1712
        %v1763 = vpack.c.bf16 %v1715, %v1714
        %v1764 = vpack.c.bf16 %v1717, %v1716
        %v1765 = vpack.c.bf16 %v1719, %v1718
        %v1766 = vpack.c.bf16 %v1721, %v1720
        %v1767 = vpack.c.bf16 %v1723, %v1722
        %v1768 = vpack.c.bf16 %v1725, %v1724
        %v1769 = vpack.c.bf16 %v1727, %v1726
        %v1770 = vpack.c.bf16 %v1729, %v1728
        %v1771 = vpack.c.bf16 %v1731, %v1730
        %v1772 = vpack.c.bf16 %v1733, %v1732
        %v1773 = vpack.c.bf16 %v1735, %v1734
        %v1774 = vpack.c.bf16 %v1737, %v1736
        %v1775 = vpack.c.bf16 %v1739, %v1738
        %v1776 = vpack.c.bf16 %v1741, %v1740
        %v1777 = vpack.c.bf16 %v1743, %v1742
        %v1778 = vpack.c.bf16 %v1745, %v1744
        %v1779 = vpack.c.bf16 %v1747, %v1746
        %v1780 = vld [vmem:[%s4] sm:$0xf]
        %v1781 = vld [vmem:[%s4 + $0x4] sm:$0xf]
        %v1782 = vld [vmem:[%s4 + $0x8] sm:$0xf]
        %v1783 = vld [vmem:[%s4 + $0xc] sm:$0xf]
        %v1784 = vld [vmem:[%s4 + $0x10] sm:$0xf]
        %v1785 = vld [vmem:[%s4 + $0x14] sm:$0xf]
        %v1786 = vld [vmem:[%s4 + $0x18] sm:$0xf]
        %v1787 = vld [vmem:[%s4 + $0x1c] sm:$0xf]
        %v1788 = vld [vmem:[%s5] sm:$0x1]
        %v1790 = vlaneseq
        %v1791 = vshrl.u32 %v1790, 7
        %v1792 = vsub.s32 0, %v1791
        %v1793 = vrot.slane %v1788, %v1792
        %v1803 = vunpack.c.l.b16 %v1780
        %v1804 = vunpack.c.l.b16 %v1781
        %v1805 = vunpack.c.l.b16 %v1782
        %v1806 = vunpack.c.l.b16 %v1783
        %v1807 = vunpack.c.l.b16 %v1784
        %v1808 = vunpack.c.l.b16 %v1785
        %v1809 = vunpack.c.l.b16 %v1786
        %v1810 = vunpack.c.l.b16 %v1787
        %v1811 = vpack.c.b16 %v1804, %v1803
        %v1812 = vpack.c.b16 %v1806, %v1805
        %v1813 = vpack.c.b16 %v1808, %v1807
        %v1814 = vpack.c.b16 %v1810, %v1809
        %vm1819 = vcmask 523264
        %v1821 = vsel %vm1819, %v1748, 0
        %v1824 = vsel %vm1819, %v1749, 0
        %v1827 = vsel %vm1819, %v1750, 0
        %v1830 = vsel %vm1819, %v1751, 0
        %v1833 = vsel %vm1819, %v1752, 0
        %v1836 = vsel %vm1819, %v1753, 0
        %v1839 = vsel %vm1819, %v1754, 0
        %v1842 = vsel %vm1819, %v1755, 0
        %v1845 = vsel %vm1819, %v1756, 0
        %v1848 = vsel %vm1819, %v1757, 0
        %v1851 = vsel %vm1819, %v1758, 0
        %v1854 = vsel %vm1819, %v1759, 0
        %v1857 = vsel %vm1819, %v1760, 0
        %v1860 = vsel %vm1819, %v1761, 0
        %v1863 = vsel %vm1819, %v1762, 0
        %v1866 = vsel %vm1819, %v1763, 0
        %v1869 = vsel %vm1819, %v1764, 0
        %v1872 = vsel %vm1819, %v1765, 0
        %v1875 = vsel %vm1819, %v1766, 0
        %v1878 = vsel %vm1819, %v1767, 0
        %v1881 = vsel %vm1819, %v1768, 0
        %v1884 = vsel %vm1819, %v1769, 0
        %v1887 = vsel %vm1819, %v1770, 0
        %v1890 = vsel %vm1819, %v1771, 0
        %v1893 = vsel %vm1819, %v1772, 0
        %v1896 = vsel %vm1819, %v1773, 0
        %v1899 = vsel %vm1819, %v1774, 0
        %v1902 = vsel %vm1819, %v1775, 0
        %v1905 = vsel %vm1819, %v1776, 0
        %v1908 = vsel %vm1819, %v1777, 0
        %v1911 = vsel %vm1819, %v1778, 0
        %v1914 = vsel %vm1819, %v1779, 0
        %1916 = vmatprep.subr.bf16.mxu0 0
        %1917 = vmatpush1.bf16.msra.mxu0 0
        %1918 = vmatprep.subr.bf16.mxu0 0
        %1919 = vmatpush1.bf16.msra.mxu0 0
        %1920 = vmatprep.subr.bf16.mxu0 0
        %1921 = vmatpush1.bf16.msra.mxu0 0
        %1922 = vmatprep.subr.bf16.mxu0 0
        %1923 = vmatpush1.bf16.msra.mxu0 0
        %1924 = vmatprep.subr.bf16.mxu0 0
        %1925 = vmatpush1.bf16.msra.mxu0 %v1814
        %1926 = vmatprep.subr.bf16.mxu0 0
        %1927 = vmatpush1.bf16.msra.mxu0 %v1813
        %1928 = vmatprep.subr.bf16.mxu0 0
        %1929 = vmatpush1.bf16.msra.mxu0 %v1812
        %1930 = vmatprep.subr.bf16.mxu0 0
        %1931 = vmatpush1.bf16.msra.mxu0 %v1811
        %1932 = vmatprep.subr.bf16.mxu0 0
        %1933 = vmatpush2.bf16.msra.mxu0 0
        %1934 = vmatprep.subr.bf16.mxu0 0
        %1935 = vmatpush2.bf16.msra.mxu0 0
        %1936 = vmatprep.subr.bf16.mxu0 0
        %1937 = vmatpush2.bf16.msra.mxu0 0
        %1938 = vmatprep.subr.bf16.mxu0 0
        %1939 = vmatpush2.bf16.msra.mxu0 0
        %1940 = vmatprep.subr.bf16.mxu0 0
        %1941 = vmatpush2.bf16.msra.mxu0 0
        %1942 = vmatprep.subr.bf16.mxu0 0
        %1943 = vmatpush2.bf16.msra.mxu0 0
        %1944 = vmatprep.subr.bf16.mxu0 0
        %1945 = vmatpush2.bf16.msra.mxu0 0
        %1946 = vmatprep.subr.bf16.mxu0 0
        %1947 = vmatpush2.bf16.msra.mxu0 0
        %1948 = vmatprep.mubr.bf16.mxu0 0
        %1949 = vmatmul.mubr.bf16.gmra.mxu0 %v1821
        %v1950 = vpop.f32.mrf.mxu0
        %v1951 = vadd.f32 %v1793, %v1950
        %v1952 = vpop.f32.mrf.mxu0
        %v1953 = vpop.f32.mrf.mxu0
        %v1954 = vadd.f32 %v1793, %v1953
        %v1955 = vpop.f32.mrf.mxu0
        %1956 = vmatprep.mubr.bf16.mxu0 0
        %1957 = vmatmul.mubr.bf16.gmra.mxu0 %v1824
        %v1958 = vpop.f32.mrf.mxu0
        %v1959 = vadd.f32 %v1793, %v1958
        %v1960 = vpop.f32.mrf.mxu0
        %v1961 = vpop.f32.mrf.mxu0
        %v1962 = vadd.f32 %v1793, %v1961
        %v1963 = vpop.f32.mrf.mxu0
        %1964 = vmatprep.mubr.bf16.mxu0 0
        %1965 = vmatmul.mubr.bf16.gmra.mxu0 %v1827
        %v1966 = vpop.f32.mrf.mxu0
        %v1967 = vadd.f32 %v1793, %v1966
        %v1968 = vpop.f32.mrf.mxu0
        %v1969 = vpop.f32.mrf.mxu0
        %v1970 = vadd.f32 %v1793, %v1969
        %v1971 = vpop.f32.mrf.mxu0
        %1972 = vmatprep.mubr.bf16.mxu0 0
        %1973 = vmatmul.mubr.bf16.gmra.mxu0 %v1830
        %v1974 = vpop.f32.mrf.mxu0
        %v1975 = vadd.f32 %v1793, %v1974
        %v1976 = vpop.f32.mrf.mxu0
        %v1977 = vpop.f32.mrf.mxu0
        %v1978 = vadd.f32 %v1793, %v1977
        %v1979 = vpop.f32.mrf.mxu0
        %1980 = vmatprep.mubr.bf16.mxu0 0
        %1981 = vmatmul.mubr.bf16.gmra.mxu0 %v1833
        %v1982 = vpop.f32.mrf.mxu0
        %v1983 = vadd.f32 %v1793, %v1982
        %v1984 = vpop.f32.mrf.mxu0
        %v1985 = vpop.f32.mrf.mxu0
        %v1986 = vadd.f32 %v1793, %v1985
        %v1987 = vpop.f32.mrf.mxu0
        %1988 = vmatprep.mubr.bf16.mxu0 0
        %1989 = vmatmul.mubr.bf16.gmra.mxu0 %v1836
        %v1990 = vpop.f32.mrf.mxu0
        %v1991 = vadd.f32 %v1793, %v1990
        %v1992 = vpop.f32.mrf.mxu0
        %v1993 = vpop.f32.mrf.mxu0
        %v1994 = vadd.f32 %v1793, %v1993
        %v1995 = vpop.f32.mrf.mxu0
        %1996 = vmatprep.mubr.bf16.mxu0 0
        %1997 = vmatmul.mubr.bf16.gmra.mxu0 %v1839
        %v1998 = vpop.f32.mrf.mxu0
        %v1999 = vadd.f32 %v1793, %v1998
        %v2000 = vpop.f32.mrf.mxu0
        %v2001 = vpop.f32.mrf.mxu0
        %v2002 = vadd.f32 %v1793, %v2001
        %v2003 = vpop.f32.mrf.mxu0
        %2004 = vmatprep.mubr.bf16.mxu0 0
        %2005 = vmatmul.mubr.bf16.gmra.mxu0 %v1842
        %v2006 = vpop.f32.mrf.mxu0
        %v2007 = vadd.f32 %v1793, %v2006
        %v2008 = vpop.f32.mrf.mxu0
        %v2009 = vpop.f32.mrf.mxu0
        %v2010 = vadd.f32 %v1793, %v2009
        %v2011 = vpop.f32.mrf.mxu0
        %2012 = vmatprep.mubr.bf16.mxu0 0
        %2013 = vmatmul.mubr.bf16.gmra.mxu0 %v1845
        %v2014 = vpop.f32.mrf.mxu0
        %v2015 = vadd.f32 %v1793, %v2014
        %v2016 = vpop.f32.mrf.mxu0
        %v2017 = vpop.f32.mrf.mxu0
        %v2018 = vadd.f32 %v1793, %v2017
        %v2019 = vpop.f32.mrf.mxu0
        %2020 = vmatprep.mubr.bf16.mxu0 0
        %2021 = vmatmul.mubr.bf16.gmra.mxu0 %v1848
        %v2022 = vpop.f32.mrf.mxu0
        %v2023 = vadd.f32 %v1793, %v2022
        %v2024 = vpop.f32.mrf.mxu0
        %v2025 = vpop.f32.mrf.mxu0
        %v2026 = vadd.f32 %v1793, %v2025
        %v2027 = vpop.f32.mrf.mxu0
        %2028 = vmatprep.mubr.bf16.mxu0 0
        %2029 = vmatmul.mubr.bf16.gmra.mxu0 %v1851
        %v2030 = vpop.f32.mrf.mxu0
        %v2031 = vadd.f32 %v1793, %v2030
        %v2032 = vpop.f32.mrf.mxu0
        %v2033 = vpop.f32.mrf.mxu0
        %v2034 = vadd.f32 %v1793, %v2033
        %v2035 = vpop.f32.mrf.mxu0
        %2036 = vmatprep.mubr.bf16.mxu0 0
        %2037 = vmatmul.mubr.bf16.gmra.mxu0 %v1854
        %v2038 = vpop.f32.mrf.mxu0
        %v2039 = vadd.f32 %v1793, %v2038
        %v2040 = vpop.f32.mrf.mxu0
        %v2041 = vpop.f32.mrf.mxu0
        %v2042 = vadd.f32 %v1793, %v2041
        %v2043 = vpop.f32.mrf.mxu0
        %2044 = vmatprep.mubr.bf16.mxu0 0
        %2045 = vmatmul.mubr.bf16.gmra.mxu0 %v1857
        %v2046 = vpop.f32.mrf.mxu0
        %v2047 = vadd.f32 %v1793, %v2046
        %v2048 = vpop.f32.mrf.mxu0
        %v2049 = vpop.f32.mrf.mxu0
        %v2050 = vadd.f32 %v1793, %v2049
        %v2051 = vpop.f32.mrf.mxu0
        %2052 = vmatprep.mubr.bf16.mxu0 0
        %2053 = vmatmul.mubr.bf16.gmra.mxu0 %v1860
        %v2054 = vpop.f32.mrf.mxu0
        %v2055 = vadd.f32 %v1793, %v2054
        %v2056 = vpop.f32.mrf.mxu0
        %v2057 = vpop.f32.mrf.mxu0
        %v2058 = vadd.f32 %v1793, %v2057
        %v2059 = vpop.f32.mrf.mxu0
        %2060 = vmatprep.mubr.bf16.mxu0 0
        %2061 = vmatmul.mubr.bf16.gmra.mxu0 %v1863
        %v2062 = vpop.f32.mrf.mxu0
        %v2063 = vadd.f32 %v1793, %v2062
        %v2064 = vpop.f32.mrf.mxu0
        %v2065 = vpop.f32.mrf.mxu0
        %v2066 = vadd.f32 %v1793, %v2065
        %v2067 = vpop.f32.mrf.mxu0
        %2068 = vmatprep.mubr.bf16.mxu0 0
        %2069 = vmatmul.mubr.bf16.gmra.mxu0 %v1866
        %v2070 = vpop.f32.mrf.mxu0
        %v2071 = vadd.f32 %v1793, %v2070
        %v2072 = vpop.f32.mrf.mxu0
        %v2073 = vpop.f32.mrf.mxu0
        %v2074 = vadd.f32 %v1793, %v2073
        %v2075 = vpop.f32.mrf.mxu0
        %2076 = vmatprep.mubr.bf16.mxu0 0
        %2077 = vmatmul.mubr.bf16.gmra.mxu0 %v1869
        %v2078 = vpop.f32.mrf.mxu0
        %v2079 = vadd.f32 %v1793, %v2078
        %v2080 = vpop.f32.mrf.mxu0
        %v2081 = vpop.f32.mrf.mxu0
        %v2082 = vadd.f32 %v1793, %v2081
        %v2083 = vpop.f32.mrf.mxu0
        %2084 = vmatprep.mubr.bf16.mxu0 0
        %2085 = vmatmul.mubr.bf16.gmra.mxu0 %v1872
        %v2086 = vpop.f32.mrf.mxu0
        %v2087 = vadd.f32 %v1793, %v2086
        %v2088 = vpop.f32.mrf.mxu0
        %v2089 = vpop.f32.mrf.mxu0
        %v2090 = vadd.f32 %v1793, %v2089
        %v2091 = vpop.f32.mrf.mxu0
        %2092 = vmatprep.mubr.bf16.mxu0 0
        %2093 = vmatmul.mubr.bf16.gmra.mxu0 %v1875
        %v2094 = vpop.f32.mrf.mxu0
        %v2095 = vadd.f32 %v1793, %v2094
        %v2096 = vpop.f32.mrf.mxu0
        %v2097 = vpop.f32.mrf.mxu0
        %v2098 = vadd.f32 %v1793, %v2097
        %v2099 = vpop.f32.mrf.mxu0
        %2100 = vmatprep.mubr.bf16.mxu0 0
        %2101 = vmatmul.mubr.bf16.gmra.mxu0 %v1878
        %v2102 = vpop.f32.mrf.mxu0
        %v2103 = vadd.f32 %v1793, %v2102
        %v2104 = vpop.f32.mrf.mxu0
        %v2105 = vpop.f32.mrf.mxu0
        %v2106 = vadd.f32 %v1793, %v2105
        %v2107 = vpop.f32.mrf.mxu0
        %2108 = vmatprep.mubr.bf16.mxu0 0
        %2109 = vmatmul.mubr.bf16.gmra.mxu0 %v1881
        %v2110 = vpop.f32.mrf.mxu0
        %v2111 = vadd.f32 %v1793, %v2110
        %v2112 = vpop.f32.mrf.mxu0
        %v2113 = vpop.f32.mrf.mxu0
        %v2114 = vadd.f32 %v1793, %v2113
        %v2115 = vpop.f32.mrf.mxu0
        %2116 = vmatprep.mubr.bf16.mxu0 0
        %2117 = vmatmul.mubr.bf16.gmra.mxu0 %v1884
        %v2118 = vpop.f32.mrf.mxu0
        %v2119 = vadd.f32 %v1793, %v2118
        %v2120 = vpop.f32.mrf.mxu0
        %v2121 = vpop.f32.mrf.mxu0
        %v2122 = vadd.f32 %v1793, %v2121
        %v2123 = vpop.f32.mrf.mxu0
        %2124 = vmatprep.mubr.bf16.mxu0 0
        %2125 = vmatmul.mubr.bf16.gmra.mxu0 %v1887
        %v2126 = vpop.f32.mrf.mxu0
        %v2127 = vadd.f32 %v1793, %v2126
        %v2128 = vpop.f32.mrf.mxu0
        %v2129 = vpop.f32.mrf.mxu0
        %v2130 = vadd.f32 %v1793, %v2129
        %v2131 = vpop.f32.mrf.mxu0
        %2132 = vmatprep.mubr.bf16.mxu0 0
        %2133 = vmatmul.mubr.bf16.gmra.mxu0 %v1890
        %v2134 = vpop.f32.mrf.mxu0
        %v2135 = vadd.f32 %v1793, %v2134
        %v2136 = vpop.f32.mrf.mxu0
        %v2137 = vpop.f32.mrf.mxu0
        %v2138 = vadd.f32 %v1793, %v2137
        %v2139 = vpop.f32.mrf.mxu0
        %2140 = vmatprep.mubr.bf16.mxu0 0
        %2141 = vmatmul.mubr.bf16.gmra.mxu0 %v1893
        %v2142 = vpop.f32.mrf.mxu0
        %v2143 = vadd.f32 %v1793, %v2142
        %v2144 = vpop.f32.mrf.mxu0
        %v2145 = vpop.f32.mrf.mxu0
        %v2146 = vadd.f32 %v1793, %v2145
        %v2147 = vpop.f32.mrf.mxu0
        %2148 = vmatprep.mubr.bf16.mxu0 0
        %2149 = vmatmul.mubr.bf16.gmra.mxu0 %v1896
        %v2150 = vpop.f32.mrf.mxu0
        %v2151 = vadd.f32 %v1793, %v2150
        %v2152 = vpop.f32.mrf.mxu0
        %v2153 = vpop.f32.mrf.mxu0
        %v2154 = vadd.f32 %v1793, %v2153
        %v2155 = vpop.f32.mrf.mxu0
        %2156 = vmatprep.mubr.bf16.mxu0 0
        %2157 = vmatmul.mubr.bf16.gmra.mxu0 %v1899
        %v2158 = vpop.f32.mrf.mxu0
        %v2159 = vadd.f32 %v1793, %v2158
        %v2160 = vpop.f32.mrf.mxu0
        %v2161 = vpop.f32.mrf.mxu0
        %v2162 = vadd.f32 %v1793, %v2161
        %v2163 = vpop.f32.mrf.mxu0
        %2164 = vmatprep.mubr.bf16.mxu0 0
        %2165 = vmatmul.mubr.bf16.gmra.mxu0 %v1902
        %v2166 = vpop.f32.mrf.mxu0
        %v2167 = vadd.f32 %v1793, %v2166
        %v2168 = vpop.f32.mrf.mxu0
        %v2169 = vpop.f32.mrf.mxu0
        %v2170 = vadd.f32 %v1793, %v2169
        %v2171 = vpop.f32.mrf.mxu0
        %2172 = vmatprep.mubr.bf16.mxu0 0
        %2173 = vmatmul.mubr.bf16.gmra.mxu0 %v1905
        %v2174 = vpop.f32.mrf.mxu0
        %v2175 = vadd.f32 %v1793, %v2174
        %v2176 = vpop.f32.mrf.mxu0
        %v2177 = vpop.f32.mrf.mxu0
        %v2178 = vadd.f32 %v1793, %v2177
        %v2179 = vpop.f32.mrf.mxu0
        %2180 = vmatprep.mubr.bf16.mxu0 0
        %2181 = vmatmul.mubr.bf16.gmra.mxu0 %v1908
        %v2182 = vpop.f32.mrf.mxu0
        %v2183 = vadd.f32 %v1793, %v2182
        %v2184 = vpop.f32.mrf.mxu0
        %v2185 = vpop.f32.mrf.mxu0
        %v2186 = vadd.f32 %v1793, %v2185
        %v2187 = vpop.f32.mrf.mxu0
        %2188 = vmatprep.mubr.bf16.mxu0 0
        %2189 = vmatmul.mubr.bf16.gmra.mxu0 %v1911
        %v2190 = vpop.f32.mrf.mxu0
        %v2191 = vadd.f32 %v1793, %v2190
        %v2192 = vpop.f32.mrf.mxu0
        %v2193 = vpop.f32.mrf.mxu0
        %v2194 = vadd.f32 %v1793, %v2193
        %v2195 = vpop.f32.mrf.mxu0
        %2196 = vmatprep.mubr.bf16.mxu0 0
        %2197 = vmatmul.mubr.bf16.gmra.mxu0 %v1914
        %v2198 = vpop.f32.mrf.mxu0
        %v2199 = vadd.f32 %v1793, %v2198
        %v2200 = vpop.f32.mrf.mxu0
        %v2201 = vpop.f32.mrf.mxu0
        %v2202 = vadd.f32 %v1793, %v2201
        %v2203 = vpop.f32.mrf.mxu0
        %2204 = vdwg.mxu0
        %v2205 = vmax.f32 %v1951, 0.0
        %v2206 = vmax.f32 %v1954, 0.0
        %v2207 = vmax.f32 %v1959, 0.0
        %v2208 = vmax.f32 %v1962, 0.0
        %v2209 = vmax.f32 %v1967, 0.0
        %v2210 = vmax.f32 %v1970, 0.0
        %v2211 = vmax.f32 %v1975, 0.0
        %v2212 = vmax.f32 %v1978, 0.0
        %v2213 = vmax.f32 %v1983, 0.0
        %v2214 = vmax.f32 %v1986, 0.0
        %v2215 = vmax.f32 %v1991, 0.0
        %v2216 = vmax.f32 %v1994, 0.0
        %v2217 = vmax.f32 %v1999, 0.0
        %v2218 = vmax.f32 %v2002, 0.0
        %v2219 = vmax.f32 %v2007, 0.0
        %v2220 = vmax.f32 %v2010, 0.0
        %v2221 = vmax.f32 %v2015, 0.0
        %v2222 = vmax.f32 %v2018, 0.0
        %v2223 = vmax.f32 %v2023, 0.0
        %v2224 = vmax.f32 %v2026, 0.0
        %v2225 = vmax.f32 %v2031, 0.0
        %v2226 = vmax.f32 %v2034, 0.0
        %v2227 = vmax.f32 %v2039, 0.0
        %v2228 = vmax.f32 %v2042, 0.0
        %v2229 = vmax.f32 %v2047, 0.0
        %v2230 = vmax.f32 %v2050, 0.0
        %v2231 = vmax.f32 %v2055, 0.0
        %v2232 = vmax.f32 %v2058, 0.0
        %v2233 = vmax.f32 %v2063, 0.0
        %v2234 = vmax.f32 %v2066, 0.0
        %v2235 = vmax.f32 %v2071, 0.0
        %v2236 = vmax.f32 %v2074, 0.0
        %v2237 = vmax.f32 %v2079, 0.0
        %v2238 = vmax.f32 %v2082, 0.0
        %v2239 = vmax.f32 %v2087, 0.0
        %v2240 = vmax.f32 %v2090, 0.0
        %v2241 = vmax.f32 %v2095, 0.0
        %v2242 = vmax.f32 %v2098, 0.0
        %v2243 = vmax.f32 %v2103, 0.0
        %v2244 = vmax.f32 %v2106, 0.0
        %v2245 = vmax.f32 %v2111, 0.0
        %v2246 = vmax.f32 %v2114, 0.0
        %v2247 = vmax.f32 %v2119, 0.0
        %v2248 = vmax.f32 %v2122, 0.0
        %v2249 = vmax.f32 %v2127, 0.0
        %v2250 = vmax.f32 %v2130, 0.0
        %v2251 = vmax.f32 %v2135, 0.0
        %v2252 = vmax.f32 %v2138, 0.0
        %v2253 = vmax.f32 %v2143, 0.0
        %v2254 = vmax.f32 %v2146, 0.0
        %v2255 = vmax.f32 %v2151, 0.0
        %v2256 = vmax.f32 %v2154, 0.0
        %v2257 = vmax.f32 %v2159, 0.0
        %v2258 = vmax.f32 %v2162, 0.0
        %v2259 = vmax.f32 %v2167, 0.0
        %v2260 = vmax.f32 %v2170, 0.0
        %v2261 = vmax.f32 %v2175, 0.0
        %v2262 = vmax.f32 %v2178, 0.0
        %v2263 = vmax.f32 %v2183, 0.0
        %v2264 = vmax.f32 %v2186, 0.0
        %v2265 = vmax.f32 %v2191, 0.0
        %v2266 = vmax.f32 %v2194, 0.0
        %v2267 = vmax.f32 %v2199, 0.0
        %v2268 = vmax.f32 %v2202, 0.0
        %v2269 = vpack.c.bf16 %v2206, %v2205
        %v2270 = vpack.c.bf16 %v2208, %v2207
        %v2271 = vpack.c.bf16 %v2210, %v2209
        %v2272 = vpack.c.bf16 %v2212, %v2211
        %v2273 = vpack.c.bf16 %v2214, %v2213
        %v2274 = vpack.c.bf16 %v2216, %v2215
        %v2275 = vpack.c.bf16 %v2218, %v2217
        %v2276 = vpack.c.bf16 %v2220, %v2219
        %v2277 = vpack.c.bf16 %v2222, %v2221
        %v2278 = vpack.c.bf16 %v2224, %v2223
        %v2279 = vpack.c.bf16 %v2226, %v2225
        %v2280 = vpack.c.bf16 %v2228, %v2227
        %v2281 = vpack.c.bf16 %v2230, %v2229
        %v2282 = vpack.c.bf16 %v2232, %v2231
        %v2283 = vpack.c.bf16 %v2234, %v2233
        %v2284 = vpack.c.bf16 %v2236, %v2235
        %v2285 = vpack.c.bf16 %v2238, %v2237
        %v2286 = vpack.c.bf16 %v2240, %v2239
        %v2287 = vpack.c.bf16 %v2242, %v2241
        %v2288 = vpack.c.bf16 %v2244, %v2243
        %v2289 = vpack.c.bf16 %v2246, %v2245
        %v2290 = vpack.c.bf16 %v2248, %v2247
        %v2291 = vpack.c.bf16 %v2250, %v2249
        %v2292 = vpack.c.bf16 %v2252, %v2251
        %v2293 = vpack.c.bf16 %v2254, %v2253
        %v2294 = vpack.c.bf16 %v2256, %v2255
        %v2295 = vpack.c.bf16 %v2258, %v2257
        %v2296 = vpack.c.bf16 %v2260, %v2259
        %v2297 = vpack.c.bf16 %v2262, %v2261
        %v2298 = vpack.c.bf16 %v2264, %v2263
        %v2299 = vpack.c.bf16 %v2266, %v2265
        %v2300 = vpack.c.bf16 %v2268, %v2267
        %v2301 = vld [vmem:[%s6] sm:$0xf]
        %v2302 = vld [vmem:[%s6 + $0x4] sm:$0xf]
        %v2303 = vld [vmem:[%s6 + $0x8] sm:$0xf]
        %v2304 = vld [vmem:[%s6 + $0xc] sm:$0xf]
        %v2305 = vld [vmem:[%s6 + $0x10] sm:$0xf]
        %v2306 = vld [vmem:[%s6 + $0x14] sm:$0xf]
        %v2307 = vld [vmem:[%s6 + $0x18] sm:$0xf]
        %v2308 = vld [vmem:[%s6 + $0x1c] sm:$0xf]
        %v2309 = vld [vmem:[%s7] sm:$0x1]
        %v2311 = vlaneseq
        %v2312 = vshrl.u32 %v2311, 7
        %v2313 = vsub.s32 0, %v2312
        %v2314 = vrot.slane %v2309, %v2313
        %v2324 = vunpack.c.l.b16 %v2301
        %v2325 = vunpack.c.l.b16 %v2302
        %v2326 = vunpack.c.l.b16 %v2303
        %v2327 = vunpack.c.l.b16 %v2304
        %v2328 = vunpack.c.l.b16 %v2305
        %v2329 = vunpack.c.l.b16 %v2306
        %v2330 = vunpack.c.l.b16 %v2307
        %v2331 = vunpack.c.l.b16 %v2308
        %v2332 = vpack.c.b16 %v2325, %v2324
        %v2333 = vpack.c.b16 %v2327, %v2326
        %v2334 = vpack.c.b16 %v2329, %v2328
        %v2335 = vpack.c.b16 %v2331, %v2330
        %v2341 = vsel %vm1819, %v2269, 0
        %v2344 = vsel %vm1819, %v2270, 0
        %v2347 = vsel %vm1819, %v2271, 0
        %v2350 = vsel %vm1819, %v2272, 0
        %v2353 = vsel %vm1819, %v2273, 0
        %v2356 = vsel %vm1819, %v2274, 0
        %v2359 = vsel %vm1819, %v2275, 0
        %v2362 = vsel %vm1819, %v2276, 0
        %v2365 = vsel %vm1819, %v2277, 0
        %v2368 = vsel %vm1819, %v2278, 0
        %v2371 = vsel %vm1819, %v2279, 0
        %v2374 = vsel %vm1819, %v2280, 0
        %v2377 = vsel %vm1819, %v2281, 0
        %v2380 = vsel %vm1819, %v2282, 0
        %v2383 = vsel %vm1819, %v2283, 0
        %v2386 = vsel %vm1819, %v2284, 0
        %v2389 = vsel %vm1819, %v2285, 0
        %v2392 = vsel %vm1819, %v2286, 0
        %v2395 = vsel %vm1819, %v2287, 0
        %v2398 = vsel %vm1819, %v2288, 0
        %v2401 = vsel %vm1819, %v2289, 0
        %v2404 = vsel %vm1819, %v2290, 0
        %v2407 = vsel %vm1819, %v2291, 0
        %v2410 = vsel %vm1819, %v2292, 0
        %v2413 = vsel %vm1819, %v2293, 0
        %v2416 = vsel %vm1819, %v2294, 0
        %v2419 = vsel %vm1819, %v2295, 0
        %v2422 = vsel %vm1819, %v2296, 0
        %v2425 = vsel %vm1819, %v2297, 0
        %v2428 = vsel %vm1819, %v2298, 0
        %v2431 = vsel %vm1819, %v2299, 0
        %v2434 = vsel %vm1819, %v2300, 0
        %2436 = vmatprep.subr.bf16.mxu0 0
        %2437 = vmatpush1.bf16.msra.mxu0 0
        %2438 = vmatprep.subr.bf16.mxu0 0
        %2439 = vmatpush1.bf16.msra.mxu0 0
        %2440 = vmatprep.subr.bf16.mxu0 0
        %2441 = vmatpush1.bf16.msra.mxu0 0
        %2442 = vmatprep.subr.bf16.mxu0 0
        %2443 = vmatpush1.bf16.msra.mxu0 0
        %2444 = vmatprep.subr.bf16.mxu0 0
        %2445 = vmatpush1.bf16.msra.mxu0 %v2335
        %2446 = vmatprep.subr.bf16.mxu0 0
        %2447 = vmatpush1.bf16.msra.mxu0 %v2334
        %2448 = vmatprep.subr.bf16.mxu0 0
        %2449 = vmatpush1.bf16.msra.mxu0 %v2333
        %2450 = vmatprep.subr.bf16.mxu0 0
        %2451 = vmatpush1.bf16.msra.mxu0 %v2332
        %2452 = vmatprep.subr.bf16.mxu0 0
        %2453 = vmatpush2.bf16.msra.mxu0 0
        %2454 = vmatprep.subr.bf16.mxu0 0
        %2455 = vmatpush2.bf16.msra.mxu0 0
        %2456 = vmatprep.subr.bf16.mxu0 0
        %2457 = vmatpush2.bf16.msra.mxu0 0
        %2458 = vmatprep.subr.bf16.mxu0 0
        %2459 = vmatpush2.bf16.msra.mxu0 0
        %2460 = vmatprep.subr.bf16.mxu0 0
        %2461 = vmatpush2.bf16.msra.mxu0 0
        %2462 = vmatprep.subr.bf16.mxu0 0
        %2463 = vmatpush2.bf16.msra.mxu0 0
        %2464 = vmatprep.subr.bf16.mxu0 0
        %2465 = vmatpush2.bf16.msra.mxu0 0
        %2466 = vmatprep.subr.bf16.mxu0 0
        %2467 = vmatpush2.bf16.msra.mxu0 0
        %2468 = vmatprep.mubr.bf16.mxu0 0
        %2469 = vmatmul.mubr.bf16.gmra.mxu0 %v2341
        %v2470 = vpop.f32.mrf.mxu0
        %v2471 = vadd.f32 %v2314, %v2470
        %v2472 = vpop.f32.mrf.mxu0
        %v2473 = vpop.f32.mrf.mxu0
        %v2474 = vadd.f32 %v2314, %v2473
        %v2475 = vpop.f32.mrf.mxu0
        %2476 = vmatprep.mubr.bf16.mxu0 0
        %2477 = vmatmul.mubr.bf16.gmra.mxu0 %v2344
        %v2478 = vpop.f32.mrf.mxu0
        %v2479 = vadd.f32 %v2314, %v2478
        %v2480 = vpop.f32.mrf.mxu0
        %v2481 = vpop.f32.mrf.mxu0
        %v2482 = vadd.f32 %v2314, %v2481
        %v2483 = vpop.f32.mrf.mxu0
        %2484 = vmatprep.mubr.bf16.mxu0 0
        %2485 = vmatmul.mubr.bf16.gmra.mxu0 %v2347
        %v2486 = vpop.f32.mrf.mxu0
        %v2487 = vadd.f32 %v2314, %v2486
        %v2488 = vpop.f32.mrf.mxu0
        %v2489 = vpop.f32.mrf.mxu0
        %v2490 = vadd.f32 %v2314, %v2489
        %v2491 = vpop.f32.mrf.mxu0
        %2492 = vmatprep.mubr.bf16.mxu0 0
        %2493 = vmatmul.mubr.bf16.gmra.mxu0 %v2350
        %v2494 = vpop.f32.mrf.mxu0
        %v2495 = vadd.f32 %v2314, %v2494
        %v2496 = vpop.f32.mrf.mxu0
        %v2497 = vpop.f32.mrf.mxu0
        %v2498 = vadd.f32 %v2314, %v2497
        %v2499 = vpop.f32.mrf.mxu0
        %2500 = vmatprep.mubr.bf16.mxu0 0
        %2501 = vmatmul.mubr.bf16.gmra.mxu0 %v2353
        %v2502 = vpop.f32.mrf.mxu0
        %v2503 = vadd.f32 %v2314, %v2502
        %v2504 = vpop.f32.mrf.mxu0
        %v2505 = vpop.f32.mrf.mxu0
        %v2506 = vadd.f32 %v2314, %v2505
        %v2507 = vpop.f32.mrf.mxu0
        %2508 = vmatprep.mubr.bf16.mxu0 0
        %2509 = vmatmul.mubr.bf16.gmra.mxu0 %v2356
        %v2510 = vpop.f32.mrf.mxu0
        %v2511 = vadd.f32 %v2314, %v2510
        %v2512 = vpop.f32.mrf.mxu0
        %v2513 = vpop.f32.mrf.mxu0
        %v2514 = vadd.f32 %v2314, %v2513
        %v2515 = vpop.f32.mrf.mxu0
        %2516 = vmatprep.mubr.bf16.mxu0 0
        %2517 = vmatmul.mubr.bf16.gmra.mxu0 %v2359
        %v2518 = vpop.f32.mrf.mxu0
        %v2519 = vadd.f32 %v2314, %v2518
        %v2520 = vpop.f32.mrf.mxu0
        %v2521 = vpop.f32.mrf.mxu0
        %v2522 = vadd.f32 %v2314, %v2521
        %v2523 = vpop.f32.mrf.mxu0
        %2524 = vmatprep.mubr.bf16.mxu0 0
        %2525 = vmatmul.mubr.bf16.gmra.mxu0 %v2362
        %v2526 = vpop.f32.mrf.mxu0
        %v2527 = vadd.f32 %v2314, %v2526
        %v2528 = vpop.f32.mrf.mxu0
        %v2529 = vpop.f32.mrf.mxu0
        %v2530 = vadd.f32 %v2314, %v2529
        %v2531 = vpop.f32.mrf.mxu0
        %2532 = vmatprep.mubr.bf16.mxu0 0
        %2533 = vmatmul.mubr.bf16.gmra.mxu0 %v2365
        %v2534 = vpop.f32.mrf.mxu0
        %v2535 = vadd.f32 %v2314, %v2534
        %v2536 = vpop.f32.mrf.mxu0
        %v2537 = vpop.f32.mrf.mxu0
        %v2538 = vadd.f32 %v2314, %v2537
        %v2539 = vpop.f32.mrf.mxu0
        %2540 = vmatprep.mubr.bf16.mxu0 0
        %2541 = vmatmul.mubr.bf16.gmra.mxu0 %v2368
        %v2542 = vpop.f32.mrf.mxu0
        %v2543 = vadd.f32 %v2314, %v2542
        %v2544 = vpop.f32.mrf.mxu0
        %v2545 = vpop.f32.mrf.mxu0
        %v2546 = vadd.f32 %v2314, %v2545
        %v2547 = vpop.f32.mrf.mxu0
        %2548 = vmatprep.mubr.bf16.mxu0 0
        %2549 = vmatmul.mubr.bf16.gmra.mxu0 %v2371
        %v2550 = vpop.f32.mrf.mxu0
        %v2551 = vadd.f32 %v2314, %v2550
        %v2552 = vpop.f32.mrf.mxu0
        %v2553 = vpop.f32.mrf.mxu0
        %v2554 = vadd.f32 %v2314, %v2553
        %v2555 = vpop.f32.mrf.mxu0
        %2556 = vmatprep.mubr.bf16.mxu0 0
        %2557 = vmatmul.mubr.bf16.gmra.mxu0 %v2374
        %v2558 = vpop.f32.mrf.mxu0
        %v2559 = vadd.f32 %v2314, %v2558
        %v2560 = vpop.f32.mrf.mxu0
        %v2561 = vpop.f32.mrf.mxu0
        %v2562 = vadd.f32 %v2314, %v2561
        %v2563 = vpop.f32.mrf.mxu0
        %2564 = vmatprep.mubr.bf16.mxu0 0
        %2565 = vmatmul.mubr.bf16.gmra.mxu0 %v2377
        %v2566 = vpop.f32.mrf.mxu0
        %v2567 = vadd.f32 %v2314, %v2566
        %v2568 = vpop.f32.mrf.mxu0
        %v2569 = vpop.f32.mrf.mxu0
        %v2570 = vadd.f32 %v2314, %v2569
        %v2571 = vpop.f32.mrf.mxu0
        %2572 = vmatprep.mubr.bf16.mxu0 0
        %2573 = vmatmul.mubr.bf16.gmra.mxu0 %v2380
        %v2574 = vpop.f32.mrf.mxu0
        %v2575 = vadd.f32 %v2314, %v2574
        %v2576 = vpop.f32.mrf.mxu0
        %v2577 = vpop.f32.mrf.mxu0
        %v2578 = vadd.f32 %v2314, %v2577
        %v2579 = vpop.f32.mrf.mxu0
        %2580 = vmatprep.mubr.bf16.mxu0 0
        %2581 = vmatmul.mubr.bf16.gmra.mxu0 %v2383
        %v2582 = vpop.f32.mrf.mxu0
        %v2583 = vadd.f32 %v2314, %v2582
        %v2584 = vpop.f32.mrf.mxu0
        %v2585 = vpop.f32.mrf.mxu0
        %v2586 = vadd.f32 %v2314, %v2585
        %v2587 = vpop.f32.mrf.mxu0
        %2588 = vmatprep.mubr.bf16.mxu0 0
        %2589 = vmatmul.mubr.bf16.gmra.mxu0 %v2386
        %v2590 = vpop.f32.mrf.mxu0
        %v2591 = vadd.f32 %v2314, %v2590
        %v2592 = vpop.f32.mrf.mxu0
        %v2593 = vpop.f32.mrf.mxu0
        %v2594 = vadd.f32 %v2314, %v2593
        %v2595 = vpop.f32.mrf.mxu0
        %2596 = vmatprep.mubr.bf16.mxu0 0
        %2597 = vmatmul.mubr.bf16.gmra.mxu0 %v2389
        %v2598 = vpop.f32.mrf.mxu0
        %v2599 = vadd.f32 %v2314, %v2598
        %v2600 = vpop.f32.mrf.mxu0
        %v2601 = vpop.f32.mrf.mxu0
        %v2602 = vadd.f32 %v2314, %v2601
        %v2603 = vpop.f32.mrf.mxu0
        %2604 = vmatprep.mubr.bf16.mxu0 0
        %2605 = vmatmul.mubr.bf16.gmra.mxu0 %v2392
        %v2606 = vpop.f32.mrf.mxu0
        %v2607 = vadd.f32 %v2314, %v2606
        %v2608 = vpop.f32.mrf.mxu0
        %v2609 = vpop.f32.mrf.mxu0
        %v2610 = vadd.f32 %v2314, %v2609
        %v2611 = vpop.f32.mrf.mxu0
        %2612 = vmatprep.mubr.bf16.mxu0 0
        %2613 = vmatmul.mubr.bf16.gmra.mxu0 %v2395
        %v2614 = vpop.f32.mrf.mxu0
        %v2615 = vadd.f32 %v2314, %v2614
        %v2616 = vpop.f32.mrf.mxu0
        %v2617 = vpop.f32.mrf.mxu0
        %v2618 = vadd.f32 %v2314, %v2617
        %v2619 = vpop.f32.mrf.mxu0
        %2620 = vmatprep.mubr.bf16.mxu0 0
        %2621 = vmatmul.mubr.bf16.gmra.mxu0 %v2398
        %v2622 = vpop.f32.mrf.mxu0
        %v2623 = vadd.f32 %v2314, %v2622
        %v2624 = vpop.f32.mrf.mxu0
        %v2625 = vpop.f32.mrf.mxu0
        %v2626 = vadd.f32 %v2314, %v2625
        %v2627 = vpop.f32.mrf.mxu0
        %2628 = vmatprep.mubr.bf16.mxu0 0
        %2629 = vmatmul.mubr.bf16.gmra.mxu0 %v2401
        %v2630 = vpop.f32.mrf.mxu0
        %v2631 = vadd.f32 %v2314, %v2630
        %v2632 = vpop.f32.mrf.mxu0
        %v2633 = vpop.f32.mrf.mxu0
        %v2634 = vadd.f32 %v2314, %v2633
        %v2635 = vpop.f32.mrf.mxu0
        %2636 = vmatprep.mubr.bf16.mxu0 0
        %2637 = vmatmul.mubr.bf16.gmra.mxu0 %v2404
        %v2638 = vpop.f32.mrf.mxu0
        %v2639 = vadd.f32 %v2314, %v2638
        %v2640 = vpop.f32.mrf.mxu0
        %v2641 = vpop.f32.mrf.mxu0
        %v2642 = vadd.f32 %v2314, %v2641
        %v2643 = vpop.f32.mrf.mxu0
        %2644 = vmatprep.mubr.bf16.mxu0 0
        %2645 = vmatmul.mubr.bf16.gmra.mxu0 %v2407
        %v2646 = vpop.f32.mrf.mxu0
        %v2647 = vadd.f32 %v2314, %v2646
        %v2648 = vpop.f32.mrf.mxu0
        %v2649 = vpop.f32.mrf.mxu0
        %v2650 = vadd.f32 %v2314, %v2649
        %v2651 = vpop.f32.mrf.mxu0
        %2652 = vmatprep.mubr.bf16.mxu0 0
        %2653 = vmatmul.mubr.bf16.gmra.mxu0 %v2410
        %v2654 = vpop.f32.mrf.mxu0
        %v2655 = vadd.f32 %v2314, %v2654
        %v2656 = vpop.f32.mrf.mxu0
        %v2657 = vpop.f32.mrf.mxu0
        %v2658 = vadd.f32 %v2314, %v2657
        %v2659 = vpop.f32.mrf.mxu0
        %2660 = vmatprep.mubr.bf16.mxu0 0
        %2661 = vmatmul.mubr.bf16.gmra.mxu0 %v2413
        %v2662 = vpop.f32.mrf.mxu0
        %v2663 = vadd.f32 %v2314, %v2662
        %v2664 = vpop.f32.mrf.mxu0
        %v2665 = vpop.f32.mrf.mxu0
        %v2666 = vadd.f32 %v2314, %v2665
        %v2667 = vpop.f32.mrf.mxu0
        %2668 = vmatprep.mubr.bf16.mxu0 0
        %2669 = vmatmul.mubr.bf16.gmra.mxu0 %v2416
        %v2670 = vpop.f32.mrf.mxu0
        %v2671 = vadd.f32 %v2314, %v2670
        %v2672 = vpop.f32.mrf.mxu0
        %v2673 = vpop.f32.mrf.mxu0
        %v2674 = vadd.f32 %v2314, %v2673
        %v2675 = vpop.f32.mrf.mxu0
        %2676 = vmatprep.mubr.bf16.mxu0 0
        %2677 = vmatmul.mubr.bf16.gmra.mxu0 %v2419
        %v2678 = vpop.f32.mrf.mxu0
        %v2679 = vadd.f32 %v2314, %v2678
        %v2680 = vpop.f32.mrf.mxu0
        %v2681 = vpop.f32.mrf.mxu0
        %v2682 = vadd.f32 %v2314, %v2681
        %v2683 = vpop.f32.mrf.mxu0
        %2684 = vmatprep.mubr.bf16.mxu0 0
        %2685 = vmatmul.mubr.bf16.gmra.mxu0 %v2422
        %v2686 = vpop.f32.mrf.mxu0
        %v2687 = vadd.f32 %v2314, %v2686
        %v2688 = vpop.f32.mrf.mxu0
        %v2689 = vpop.f32.mrf.mxu0
        %v2690 = vadd.f32 %v2314, %v2689
        %v2691 = vpop.f32.mrf.mxu0
        %2692 = vmatprep.mubr.bf16.mxu0 0
        %2693 = vmatmul.mubr.bf16.gmra.mxu0 %v2425
        %v2694 = vpop.f32.mrf.mxu0
        %v2695 = vadd.f32 %v2314, %v2694
        %v2696 = vpop.f32.mrf.mxu0
        %v2697 = vpop.f32.mrf.mxu0
        %v2698 = vadd.f32 %v2314, %v2697
        %v2699 = vpop.f32.mrf.mxu0
        %2700 = vmatprep.mubr.bf16.mxu0 0
        %2701 = vmatmul.mubr.bf16.gmra.mxu0 %v2428
        %v2702 = vpop.f32.mrf.mxu0
        %v2703 = vadd.f32 %v2314, %v2702
        %v2704 = vpop.f32.mrf.mxu0
        %v2705 = vpop.f32.mrf.mxu0
        %v2706 = vadd.f32 %v2314, %v2705
        %v2707 = vpop.f32.mrf.mxu0
        %2708 = vmatprep.mubr.bf16.mxu0 0
        %2709 = vmatmul.mubr.bf16.gmra.mxu0 %v2431
        %v2710 = vpop.f32.mrf.mxu0
        %v2711 = vadd.f32 %v2314, %v2710
        %v2712 = vpop.f32.mrf.mxu0
        %v2713 = vpop.f32.mrf.mxu0
        %v2714 = vadd.f32 %v2314, %v2713
        %v2715 = vpop.f32.mrf.mxu0
        %2716 = vmatprep.mubr.bf16.mxu0 0
        %2717 = vmatmul.mubr.bf16.gmra.mxu0 %v2434
        %v2718 = vpop.f32.mrf.mxu0
        %v2719 = vadd.f32 %v2314, %v2718
        %v2720 = vpop.f32.mrf.mxu0
        %v2721 = vpop.f32.mrf.mxu0
        %v2722 = vadd.f32 %v2314, %v2721
        %v2723 = vpop.f32.mrf.mxu0
        %2724 = vdwg.mxu0
        %v2725 = vmax.f32 %v2471, 0.0
        %v2726 = vmax.f32 %v2474, 0.0
        %v2727 = vmax.f32 %v2479, 0.0
        %v2728 = vmax.f32 %v2482, 0.0
        %v2729 = vmax.f32 %v2487, 0.0
        %v2730 = vmax.f32 %v2490, 0.0
        %v2731 = vmax.f32 %v2495, 0.0
        %v2732 = vmax.f32 %v2498, 0.0
        %v2733 = vmax.f32 %v2503, 0.0
        %v2734 = vmax.f32 %v2506, 0.0
        %v2735 = vmax.f32 %v2511, 0.0
        %v2736 = vmax.f32 %v2514, 0.0
        %v2737 = vmax.f32 %v2519, 0.0
        %v2738 = vmax.f32 %v2522, 0.0
        %v2739 = vmax.f32 %v2527, 0.0
        %v2740 = vmax.f32 %v2530, 0.0
        %v2741 = vmax.f32 %v2535, 0.0
        %v2742 = vmax.f32 %v2538, 0.0
        %v2743 = vmax.f32 %v2543, 0.0
        %v2744 = vmax.f32 %v2546, 0.0
        %v2745 = vmax.f32 %v2551, 0.0
        %v2746 = vmax.f32 %v2554, 0.0
        %v2747 = vmax.f32 %v2559, 0.0
        %v2748 = vmax.f32 %v2562, 0.0
        %v2749 = vmax.f32 %v2567, 0.0
        %v2750 = vmax.f32 %v2570, 0.0
        %v2751 = vmax.f32 %v2575, 0.0
        %v2752 = vmax.f32 %v2578, 0.0
        %v2753 = vmax.f32 %v2583, 0.0
        %v2754 = vmax.f32 %v2586, 0.0
        %v2755 = vmax.f32 %v2591, 0.0
        %v2756 = vmax.f32 %v2594, 0.0
        %v2757 = vmax.f32 %v2599, 0.0
        %v2758 = vmax.f32 %v2602, 0.0
        %v2759 = vmax.f32 %v2607, 0.0
        %v2760 = vmax.f32 %v2610, 0.0
        %v2761 = vmax.f32 %v2615, 0.0
        %v2762 = vmax.f32 %v2618, 0.0
        %v2763 = vmax.f32 %v2623, 0.0
        %v2764 = vmax.f32 %v2626, 0.0
        %v2765 = vmax.f32 %v2631, 0.0
        %v2766 = vmax.f32 %v2634, 0.0
        %v2767 = vmax.f32 %v2639, 0.0
        %v2768 = vmax.f32 %v2642, 0.0
        %v2769 = vmax.f32 %v2647, 0.0
        %v2770 = vmax.f32 %v2650, 0.0
        %v2771 = vmax.f32 %v2655, 0.0
        %v2772 = vmax.f32 %v2658, 0.0
        %v2773 = vmax.f32 %v2663, 0.0
        %v2774 = vmax.f32 %v2666, 0.0
        %v2775 = vmax.f32 %v2671, 0.0
        %v2776 = vmax.f32 %v2674, 0.0
        %v2777 = vmax.f32 %v2679, 0.0
        %v2778 = vmax.f32 %v2682, 0.0
        %v2779 = vmax.f32 %v2687, 0.0
        %v2780 = vmax.f32 %v2690, 0.0
        %v2781 = vmax.f32 %v2695, 0.0
        %v2782 = vmax.f32 %v2698, 0.0
        %v2783 = vmax.f32 %v2703, 0.0
        %v2784 = vmax.f32 %v2706, 0.0
        %v2785 = vmax.f32 %v2711, 0.0
        %v2786 = vmax.f32 %v2714, 0.0
        %v2787 = vmax.f32 %v2719, 0.0
        %v2788 = vmax.f32 %v2722, 0.0
        %v2789 = vld [vmem:[%s8] sm:$0x1]
        %v2791 = vlaneseq
        %v2792 = vshrl.u32 %v2791, 7
        %v2793 = vsub.s32 0, %v2792
        %v2794 = vrot.slane %v2789, %v2793
        %v2796 = vmul.f32 %v2725, %v2794
        %v2797 = vmul.f32 %v2726, %v2794
        %v2798 = vmul.f32 %v2727, %v2794
        %v2799 = vmul.f32 %v2728, %v2794
        %v2800 = vmul.f32 %v2729, %v2794
        %v2801 = vmul.f32 %v2730, %v2794
        %v2802 = vmul.f32 %v2731, %v2794
        %v2803 = vmul.f32 %v2732, %v2794
        %v2804 = vmul.f32 %v2733, %v2794
        %v2805 = vmul.f32 %v2734, %v2794
        %v2806 = vmul.f32 %v2735, %v2794
        %v2807 = vmul.f32 %v2736, %v2794
        %v2808 = vmul.f32 %v2737, %v2794
        %v2809 = vmul.f32 %v2738, %v2794
        %v2810 = vmul.f32 %v2739, %v2794
        %v2811 = vmul.f32 %v2740, %v2794
        %v2812 = vmul.f32 %v2741, %v2794
        %v2813 = vmul.f32 %v2742, %v2794
        %v2814 = vmul.f32 %v2743, %v2794
        %v2815 = vmul.f32 %v2744, %v2794
        %v2816 = vmul.f32 %v2745, %v2794
        %v2817 = vmul.f32 %v2746, %v2794
        %v2818 = vmul.f32 %v2747, %v2794
        %v2819 = vmul.f32 %v2748, %v2794
        %v2820 = vmul.f32 %v2749, %v2794
        %v2821 = vmul.f32 %v2750, %v2794
        %v2822 = vmul.f32 %v2751, %v2794
        %v2823 = vmul.f32 %v2752, %v2794
        %v2824 = vmul.f32 %v2753, %v2794
        %v2825 = vmul.f32 %v2754, %v2794
        %v2826 = vmul.f32 %v2755, %v2794
        %v2827 = vmul.f32 %v2756, %v2794
        %v2828 = vmul.f32 %v2757, %v2794
        %v2829 = vmul.f32 %v2758, %v2794
        %v2830 = vmul.f32 %v2759, %v2794
        %v2831 = vmul.f32 %v2760, %v2794
        %v2832 = vmul.f32 %v2761, %v2794
        %v2833 = vmul.f32 %v2762, %v2794
        %v2834 = vmul.f32 %v2763, %v2794
        %v2835 = vmul.f32 %v2764, %v2794
        %v2836 = vmul.f32 %v2765, %v2794
        %v2837 = vmul.f32 %v2766, %v2794
        %v2838 = vmul.f32 %v2767, %v2794
        %v2839 = vmul.f32 %v2768, %v2794
        %v2840 = vmul.f32 %v2769, %v2794
        %v2841 = vmul.f32 %v2770, %v2794
        %v2842 = vmul.f32 %v2771, %v2794
        %v2843 = vmul.f32 %v2772, %v2794
        %v2844 = vmul.f32 %v2773, %v2794
        %v2845 = vmul.f32 %v2774, %v2794
        %v2846 = vmul.f32 %v2775, %v2794
        %v2847 = vmul.f32 %v2776, %v2794
        %v2848 = vmul.f32 %v2777, %v2794
        %v2849 = vmul.f32 %v2778, %v2794
        %v2850 = vmul.f32 %v2779, %v2794
        %v2851 = vmul.f32 %v2780, %v2794
        %v2852 = vmul.f32 %v2781, %v2794
        %v2853 = vmul.f32 %v2782, %v2794
        %v2854 = vmul.f32 %v2783, %v2794
        %v2855 = vmul.f32 %v2784, %v2794
        %v2856 = vmul.f32 %v2785, %v2794
        %v2857 = vmul.f32 %v2786, %v2794
        %v2858 = vmul.f32 %v2787, %v2794
        %v2859 = vmul.f32 %v2788, %v2794
        %v2860 = vld [vmem:[%s9] sm:$0x1]
        %v2862 = vlaneseq
        %v2863 = vshrl.u32 %v2862, 7
        %v2864 = vsub.s32 0, %v2863
        %v2865 = vrot.slane %v2860, %v2864
        %v2867 = vadd.f32 %v2796, %v2865
        %v2868 = vadd.f32 %v2797, %v2865
        %v2869 = vadd.f32 %v2798, %v2865
        %v2870 = vadd.f32 %v2799, %v2865
        %v2871 = vadd.f32 %v2800, %v2865
        %v2872 = vadd.f32 %v2801, %v2865
        %v2873 = vadd.f32 %v2802, %v2865
        %v2874 = vadd.f32 %v2803, %v2865
        %v2875 = vadd.f32 %v2804, %v2865
        %v2876 = vadd.f32 %v2805, %v2865
        %v2877 = vadd.f32 %v2806, %v2865
        %v2878 = vadd.f32 %v2807, %v2865
        %v2879 = vadd.f32 %v2808, %v2865
        %v2880 = vadd.f32 %v2809, %v2865
        %v2881 = vadd.f32 %v2810, %v2865
        %v2882 = vadd.f32 %v2811, %v2865
        %v2883 = vadd.f32 %v2812, %v2865
        %v2884 = vadd.f32 %v2813, %v2865
        %v2885 = vadd.f32 %v2814, %v2865
        %v2886 = vadd.f32 %v2815, %v2865
        %v2887 = vadd.f32 %v2816, %v2865
        %v2888 = vadd.f32 %v2817, %v2865
        %v2889 = vadd.f32 %v2818, %v2865
        %v2890 = vadd.f32 %v2819, %v2865
        %v2891 = vadd.f32 %v2820, %v2865
        %v2892 = vadd.f32 %v2821, %v2865
        %v2893 = vadd.f32 %v2822, %v2865
        %v2894 = vadd.f32 %v2823, %v2865
        %v2895 = vadd.f32 %v2824, %v2865
        %v2896 = vadd.f32 %v2825, %v2865
        %v2897 = vadd.f32 %v2826, %v2865
        %v2898 = vadd.f32 %v2827, %v2865
        %v2899 = vadd.f32 %v2828, %v2865
        %v2900 = vadd.f32 %v2829, %v2865
        %v2901 = vadd.f32 %v2830, %v2865
        %v2902 = vadd.f32 %v2831, %v2865
        %v2903 = vadd.f32 %v2832, %v2865
        %v2904 = vadd.f32 %v2833, %v2865
        %v2905 = vadd.f32 %v2834, %v2865
        %v2906 = vadd.f32 %v2835, %v2865
        %v2907 = vadd.f32 %v2836, %v2865
        %v2908 = vadd.f32 %v2837, %v2865
        %v2909 = vadd.f32 %v2838, %v2865
        %v2910 = vadd.f32 %v2839, %v2865
        %v2911 = vadd.f32 %v2840, %v2865
        %v2912 = vadd.f32 %v2841, %v2865
        %v2913 = vadd.f32 %v2842, %v2865
        %v2914 = vadd.f32 %v2843, %v2865
        %v2915 = vadd.f32 %v2844, %v2865
        %v2916 = vadd.f32 %v2845, %v2865
        %v2917 = vadd.f32 %v2846, %v2865
        %v2918 = vadd.f32 %v2847, %v2865
        %v2919 = vadd.f32 %v2848, %v2865
        %v2920 = vadd.f32 %v2849, %v2865
        %v2921 = vadd.f32 %v2850, %v2865
        %v2922 = vadd.f32 %v2851, %v2865
        %v2923 = vadd.f32 %v2852, %v2865
        %v2924 = vadd.f32 %v2853, %v2865
        %v2925 = vadd.f32 %v2854, %v2865
        %v2926 = vadd.f32 %v2855, %v2865
        %v2927 = vadd.f32 %v2856, %v2865
        %v2928 = vadd.f32 %v2857, %v2865
        %v2929 = vadd.f32 %v2858, %v2865
        %v2930 = vadd.f32 %v2859, %v2865
        %v2931 = vld [vmem:[%s380] sm:$0xff]
        %v2932 = vld [vmem:[%s380 + $0x8] sm:$0xff]
        %v2933 = vsub.f32 %v2931, 1.0
        %v2934 = vsub.f32 %v2932, 1.0
        %v2935 = vmul.f32 %v2933, 1e+30
        %v2936 = vmul.f32 %v2934, 1e+30
        %v2937 = vlaneseq
        %v2938 = vshrl.u32 %v2937, 7
        %v2939 = vsub.s32 0, %v2938
        %v2940 = vrot.slane %v2935, %v2939
        %2942 = vbcast.lane.b32.xlu0 %v2940, 256
        %v2943 = vpop.permute.xlu0 %2942
        %s2945 = sor.u32 256, 8
        %2946 = vbcast.lane.b32.xlu0 %v2940, %s2945
        %v2947 = vpop.permute.xlu0 %2946
        %s2949 = sor.u32 256, 16
        %2950 = vbcast.lane.b32.xlu0 %v2940, %s2949
        %v2951 = vpop.permute.xlu0 %2950
        %s2953 = sor.u32 256, 24
        %2954 = vbcast.lane.b32.xlu0 %v2940, %s2953
        %v2955 = vpop.permute.xlu0 %2954
        %v2956 = vlaneseq
        %v2957 = vshrl.u32 %v2956, 7
        %v2958 = vsub.s32 1, %v2957
        %v2959 = vrot.slane %v2935, %v2958
        %2961 = vbcast.lane.b32.xlu0 %v2959, 256
        %v2962 = vpop.permute.xlu0 %2961
        %s2964 = sor.u32 256, 8
        %2965 = vbcast.lane.b32.xlu0 %v2959, %s2964
        %v2966 = vpop.permute.xlu0 %2965
        %s2968 = sor.u32 256, 16
        %2969 = vbcast.lane.b32.xlu0 %v2959, %s2968
        %v2970 = vpop.permute.xlu0 %2969
        %s2972 = sor.u32 256, 24
        %2973 = vbcast.lane.b32.xlu0 %v2959, %s2972
        %v2974 = vpop.permute.xlu0 %2973
        %v2975 = vlaneseq
        %v2976 = vshrl.u32 %v2975, 7
        %v2977 = vsub.s32 2, %v2976
        %v2978 = vrot.slane %v2935, %v2977
        %2980 = vbcast.lane.b32.xlu0 %v2978, 256
        %v2981 = vpop.permute.xlu0 %2980
        %s2983 = sor.u32 256, 8
        %2984 = vbcast.lane.b32.xlu0 %v2978, %s2983
        %v2985 = vpop.permute.xlu0 %2984
        %s2987 = sor.u32 256, 16
        %2988 = vbcast.lane.b32.xlu0 %v2978, %s2987
        %v2989 = vpop.permute.xlu0 %2988
        %s2991 = sor.u32 256, 24
        %2992 = vbcast.lane.b32.xlu0 %v2978, %s2991
        %v2993 = vpop.permute.xlu0 %2992
        %v2994 = vlaneseq
        %v2995 = vshrl.u32 %v2994, 7
        %v2996 = vsub.s32 3, %v2995
        %v2997 = vrot.slane %v2935, %v2996
        %2999 = vbcast.lane.b32.xlu0 %v2997, 256
        %v3000 = vpop.permute.xlu0 %2999
        %s3002 = sor.u32 256, 8
        %3003 = vbcast.lane.b32.xlu0 %v2997, %s3002
        %v3004 = vpop.permute.xlu0 %3003
        %s3006 = sor.u32 256, 16
        %3007 = vbcast.lane.b32.xlu0 %v2997, %s3006
        %v3008 = vpop.permute.xlu0 %3007
        %s3010 = sor.u32 256, 24
        %3011 = vbcast.lane.b32.xlu0 %v2997, %s3010
        %v3012 = vpop.permute.xlu0 %3011
        %v3013 = vlaneseq
        %v3014 = vshrl.u32 %v3013, 7
        %v3015 = vsub.s32 4, %v3014
        %v3016 = vrot.slane %v2935, %v3015
        %3018 = vbcast.lane.b32.xlu0 %v3016, 256
        %v3019 = vpop.permute.xlu0 %3018
        %s3021 = sor.u32 256, 8
        %3022 = vbcast.lane.b32.xlu0 %v3016, %s3021
        %v3023 = vpop.permute.xlu0 %3022
        %s3025 = sor.u32 256, 16
        %3026 = vbcast.lane.b32.xlu0 %v3016, %s3025
        %v3027 = vpop.permute.xlu0 %3026
        %s3029 = sor.u32 256, 24
        %3030 = vbcast.lane.b32.xlu0 %v3016, %s3029
        %v3031 = vpop.permute.xlu0 %3030
        %v3032 = vlaneseq
        %v3033 = vshrl.u32 %v3032, 7
        %v3034 = vsub.s32 5, %v3033
        %v3035 = vrot.slane %v2935, %v3034
        %3037 = vbcast.lane.b32.xlu0 %v3035, 256
        %v3038 = vpop.permute.xlu0 %3037
        %s3040 = sor.u32 256, 8
        %3041 = vbcast.lane.b32.xlu0 %v3035, %s3040
        %v3042 = vpop.permute.xlu0 %3041
        %s3044 = sor.u32 256, 16
        %3045 = vbcast.lane.b32.xlu0 %v3035, %s3044
        %v3046 = vpop.permute.xlu0 %3045
        %s3048 = sor.u32 256, 24
        %3049 = vbcast.lane.b32.xlu0 %v3035, %s3048
        %v3050 = vpop.permute.xlu0 %3049
        %v3051 = vlaneseq
        %v3052 = vshrl.u32 %v3051, 7
        %v3053 = vsub.s32 6, %v3052
        %v3054 = vrot.slane %v2935, %v3053
        %3056 = vbcast.lane.b32.xlu0 %v3054, 256
        %v3057 = vpop.permute.xlu0 %3056
        %s3059 = sor.u32 256, 8
        %3060 = vbcast.lane.b32.xlu0 %v3054, %s3059
        %v3061 = vpop.permute.xlu0 %3060
        %s3063 = sor.u32 256, 16
        %3064 = vbcast.lane.b32.xlu0 %v3054, %s3063
        %v3065 = vpop.permute.xlu0 %3064
        %s3067 = sor.u32 256, 24
        %3068 = vbcast.lane.b32.xlu0 %v3054, %s3067
        %v3069 = vpop.permute.xlu0 %3068
        %v3070 = vlaneseq
        %v3071 = vshrl.u32 %v3070, 7
        %v3072 = vsub.s32 7, %v3071
        %v3073 = vrot.slane %v2935, %v3072
        %3075 = vbcast.lane.b32.xlu0 %v3073, 256
        %v3076 = vpop.permute.xlu0 %3075
        %s3078 = sor.u32 256, 8
        %3079 = vbcast.lane.b32.xlu0 %v3073, %s3078
        %v3080 = vpop.permute.xlu0 %3079
        %s3082 = sor.u32 256, 16
        %3083 = vbcast.lane.b32.xlu0 %v3073, %s3082
        %v3084 = vpop.permute.xlu0 %3083
        %s3086 = sor.u32 256, 24
        %3087 = vbcast.lane.b32.xlu0 %v3073, %s3086
        %v3088 = vpop.permute.xlu0 %3087
        %v3089 = vlaneseq
        %v3090 = vshrl.u32 %v3089, 7
        %v3091 = vsub.s32 0, %v3090
        %v3092 = vrot.slane %v2936, %v3091
        %3094 = vbcast.lane.b32.xlu0 %v3092, 256
        %v3095 = vpop.permute.xlu0 %3094
        %s3097 = sor.u32 256, 8
        %3098 = vbcast.lane.b32.xlu0 %v3092, %s3097
        %v3099 = vpop.permute.xlu0 %3098
        %s3101 = sor.u32 256, 16
        %3102 = vbcast.lane.b32.xlu0 %v3092, %s3101
        %v3103 = vpop.permute.xlu0 %3102
        %s3105 = sor.u32 256, 24
        %3106 = vbcast.lane.b32.xlu0 %v3092, %s3105
        %v3107 = vpop.permute.xlu0 %3106
        %v3108 = vlaneseq
        %v3109 = vshrl.u32 %v3108, 7
        %v3110 = vsub.s32 1, %v3109
        %v3111 = vrot.slane %v2936, %v3110
        %3113 = vbcast.lane.b32.xlu0 %v3111, 256
        %v3114 = vpop.permute.xlu0 %3113
        %s3116 = sor.u32 256, 8
        %3117 = vbcast.lane.b32.xlu0 %v3111, %s3116
        %v3118 = vpop.permute.xlu0 %3117
        %s3120 = sor.u32 256, 16
        %3121 = vbcast.lane.b32.xlu0 %v3111, %s3120
        %v3122 = vpop.permute.xlu0 %3121
        %s3124 = sor.u32 256, 24
        %3125 = vbcast.lane.b32.xlu0 %v3111, %s3124
        %v3126 = vpop.permute.xlu0 %3125
        %v3127 = vlaneseq
        %v3128 = vshrl.u32 %v3127, 7
        %v3129 = vsub.s32 2, %v3128
        %v3130 = vrot.slane %v2936, %v3129
        %3132 = vbcast.lane.b32.xlu0 %v3130, 256
        %v3133 = vpop.permute.xlu0 %3132
        %s3135 = sor.u32 256, 8
        %3136 = vbcast.lane.b32.xlu0 %v3130, %s3135
        %v3137 = vpop.permute.xlu0 %3136
        %s3139 = sor.u32 256, 16
        %3140 = vbcast.lane.b32.xlu0 %v3130, %s3139
        %v3141 = vpop.permute.xlu0 %3140
        %s3143 = sor.u32 256, 24
        %3144 = vbcast.lane.b32.xlu0 %v3130, %s3143
        %v3145 = vpop.permute.xlu0 %3144
        %v3146 = vlaneseq
        %v3147 = vshrl.u32 %v3146, 7
        %v3148 = vsub.s32 3, %v3147
        %v3149 = vrot.slane %v2936, %v3148
        %3151 = vbcast.lane.b32.xlu0 %v3149, 256
        %v3152 = vpop.permute.xlu0 %3151
        %s3154 = sor.u32 256, 8
        %3155 = vbcast.lane.b32.xlu0 %v3149, %s3154
        %v3156 = vpop.permute.xlu0 %3155
        %s3158 = sor.u32 256, 16
        %3159 = vbcast.lane.b32.xlu0 %v3149, %s3158
        %v3160 = vpop.permute.xlu0 %3159
        %s3162 = sor.u32 256, 24
        %3163 = vbcast.lane.b32.xlu0 %v3149, %s3162
        %v3164 = vpop.permute.xlu0 %3163
        %v3165 = vlaneseq
        %v3166 = vshrl.u32 %v3165, 7
        %v3167 = vsub.s32 4, %v3166
        %v3168 = vrot.slane %v2936, %v3167
        %3170 = vbcast.lane.b32.xlu0 %v3168, 256
        %v3171 = vpop.permute.xlu0 %3170
        %s3173 = sor.u32 256, 8
        %3174 = vbcast.lane.b32.xlu0 %v3168, %s3173
        %v3175 = vpop.permute.xlu0 %3174
        %s3177 = sor.u32 256, 16
        %3178 = vbcast.lane.b32.xlu0 %v3168, %s3177
        %v3179 = vpop.permute.xlu0 %3178
        %s3181 = sor.u32 256, 24
        %3182 = vbcast.lane.b32.xlu0 %v3168, %s3181
        %v3183 = vpop.permute.xlu0 %3182
        %v3184 = vlaneseq
        %v3185 = vshrl.u32 %v3184, 7
        %v3186 = vsub.s32 5, %v3185
        %v3187 = vrot.slane %v2936, %v3186
        %3189 = vbcast.lane.b32.xlu0 %v3187, 256
        %v3190 = vpop.permute.xlu0 %3189
        %s3192 = sor.u32 256, 8
        %3193 = vbcast.lane.b32.xlu0 %v3187, %s3192
        %v3194 = vpop.permute.xlu0 %3193
        %s3196 = sor.u32 256, 16
        %3197 = vbcast.lane.b32.xlu0 %v3187, %s3196
        %v3198 = vpop.permute.xlu0 %3197
        %s3200 = sor.u32 256, 24
        %3201 = vbcast.lane.b32.xlu0 %v3187, %s3200
        %v3202 = vpop.permute.xlu0 %3201
        %v3203 = vlaneseq
        %v3204 = vshrl.u32 %v3203, 7
        %v3205 = vsub.s32 6, %v3204
        %v3206 = vrot.slane %v2936, %v3205
        %3208 = vbcast.lane.b32.xlu0 %v3206, 256
        %v3209 = vpop.permute.xlu0 %3208
        %s3211 = sor.u32 256, 8
        %3212 = vbcast.lane.b32.xlu0 %v3206, %s3211
        %v3213 = vpop.permute.xlu0 %3212
        %s3215 = sor.u32 256, 16
        %3216 = vbcast.lane.b32.xlu0 %v3206, %s3215
        %v3217 = vpop.permute.xlu0 %3216
        %s3219 = sor.u32 256, 24
        %3220 = vbcast.lane.b32.xlu0 %v3206, %s3219
        %v3221 = vpop.permute.xlu0 %3220
        %v3222 = vlaneseq
        %v3223 = vshrl.u32 %v3222, 7
        %v3224 = vsub.s32 7, %v3223
        %v3225 = vrot.slane %v2936, %v3224
        %3227 = vbcast.lane.b32.xlu0 %v3225, 256
        %v3228 = vpop.permute.xlu0 %3227
        %s3230 = sor.u32 256, 8
        %3231 = vbcast.lane.b32.xlu0 %v3225, %s3230
        %v3232 = vpop.permute.xlu0 %3231
        %s3234 = sor.u32 256, 16
        %3235 = vbcast.lane.b32.xlu0 %v3225, %s3234
        %v3236 = vpop.permute.xlu0 %3235
        %s3238 = sor.u32 256, 24
        %3239 = vbcast.lane.b32.xlu0 %v3225, %s3238
        %v3240 = vpop.permute.xlu0 %3239
        %v3241 = vadd.f32 %v2867, %v2943
        %v3242 = vadd.f32 %v2868, %v2947
        %v3243 = vadd.f32 %v2869, %v2951
        %v3244 = vadd.f32 %v2870, %v2955
        %v3245 = vadd.f32 %v2871, %v2962
        %v3246 = vadd.f32 %v2872, %v2966
        %v3247 = vadd.f32 %v2873, %v2970
        %v3248 = vadd.f32 %v2874, %v2974
        %v3249 = vadd.f32 %v2875, %v2981
        %v3250 = vadd.f32 %v2876, %v2985
        %v3251 = vadd.f32 %v2877, %v2989
        %v3252 = vadd.f32 %v2878, %v2993
        %v3253 = vadd.f32 %v2879, %v3000
        %v3254 = vadd.f32 %v2880, %v3004
        %v3255 = vadd.f32 %v2881, %v3008
        %v3256 = vadd.f32 %v2882, %v3012
        %v3257 = vadd.f32 %v2883, %v3019
        %v3258 = vadd.f32 %v2884, %v3023
        %v3259 = vadd.f32 %v2885, %v3027
        %v3260 = vadd.f32 %v2886, %v3031
        %v3261 = vadd.f32 %v2887, %v3038
        %v3262 = vadd.f32 %v2888, %v3042
        %v3263 = vadd.f32 %v2889, %v3046
        %v3264 = vadd.f32 %v2890, %v3050
        %v3265 = vadd.f32 %v2891, %v3057
        %v3266 = vadd.f32 %v2892, %v3061
        %v3267 = vadd.f32 %v2893, %v3065
        %v3268 = vadd.f32 %v2894, %v3069
        %v3269 = vadd.f32 %v2895, %v3076
        %v3270 = vadd.f32 %v2896, %v3080
        %v3271 = vadd.f32 %v2897, %v3084
        %v3272 = vadd.f32 %v2898, %v3088
        %v3273 = vadd.f32 %v2899, %v3095
        %v3274 = vadd.f32 %v2900, %v3099
        %v3275 = vadd.f32 %v2901, %v3103
        %v3276 = vadd.f32 %v2902, %v3107
        %v3277 = vadd.f32 %v2903, %v3114
        %v3278 = vadd.f32 %v2904, %v3118
        %v3279 = vadd.f32 %v2905, %v3122
        %v3280 = vadd.f32 %v2906, %v3126
        %v3281 = vadd.f32 %v2907, %v3133
        %v3282 = vadd.f32 %v2908, %v3137
        %v3283 = vadd.f32 %v2909, %v3141
        %v3284 = vadd.f32 %v2910, %v3145
        %v3285 = vadd.f32 %v2911, %v3152
        %v3286 = vadd.f32 %v2912, %v3156
        %v3287 = vadd.f32 %v2913, %v3160
        %v3288 = vadd.f32 %v2914, %v3164
        %v3289 = vadd.f32 %v2915, %v3171
        %v3290 = vadd.f32 %v2916, %v3175
        %v3291 = vadd.f32 %v2917, %v3179
        %v3292 = vadd.f32 %v2918, %v3183
        %v3293 = vadd.f32 %v2919, %v3190
        %v3294 = vadd.f32 %v2920, %v3194
        %v3295 = vadd.f32 %v2921, %v3198
        %v3296 = vadd.f32 %v2922, %v3202
        %v3297 = vadd.f32 %v2923, %v3209
        %v3298 = vadd.f32 %v2924, %v3213
        %v3299 = vadd.f32 %v2925, %v3217
        %v3300 = vadd.f32 %v2926, %v3221
        %v3301 = vadd.f32 %v2927, %v3228
        %v3302 = vadd.f32 %v2928, %v3232
        %v3303 = vadd.f32 %v2929, %v3236
        %v3304 = vadd.f32 %v2930, %v3240
        %v3305 = vmax.f32 %v3241, %v3242
        %v3306 = vmax.f32 %v3305, %v3243
        %v3307 = vmax.f32 %v3306, %v3244
        %v3308 = vrot.slane %v3307, 4
        %v3309 = vmax.f32 %v3307, %v3308
        %v3310 = vrot.slane %v3309, 2
        %v3311 = vmax.f32 %v3309, %v3310
        %v3312 = vrot.slane %v3311, 1
        %v3313 = vmax.f32 %v3311, %v3312
        %v3314 = vmax.f32 %v3245, %v3246
        %v3315 = vmax.f32 %v3314, %v3247
        %v3316 = vmax.f32 %v3315, %v3248
        %v3317 = vrot.slane %v3316, 4
        %v3318 = vmax.f32 %v3316, %v3317
        %v3319 = vrot.slane %v3318, 2
        %v3320 = vmax.f32 %v3318, %v3319
        %v3321 = vrot.slane %v3320, 1
        %v3322 = vmax.f32 %v3320, %v3321
        %v3323 = vmax.f32 %v3249, %v3250
        %v3324 = vmax.f32 %v3323, %v3251
        %v3325 = vmax.f32 %v3324, %v3252
        %v3326 = vrot.slane %v3325, 4
        %v3327 = vmax.f32 %v3325, %v3326
        %v3328 = vrot.slane %v3327, 2
        %v3329 = vmax.f32 %v3327, %v3328
        %v3330 = vrot.slane %v3329, 1
        %v3331 = vmax.f32 %v3329, %v3330
        %v3332 = vmax.f32 %v3253, %v3254
        %v3333 = vmax.f32 %v3332, %v3255
        %v3334 = vmax.f32 %v3333, %v3256
        %v3335 = vrot.slane %v3334, 4
        %v3336 = vmax.f32 %v3334, %v3335
        %v3337 = vrot.slane %v3336, 2
        %v3338 = vmax.f32 %v3336, %v3337
        %v3339 = vrot.slane %v3338, 1
        %v3340 = vmax.f32 %v3338, %v3339
        %v3341 = vmax.f32 %v3257, %v3258
        %v3342 = vmax.f32 %v3341, %v3259
        %v3343 = vmax.f32 %v3342, %v3260
        %v3344 = vrot.slane %v3343, 4
        %v3345 = vmax.f32 %v3343, %v3344
        %v3346 = vrot.slane %v3345, 2
        %v3347 = vmax.f32 %v3345, %v3346
        %v3348 = vrot.slane %v3347, 1
        %v3349 = vmax.f32 %v3347, %v3348
        %v3350 = vmax.f32 %v3261, %v3262
        %v3351 = vmax.f32 %v3350, %v3263
        %v3352 = vmax.f32 %v3351, %v3264
        %v3353 = vrot.slane %v3352, 4
        %v3354 = vmax.f32 %v3352, %v3353
        %v3355 = vrot.slane %v3354, 2
        %v3356 = vmax.f32 %v3354, %v3355
        %v3357 = vrot.slane %v3356, 1
        %v3358 = vmax.f32 %v3356, %v3357
        %v3359 = vmax.f32 %v3265, %v3266
        %v3360 = vmax.f32 %v3359, %v3267
        %v3361 = vmax.f32 %v3360, %v3268
        %v3362 = vrot.slane %v3361, 4
        %v3363 = vmax.f32 %v3361, %v3362
        %v3364 = vrot.slane %v3363, 2
        %v3365 = vmax.f32 %v3363, %v3364
        %v3366 = vrot.slane %v3365, 1
        %v3367 = vmax.f32 %v3365, %v3366
        %v3368 = vmax.f32 %v3269, %v3270
        %v3369 = vmax.f32 %v3368, %v3271
        %v3370 = vmax.f32 %v3369, %v3272
        %v3371 = vrot.slane %v3370, 4
        %v3372 = vmax.f32 %v3370, %v3371
        %v3373 = vrot.slane %v3372, 2
        %v3374 = vmax.f32 %v3372, %v3373
        %v3375 = vrot.slane %v3374, 1
        %v3376 = vmax.f32 %v3374, %v3375
        %v3377 = vmax.f32 %v3273, %v3274
        %v3378 = vmax.f32 %v3377, %v3275
        %v3379 = vmax.f32 %v3378, %v3276
        %v3380 = vrot.slane %v3379, 4
        %v3381 = vmax.f32 %v3379, %v3380
        %v3382 = vrot.slane %v3381, 2
        %v3383 = vmax.f32 %v3381, %v3382
        %v3384 = vrot.slane %v3383, 1
        %v3385 = vmax.f32 %v3383, %v3384
        %v3386 = vmax.f32 %v3277, %v3278
        %v3387 = vmax.f32 %v3386, %v3279
        %v3388 = vmax.f32 %v3387, %v3280
        %v3389 = vrot.slane %v3388, 4
        %v3390 = vmax.f32 %v3388, %v3389
        %v3391 = vrot.slane %v3390, 2
        %v3392 = vmax.f32 %v3390, %v3391
        %v3393 = vrot.slane %v3392, 1
        %v3394 = vmax.f32 %v3392, %v3393
        %v3395 = vmax.f32 %v3281, %v3282
        %v3396 = vmax.f32 %v3395, %v3283
        %v3397 = vmax.f32 %v3396, %v3284
        %v3398 = vrot.slane %v3397, 4
        %v3399 = vmax.f32 %v3397, %v3398
        %v3400 = vrot.slane %v3399, 2
        %v3401 = vmax.f32 %v3399, %v3400
        %v3402 = vrot.slane %v3401, 1
        %v3403 = vmax.f32 %v3401, %v3402
        %v3404 = vmax.f32 %v3285, %v3286
        %v3405 = vmax.f32 %v3404, %v3287
        %v3406 = vmax.f32 %v3405, %v3288
        %v3407 = vrot.slane %v3406, 4
        %v3408 = vmax.f32 %v3406, %v3407
        %v3409 = vrot.slane %v3408, 2
        %v3410 = vmax.f32 %v3408, %v3409
        %v3411 = vrot.slane %v3410, 1
        %v3412 = vmax.f32 %v3410, %v3411
        %v3413 = vmax.f32 %v3289, %v3290
        %v3414 = vmax.f32 %v3413, %v3291
        %v3415 = vmax.f32 %v3414, %v3292
        %v3416 = vrot.slane %v3415, 4
        %v3417 = vmax.f32 %v3415, %v3416
        %v3418 = vrot.slane %v3417, 2
        %v3419 = vmax.f32 %v3417, %v3418
        %v3420 = vrot.slane %v3419, 1
        %v3421 = vmax.f32 %v3419, %v3420
        %v3422 = vmax.f32 %v3293, %v3294
        %v3423 = vmax.f32 %v3422, %v3295
        %v3424 = vmax.f32 %v3423, %v3296
        %v3425 = vrot.slane %v3424, 4
        %v3426 = vmax.f32 %v3424, %v3425
        %v3427 = vrot.slane %v3426, 2
        %v3428 = vmax.f32 %v3426, %v3427
        %v3429 = vrot.slane %v3428, 1
        %v3430 = vmax.f32 %v3428, %v3429
        %v3431 = vmax.f32 %v3297, %v3298
        %v3432 = vmax.f32 %v3431, %v3299
        %v3433 = vmax.f32 %v3432, %v3300
        %v3434 = vrot.slane %v3433, 4
        %v3435 = vmax.f32 %v3433, %v3434
        %v3436 = vrot.slane %v3435, 2
        %v3437 = vmax.f32 %v3435, %v3436
        %v3438 = vrot.slane %v3437, 1
        %v3439 = vmax.f32 %v3437, %v3438
        %v3440 = vmax.f32 %v3301, %v3302
        %v3441 = vmax.f32 %v3440, %v3303
        %v3442 = vmax.f32 %v3441, %v3304
        %v3443 = vrot.slane %v3442, 4
        %v3444 = vmax.f32 %v3442, %v3443
        %v3445 = vrot.slane %v3444, 2
        %v3446 = vmax.f32 %v3444, %v3445
        %v3447 = vrot.slane %v3446, 1
        %v3448 = vmax.f32 %v3446, %v3447
        %vm3449 = vcmask 261120
        %v3450 = vsel %vm3449, %v2931, -inf
        %3451 = vmax.xlane.f32.xlu0 %v3450
        %v3452 = vpop.xlane.xlu0 %3451
        %v3453 = vsel %vm3449, %v2932, -inf
        %3454 = vmax.xlane.f32.xlu0 %v3453
        %v3455 = vpop.xlane.xlu0 %3454
        %vm3456 = vcmp.gt.f32.partialorder %v3452, 0.0
        %vm3457 = vcmp.gt.f32.partialorder %v3455, 0.0
        %v3458 = vsel %vm3456, 1, 0
        %v3459 = vsel %vm3457, 1, 0
        %vm3460 = vcmp.eq.s32.totalorder %v3458, 1
        %vm3461 = vcmp.eq.s32.totalorder %v3459, 1
        %vm3478 = vcmask 1041409
        %v3479 = vsel %vm3478, %v3322, %v3313
        %vm3480 = vcmask 1042434
        %v3481 = vsel %vm3480, %v3331, %v3479
        %vm3482 = vcmask 1043459
        %v3483 = vsel %vm3482, %v3340, %v3481
        %vm3484 = vcmask 1044484
        %v3485 = vsel %vm3484, %v3349, %v3483
        %vm3486 = vcmask 1045509
        %v3487 = vsel %vm3486, %v3358, %v3485
        %vm3488 = vcmask 1046534
        %v3489 = vsel %vm3488, %v3367, %v3487
        %vm3490 = vcmask 1047559
        %v3491 = vsel %vm3490, %v3376, %v3489
        %v3492 = vsel %vm3478, %v3394, %v3385
        %v3493 = vsel %vm3480, %v3403, %v3492
        %v3494 = vsel %vm3482, %v3412, %v3493
        %v3495 = vsel %vm3484, %v3421, %v3494
        %v3496 = vsel %vm3486, %v3430, %v3495
        %v3497 = vsel %vm3488, %v3439, %v3496
        %v3498 = vsel %vm3490, %v3448, %v3497
        %v3501 = vsel %vm3460, %v3491, 0.0
        %v3502 = vsel %vm3461, %v3498, 0.0
        %3503 = vst [vmem:[%s369] sm:$0xff] %v3501
        %3504 = vst [vmem:[%s369 + $0x8] sm:$0xff] %v3502
        %s3505 = sand.u32 %s252, 1
        %s3506 = scalar_lea.sflag [#allocation3], %s3505
        %s3507 = sand.u32 %s252, 1
        %s3508 = smul.addr %s3507, 16
        %s3509 = scalar_lea.vmem [#allocation2], %s3508
        // Predicated region
        $region61: #{tpu_custom_call.1} parent=59 // pred_check
          %p3510 = pneg %p262
        $region62: #{tpu_custom_call.1} parent=59 // pred_check_branch
          %3512 = sbr.rel (%p3510) target = $region64
        $region63: #{tpu_custom_call.1} parent=59 // pred_region
          %s3513 = smul.u32 2, %s24
          %s3515 = ssub.s32 256, 256
          %3516 = vsyncadd %s3506, %s3515
          %s3517 = smul.addr %s3513, 128
          %s3518 = scalar_lea.hbm %s10, %s3517
          %s3519 = sshll.u32 %s3509, 4
          %s3520 = int_to_ptr.vmem [resolvable:$true] %s3519
          %3525 = dma.vmem_to_hbm [thread:$0]  %s3520, 256, %s3518, %s3506, 128, 128, 8
        $region64: #{tpu_custom_call.1} parent=59 // pred_fallthru
          _
      $region60: #{tpu_custom_call.1} parent=5 // pred_fallthru
        _
      %p3526 = scmp.le.s32.totalorder 2, %s19
      // Predicated region
      $region65: #{tpu_custom_call.1} parent=5 // pred_check
        %p3527 = pneg %p3526
      $region66: #{tpu_custom_call.1} parent=5 // pred_check_branch
        %3529 = sbr.rel (%p3527) target = $region68
      $region67: #{tpu_custom_call.1} parent=5 // pred_region
        %s3530 = ssub.s32 %s19, 2
        // Predicated region
        $region69: #{tpu_custom_call.1} parent=67 // pred_check
          %p3531 = pneg %p268
        $region70: #{tpu_custom_call.1} parent=67 // pred_check_branch
          %3533 = sbr.rel (%p3531) target = $region72
        $region71: #{tpu_custom_call.1} parent=67 // pred_region
          %s3534 = sand.u32 %s253, 1
          %s3535 = scalar_lea.sflag [#allocation3], %s3534
          %s3536 = sand.u32 %s253, 1
          %s3537 = smul.addr %s3536, 16
          %s3538 = scalar_lea.vmem [#allocation2], %s3537
          %3539 = dma.done %s3535, 256
        $region72: #{tpu_custom_call.1} parent=67 // pred_fallthru
          _
      $region68: #{tpu_custom_call.1} parent=5 // pred_fallthru
        _
    $region6: #{tpu_custom_call.1} parent=1 // loop_footer
      %s23 = sadd.s32 1, %s19
    $region7: #{tpu_custom_call.1} parent=1 // loop_footer_branch
      %18 = sbr.rel target = $region3
    $region8: #{tpu_custom_call.1} parent=1 // loop_exit
      _
    %3540 = vsyncpa [#allocation3], 1
    %s3541 = scalar_lea.sflag [#allocation3], 1
    %3542 = vsyncpa %s3541, 1

</llo_original>
